<compile_context>
chip_gen: v6e
topology: v6e:2x2x1
jax: 0.10.0
libtpu: 0.0.40
codegen_flags: <defaults>
</compile_context>

<pallas_src>
import math

import jax
import jax.numpy as jnp
from jax.experimental import pallas as pl
from jax.experimental.pallas import tpu as pltpu

# ----------------------------- model hyper-params ---------------------------
B = 32         # demo batch
B_TILE = 16    # batch rows per grid step -> M = B_TILE * L = 256 GEMM rows
L = 16         # sequence length
E = 32         # embedding dim
F = 32         # filters
N_WORDS = 50
KERNELS = 3                      # params.kernels
KS = list(range(1, KERNELS + 1)) if KERNELS <= 3 else list(range(1, KERNELS + 1, 2))
NK = len(KS)
KMAX = max(KS)
NEG_SLOPE = 0.01                 # F.leaky_relu default


# --------------------------------- kernel -----------------------------------
def _make_kernel(b_tile, seq, emb_dim, n_k, filters, kmax):
    m_rows = b_tile * seq

    def kernel(emb_ref, mask_ref, w_ref, b_ref, u_ref, f_ref, fcb_ref, out_ref):
        # (1) conv branches: KMAX shifted GEMMs accumulated in f32 (in-kernel
        #     im2col). Taps k >= K_i are zero in the packed weight; taps past
        #     the sequence end read the explicit zero padding of emb_ref.
        h = jnp.dot(emb_ref[:, 0:seq, :].reshape(m_rows, emb_dim), w_ref[0],
                    preferred_element_type=jnp.float32)            # (M, NK*F)
        for k in range(1, kmax):
            h = h + jnp.dot(emb_ref[:, k:k + seq, :].reshape(m_rows, emb_dim),
                            w_ref[k], preferred_element_type=jnp.float32)
        h = h + b_ref[...]
        h = jnp.where(h > 0, h, NEG_SLOPE * h)                     # leaky_relu
        h_b = h.astype(u_ref.dtype)                                # bf16 for MXU

        # (2) attention scores (1/sqrt(F) pre-folded into u_ref) and fc values
        #     via two small lane-aligned block-diagonal GEMMs.
        scores = jnp.dot(h_b, u_ref[...], preferred_element_type=jnp.float32)
        scores = scores.reshape(b_tile, seq, n_k) + mask_ref[...]  # (B_T, L, NK)
        vals = jnp.dot(h_b, f_ref[...], preferred_element_type=jnp.float32)
        vals = vals.reshape(b_tile, seq, n_k)

        # (3) per-batch softmax over the NK*L positions fused with the fc dot.
        m = jnp.max(jnp.max(scores, axis=2, keepdims=True), axis=1, keepdims=True)
        e = jnp.exp(scores - m)
        den = jnp.sum(jnp.sum(e, axis=2, keepdims=True), axis=1, keepdims=True)
        num = jnp.sum(jnp.sum(e * vals, axis=2, keepdims=True), axis=1, keepdims=True)
        r = (num * pl.reciprocal(den, approx=True)).reshape(b_tile, 1)

        # (4) move the per-batch scalars sublane -> lane (identity select +
        #     sublane reduce), then bias + sigmoid on a lane-dense row.
        row = jax.lax.broadcasted_iota(jnp.int32, (b_tile, b_tile), 0)
        col = jax.lax.broadcasted_iota(jnp.int32, (b_tile, b_tile), 1)
        eye = (row == col).astype(jnp.float32)
        r_lane = jnp.sum(r * eye, axis=0, keepdims=True)           # (1, B_TILE)
        out_ref[...] = jax.nn.sigmoid(r_lane + fcb_ref[0, 0]).reshape(1, 1, b_tile)

    return kernel


def _pallas_forward(emb_pad, mask3, packed, b_pad):
    num_tiles = b_pad // B_TILE
    kernel = _make_kernel(B_TILE, L, E, NK, F, KMAX)
    out = pl.pallas_call(
        kernel,
        out_shape=jax.ShapeDtypeStruct((num_tiles, 1, B_TILE), jnp.float32),
        grid=(num_tiles,),
        in_specs=[
            pl.BlockSpec((B_TILE, L + KMAX - 1, E), lambda b: (b, 0, 0)),  # emb (bf16)
            pl.BlockSpec((B_TILE, L, NK), lambda b: (b, 0, 0)),            # mask (f32)
            pl.BlockSpec((KMAX, E, NK * F), lambda b: (0, 0, 0)),          # conv W (resident)
            pl.BlockSpec((1, NK * F), lambda b: (0, 0)),                   # conv bias (resident)
            pl.BlockSpec((NK * F, NK), lambda b: (0, 0)),                  # U pack (resident)
            pl.BlockSpec((NK * F, NK), lambda b: (0, 0)),                  # fc_w pack (resident)
            pl.BlockSpec(memory_space=pltpu.MemorySpace.SMEM),             # fc bias scalar
        ],
        out_specs=pl.BlockSpec((1, 1, B_TILE), lambda b: (b, 0, 0)),
        compiler_params=pltpu.CompilerParams(
            dimension_semantics=("parallel",)),   # shards across v7x's 2 TCs
    )(emb_pad, mask3, packed["W"], packed["bias"], packed["U"], packed["FCW"],
      packed["fcb"])
    return out.reshape(b_pad, 1)


# ------------------------- one-time weight packing ---------------------------
def pack_weights(weights):
    """Hoisted out of the forward path; run once."""
    w = jnp.zeros((KMAX, E, NK * F), jnp.float32)
    for i, k_sz in enumerate(KS):
        wi = jnp.transpose(weights["conv_w"][i], (2, 1, 0))        # (K, E, F)
        w = w.at[:k_sz, :, i * F:(i + 1) * F].set(wi)              # taps k>=K stay 0
    bias = jnp.concatenate(weights["conv_b"]).reshape(1, NK * F)

    inv_sqrt_f = 1.0 / math.sqrt(F)
    u = weights["u_w"][0] * inv_sqrt_f         # fold 1/sqrt(F) at pack time
    fcw = weights["fc_w"][0]
    u_pack = jnp.zeros((NK * F, NK), jnp.float32)
    f_pack = jnp.zeros((NK * F, NK), jnp.float32)
    for i in range(NK):
        u_pack = u_pack.at[i * F:(i + 1) * F, i].set(u)            # scores
        f_pack = f_pack.at[i * F:(i + 1) * F, i].set(fcw)          # fc values
    return {
        "embed": weights["embed"],
        "W": w.astype(jnp.bfloat16),          # MXU operands in bf16
        "bias": bias,                         # f32 (added after f32 accumulation)
        "U": u_pack.astype(jnp.bfloat16),
        "FCW": f_pack.astype(jnp.bfloat16),
        "fcb": weights["fc_b"].reshape(1, 1),
    }


# ------------------------------- forward -------------------------------------
@jax.jit
def cnn_text_attn_forward(text, mask, packed):
    """text: (B, L) int32, mask: (B, L) float32 additive mask -> sigmoid(y_hat)."""
    b_in, seq = text.shape
    pad = (-b_in) % B_TILE
    if pad:                                    # pad batch to a multiple of B_TILE
        text = jnp.pad(text, ((0, pad), (0, 0)))
        mask = jnp.pad(mask, ((0, pad), (0, 0)))
    b_pad = b_in + pad
    emb = packed["embed"][text].astype(jnp.bfloat16)               # (Bp, L, E)
    emb_pad = jnp.pad(emb, ((0, 0), (0, KMAX - 1), (0, 0)))        # zero tail rows
    mask3 = jnp.broadcast_to(mask[:, :, None], (b_pad, seq, NK))   # (Bp, L, NK)
    out = _pallas_forward(emb_pad, mask3, packed, b_pad)
    return out[:b_in]


# ------------------------- pure-JAX reference (check) ------------------------
def reference_forward(text, mask, weights):
    emb = weights["embed"][text]                       # (B, L, E)
    x = jnp.transpose(emb, (0, 2, 1))                  # (B, E, L)  NCW
    hs = []
    for i, k_sz in enumerate(KS):
        xp = jnp.pad(x, ((0, 0), (0, 0), (0, k_sz - 1)))   # ConstantPad1d((0, K-1))
        out = jax.lax.conv_general_dilated(
            xp, weights["conv_w"][i], (1,), "VALID",
            dimension_numbers=("NCH", "OIH", "NCH"))
        out = out + weights["conv_b"][i][None, :, None]
        out = jnp.where(out > 0, out, NEG_SLOPE * out)
        hs.append(out)
    h = jnp.concatenate(hs, axis=2)                    # (B, F, NK*L)
    mask_t = jnp.concatenate([mask] * NK, axis=1)      # (B, NK*L)
    scores = jnp.einsum("bfl,f->bl", h / math.sqrt(F), weights["u_w"][0]) + mask_t
    alpha = jax.nn.softmax(scores, axis=1)
    pooled = jnp.einsum("bfl,bl->bf", h, alpha)        # (B, F)
    logit = pooled @ weights["fc_w"].T + weights["fc_b"]
    return jax.nn.sigmoid(logit)


# --------------------------------- main --------------------------------------
if __name__ == "__main__":
    key = jax.random.PRNGKey(0)
    keys = jax.random.split(key, 8 + NK * 2)

    # deterministic synthetic parameters (shapes follow the module __init__)
    weights = {
        "embed": jax.random.normal(keys[0], (N_WORDS, E), jnp.float32) * 0.1,
        "conv_w": [jax.random.normal(keys[1 + i], (F, E, K), jnp.float32) * 0.1
                   for i, K in enumerate(KS)],
        "conv_b": [jax.random.normal(keys[1 + NK + i], (F,), jnp.float32) * 0.1
                   for i in range(NK)],
        "u_w": jax.random.normal(keys[1 + 2 * NK], (1, F), jnp.float32) * 0.1,
        "fc_w": jax.random.normal(keys[2 + 2 * NK], (1, F), jnp.float32) * 0.1,
        "fc_b": jax.random.normal(keys[3 + 2 * NK], (1,), jnp.float32) * 0.1,
    }

    text = jax.random.randint(keys[4 + 2 * NK], (B, L), 0, N_WORDS, jnp.int32)
    lengths = jax.random.randint(keys[5 + 2 * NK], (B,), 4, L + 1)
    attn_mask = jnp.where(jnp.arange(L)[None, :] < lengths[:, None],
                          0.0, -1e9).astype(jnp.float32)

    packed = pack_weights(weights)                                 # once, off hot path

    y = jax.block_until_ready(cnn_text_attn_forward(text, attn_mask, packed))
    y_ref = jax.block_until_ready(reference_forward(text, attn_mask, weights))

    assert y.shape == (B, 1), y.shape
    # bf16 MXU operands vs. the all-f32 reference -> loosen tolerance slightly.
    assert jnp.allclose(y, y_ref, atol=3e-3, rtol=1e-3), (y, y_ref)
    print("KERNEL_OK")
</pallas_src>

<mosaic_0001>
module attributes {stable_mosaic.version = 11 : i64} {
  func.func @kernel(%arg0: i32, %arg1: memref<16x18x32xbf16, #tpu.memory_space<vmem>>, %arg2: memref<16x16x3xf32, #tpu.memory_space<vmem>>, %arg3: memref<3x32x96xbf16, #tpu.memory_space<vmem>>, %arg4: memref<1x96xf32, #tpu.memory_space<vmem>>, %arg5: memref<96x3xbf16, #tpu.memory_space<vmem>>, %arg6: memref<96x3xbf16, #tpu.memory_space<vmem>>, %arg7: memref<1x1xf32, #tpu.memory_space<smem>>, %arg8: memref<1x1x16xf32, #tpu.memory_space<vmem>>) attributes {dimension_semantics = [#tpu.dimension_semantics<parallel>], iteration_bounds = array<i64: 2>, scalar_prefetch = 0 : i64, scratch_operands = 0 : i64, tpu.core_type = #tpu.core_type<tc>, window_params = [{transform_indices = @transform_0, window_bounds = array<i64: 16, 18, 32>}, {transform_indices = @transform_1, window_bounds = array<i64: 16, 16, 3>}, {pipeline_mode = #tpu.pipeline_mode<synchronous>, transform_indices = @transform_2, window_bounds = array<i64: 3, 32, 96>}, {pipeline_mode = #tpu.pipeline_mode<synchronous>, transform_indices = @transform_3, window_bounds = array<i64: 1, 96>}, {pipeline_mode = #tpu.pipeline_mode<synchronous>, transform_indices = @transform_4, window_bounds = array<i64: 96, 3>}, {pipeline_mode = #tpu.pipeline_mode<synchronous>, transform_indices = @transform_5, window_bounds = array<i64: 96, 3>}, {transform_indices = @transform_6, window_bounds = array<i64: 1, 1>}, {transform_indices = @transform_7, window_bounds = array<i64: 1, 1, 16>}]} {
    %c0 = arith.constant 0 : index
    %c0_0 = arith.constant 0 : index
    %c0_1 = arith.constant 0 : index
    %0 = vector.load %arg1[%c0, %c0_0, %c0_1] : memref<16x18x32xbf16, #tpu.memory_space<vmem>>, vector<16x16x32xbf16>
    %1 = vector.shape_cast %0 : vector<16x16x32xbf16> to vector<256x32xbf16>
    %c0_2 = arith.constant 0 : index
    %c0_3 = arith.constant 0 : index
    %c0_4 = arith.constant 0 : index
    %2 = vector.load %arg3[%c0_2, %c0_3, %c0_4] : memref<3x32x96xbf16, #tpu.memory_space<vmem>>, vector<1x32x96xbf16>
    %3 = vector.shape_cast %2 : vector<1x32x96xbf16> to vector<32x96xbf16>
    %cst = arith.constant dense<0.000000e+00> : vector<256x96xf32>
    %4 = tpu.matmul %1, %3, %cst {dimension_numbers = #tpu.dot_dimension_numbers<[1], [0], [0], [1], [0, 0, 1, 1], [], []>} : vector<256x32xbf16>, vector<32x96xbf16>, vector<256x96xf32> -> vector<256x96xf32>
    %c0_5 = arith.constant 0 : index
    %c1 = arith.constant 1 : index
    %c0_6 = arith.constant 0 : index
    %5 = vector.load %arg1[%c0_5, %c1, %c0_6] : memref<16x18x32xbf16, #tpu.memory_space<vmem>>, vector<16x16x32xbf16>
    %6 = vector.shape_cast %5 : vector<16x16x32xbf16> to vector<256x32xbf16>
    %c1_7 = arith.constant 1 : index
    %c0_8 = arith.constant 0 : index
    %c0_9 = arith.constant 0 : index
    %7 = vector.load %arg3[%c1_7, %c0_8, %c0_9] : memref<3x32x96xbf16, #tpu.memory_space<vmem>>, vector<1x32x96xbf16>
    %8 = vector.shape_cast %7 : vector<1x32x96xbf16> to vector<32x96xbf16>
    %cst_10 = arith.constant dense<0.000000e+00> : vector<256x96xf32>
    %9 = tpu.matmul %6, %8, %cst_10 {dimension_numbers = #tpu.dot_dimension_numbers<[1], [0], [0], [1], [0, 0, 1, 1], [], []>} : vector<256x32xbf16>, vector<32x96xbf16>, vector<256x96xf32> -> vector<256x96xf32>
    %10 = arith.addf %4, %9 : vector<256x96xf32>
    %c0_11 = arith.constant 0 : index
    %c2 = arith.constant 2 : index
    %c0_12 = arith.constant 0 : index
    %11 = vector.load %arg1[%c0_11, %c2, %c0_12] : memref<16x18x32xbf16, #tpu.memory_space<vmem>>, vector<16x16x32xbf16>
    %12 = vector.shape_cast %11 : vector<16x16x32xbf16> to vector<256x32xbf16>
    %c2_13 = arith.constant 2 : index
    %c0_14 = arith.constant 0 : index
    %c0_15 = arith.constant 0 : index
    %13 = vector.load %arg3[%c2_13, %c0_14, %c0_15] : memref<3x32x96xbf16, #tpu.memory_space<vmem>>, vector<1x32x96xbf16>
    %14 = vector.shape_cast %13 : vector<1x32x96xbf16> to vector<32x96xbf16>
    %cst_16 = arith.constant dense<0.000000e+00> : vector<256x96xf32>
    %15 = tpu.matmul %12, %14, %cst_16 {dimension_numbers = #tpu.dot_dimension_numbers<[1], [0], [0], [1], [0, 0, 1, 1], [], []>} : vector<256x32xbf16>, vector<32x96xbf16>, vector<256x96xf32> -> vector<256x96xf32>
    %16 = arith.addf %10, %15 : vector<256x96xf32>
    %c0_17 = arith.constant 0 : index
    %c0_18 = arith.constant 0 : index
    %17 = vector.load %arg4[%c0_17, %c0_18] : memref<1x96xf32, #tpu.memory_space<vmem>>, vector<1x96xf32>
    %18 = vector.broadcast %17 : vector<1x96xf32> to vector<256x96xf32>
    %19 = arith.addf %16, %18 : vector<256x96xf32>
    %cst_19 = arith.constant 0.000000e+00 : f32
    %20 = vector.broadcast %cst_19 : f32 to vector<256x96xf32>
    %21 = arith.cmpf ogt, %19, %20 : vector<256x96xf32>
    %cst_20 = arith.constant 0.00999999977 : f32
    %22 = vector.broadcast %cst_20 : f32 to vector<256x96xf32>
    %23 = arith.mulf %22, %19 : vector<256x96xf32>
    %24 = arith.select %21, %19, %23 : vector<256x96xi1>, vector<256x96xf32>
    %25 = arith.truncf %24 : vector<256x96xf32> to vector<256x96xbf16>
    %c0_21 = arith.constant 0 : index
    %c0_22 = arith.constant 0 : index
    %26 = vector.load %arg5[%c0_21, %c0_22] : memref<96x3xbf16, #tpu.memory_space<vmem>>, vector<96x3xbf16>
    %cst_23 = arith.constant dense<0.000000e+00> : vector<256x3xf32>
    %27 = tpu.matmul %25, %26, %cst_23 {dimension_numbers = #tpu.dot_dimension_numbers<[1], [0], [0], [1], [0, 0, 1, 1], [], []>} : vector<256x96xbf16>, vector<96x3xbf16>, vector<256x3xf32> -> vector<256x3xf32>
    %28 = vector.shape_cast %27 : vector<256x3xf32> to vector<16x16x3xf32>
    %c0_24 = arith.constant 0 : index
    %c0_25 = arith.constant 0 : index
    %c0_26 = arith.constant 0 : index
    %29 = vector.load %arg2[%c0_24, %c0_25, %c0_26] : memref<16x16x3xf32, #tpu.memory_space<vmem>>, vector<16x16x3xf32>
    %30 = arith.addf %28, %29 : vector<16x16x3xf32>
    %c0_27 = arith.constant 0 : index
    %c0_28 = arith.constant 0 : index
    %31 = vector.load %arg6[%c0_27, %c0_28] : memref<96x3xbf16, #tpu.memory_space<vmem>>, vector<96x3xbf16>
    %cst_29 = arith.constant dense<0.000000e+00> : vector<256x3xf32>
    %32 = tpu.matmul %25, %31, %cst_29 {dimension_numbers = #tpu.dot_dimension_numbers<[1], [0], [0], [1], [0, 0, 1, 1], [], []>} : vector<256x96xbf16>, vector<96x3xbf16>, vector<256x3xf32> -> vector<256x3xf32>
    %33 = vector.shape_cast %32 : vector<256x3xf32> to vector<16x16x3xf32>
    %cst_30 = arith.constant dense<0xFF800000> : vector<16x16xf32>
    %34 = vector.multi_reduction <maximumf>, %30, %cst_30 [2] : vector<16x16x3xf32> to vector<16x16xf32>
    %35 = vector.shape_cast %34 : vector<16x16xf32> to vector<16x16x1xf32>
    %cst_31 = arith.constant dense<0xFF800000> : vector<16x1xf32>
    %36 = vector.multi_reduction <maximumf>, %35, %cst_31 [1] : vector<16x16x1xf32> to vector<16x1xf32>
    %37 = vector.shape_cast %36 : vector<16x1xf32> to vector<16x1x1xf32>
    %38 = vector.broadcast %37 : vector<16x1x1xf32> to vector<16x16x3xf32>
    %39 = arith.subf %30, %38 : vector<16x16x3xf32>
    %40 = math.exp %39 : vector<16x16x3xf32>
    %cst_32 = arith.constant dense<0.000000e+00> : vector<16x16xf32>
    %41 = vector.multi_reduction <add>, %40, %cst_32 [2] : vector<16x16x3xf32> to vector<16x16xf32>
    %42 = vector.shape_cast %41 : vector<16x16xf32> to vector<16x16x1xf32>
    %cst_33 = arith.constant dense<0.000000e+00> : vector<16x1xf32>
    %43 = vector.multi_reduction <add>, %42, %cst_33 [1] : vector<16x16x1xf32> to vector<16x1xf32>
    %44 = vector.shape_cast %43 : vector<16x1xf32> to vector<16x1x1xf32>
    %45 = arith.mulf %40, %33 : vector<16x16x3xf32>
    %cst_34 = arith.constant dense<0.000000e+00> : vector<16x16xf32>
    %46 = vector.multi_reduction <add>, %45, %cst_34 [2] : vector<16x16x3xf32> to vector<16x16xf32>
    %47 = vector.shape_cast %46 : vector<16x16xf32> to vector<16x16x1xf32>
    %cst_35 = arith.constant dense<0.000000e+00> : vector<16x1xf32>
    %48 = vector.multi_reduction <add>, %47, %cst_35 [1] : vector<16x16x1xf32> to vector<16x1xf32>
    %49 = vector.shape_cast %48 : vector<16x1xf32> to vector<16x1x1xf32>
    %50 = tpu.reciprocal %44 {approx = true} : vector<16x1x1xf32> -> vector<16x1x1xf32>
    %51 = arith.mulf %49, %50 : vector<16x1x1xf32>
    %52 = vector.shape_cast %51 : vector<16x1x1xf32> to vector<16x1xf32>
    %53 = tpu.iota {dimensions = array<i32: 0>} : vector<16x16xi32>
    %54 = tpu.iota {dimensions = array<i32: 1>} : vector<16x16xi32>
    %55 = arith.cmpi eq, %53, %54 : vector<16x16xi32>
    %56 = arith.extui %55 : vector<16x16xi1> to vector<16x16xi32>
    %57 = arith.sitofp %56 : vector<16x16xi32> to vector<16x16xf32>
    %58 = vector.broadcast %52 : vector<16x1xf32> to vector<16x16xf32>
    %59 = arith.mulf %58, %57 : vector<16x16xf32>
    %cst_36 = arith.constant dense<0.000000e+00> : vector<16xf32>
    %60 = vector.multi_reduction <add>, %59, %cst_36 [0] : vector<16x16xf32> to vector<16xf32>
    %61 = vector.shape_cast %60 : vector<16xf32> to vector<1x16xf32>
    %c0_37 = arith.constant 0 : index
    %c0_38 = arith.constant 0 : index
    %62 = memref.load %arg7[%c0_37, %c0_38] : memref<1x1xf32, #tpu.memory_space<smem>>
    %63 = vector.broadcast %62 : f32 to vector<1x16xf32>
    %64 = arith.addf %61, %63 : vector<1x16xf32>
    %65 = arith.negf %64 : vector<1x16xf32>
    %66 = math.exp %65 : vector<1x16xf32>
    %cst_39 = arith.constant 1.000000e+00 : f32
    %67 = vector.broadcast %cst_39 : f32 to vector<1x16xf32>
    %68 = arith.addf %67, %66 : vector<1x16xf32>
    %69 = arith.divf %67, %68 : vector<1x16xf32>
    %70 = vector.shape_cast %69 : vector<1x16xf32> to vector<1x1x16xf32>
    %c0_40 = arith.constant 0 : index
    %c0_41 = arith.constant 0 : index
    %c0_42 = arith.constant 0 : index
    %71 = vector.load %arg8[%c0_40, %c0_41, %c0_42] : memref<1x1x16xf32, #tpu.memory_space<vmem>>, vector<1x1x16xf32>
    tpu.vector_store %arg8[%c0_40, %c0_41, %c0_42], %70 {strides = array<i32>} : memref<1x1x16xf32, #tpu.memory_space<vmem>>, vector<1x1x16xf32>,
    return
  }
  func.func @transform_0(%arg0: i32) -> (i32, i32, i32) {
    %c0_i32 = arith.constant 0 : i32
    %c0_i32_0 = arith.constant 0 : i32
    %c0_i32_1 = arith.constant 0 : i32
    return %arg0, %c0_i32, %c0_i32_0 : i32, i32, i32
  }
  func.func @transform_1(%arg0: i32) -> (i32, i32, i32) {
    %c0_i32 = arith.constant 0 : i32
    %c0_i32_0 = arith.constant 0 : i32
    %c0_i32_1 = arith.constant 0 : i32
    return %arg0, %c0_i32, %c0_i32_0 : i32, i32, i32
  }
  func.func @transform_2(%arg0: i32) -> (i32, i32, i32) {
    %c0_i32 = arith.constant 0 : i32
    %c0_i32_0 = arith.constant 0 : i32
    %c0_i32_1 = arith.constant 0 : i32
    %c0_i32_2 = arith.constant 0 : i32
    return %c0_i32, %c0_i32_0, %c0_i32_1 : i32, i32, i32
  }
  func.func @transform_3(%arg0: i32) -> (i32, i32) {
    %c0_i32 = arith.constant 0 : i32
    %c0_i32_0 = arith.constant 0 : i32
    %c0_i32_1 = arith.constant 0 : i32
    return %c0_i32, %c0_i32_0 : i32, i32
  }
  func.func @transform_4(%arg0: i32) -> (i32, i32) {
    %c0_i32 = arith.constant 0 : i32
    %c0_i32_0 = arith.constant 0 : i32
    %c0_i32_1 = arith.constant 0 : i32
    return %c0_i32, %c0_i32_0 : i32, i32
  }
  func.func @transform_5(%arg0: i32) -> (i32, i32) {
    %c0_i32 = arith.constant 0 : i32
    %c0_i32_0 = arith.constant 0 : i32
    %c0_i32_1 = arith.constant 0 : i32
    return %c0_i32, %c0_i32_0 : i32, i32
  }
  func.func @transform_6(%arg0: i32) -> (i32, i32) {
    %c0_i32 = arith.constant 0 : i32
    %c0_i32_0 = arith.constant 0 : i32
    %c0_i32_1 = arith.constant 0 : i32
    return %c0_i32, %c0_i32_0 : i32, i32
  }
  func.func @transform_7(%arg0: i32) -> (i32, i32, i32) {
    %c0_i32 = arith.constant 0 : i32
    %c0_i32_0 = arith.constant 0 : i32
    %c0_i32_1 = arith.constant 0 : i32
    return %arg0, %c0_i32, %c0_i32_0 : i32, i32, i32
  }
}

</mosaic_0001>

<llo_original>
// kernel: cnn_text_attn_forward.1
$region0: #{cnn_text_attn_forward.1}
  #allocation0 [shape = 'u32[]', space=smem, size = 0x4, offset = 0x4, fixed_abs, tag = 'smem constant byte address 0x4 - core index']
  #allocation1 [shape = 'u32[144,128]{1,0:T(1,128)}', space=vmem, size = 0x12000, scoped, tag = 'internal scratch']
  #allocation2 [shape = 'f32[1,1]{1,0:T(1,128)S(6)}', space=smem, size = 0x200, scoped, tag = 'scoped memory for cnn_text_attn_forward.1']
  %s0 = inlined_call_operand.vmem [shape: bf16[32,18,32], index: 0, kind: input, shape index: {}]
  %s1 = inlined_call_operand.vmem [shape: f32[32,16,3], index: 1, kind: input, shape index: {}]
  %s2 = inlined_call_operand.vmem [shape: bf16[3,32,96], index: 2, kind: input, shape index: {}]
  %s3 = inlined_call_operand.vmem [shape: f32[1,96], index: 3, kind: input, shape index: {}]
  %s4 = inlined_call_operand.vmem [shape: bf16[96,3], index: 4, kind: input, shape index: {}]
  %s5 = inlined_call_operand.vmem [shape: bf16[96,3], index: 5, kind: input, shape index: {}]
  %s6 = inlined_call_operand.<no memory space> [shape: f32[1,1], index: 6, kind: input, shape index: {}]
  %s7 = inlined_call_operand.vmem [shape: f32[2,1,16], index: 7, kind: output, shape index: {}]
  %s8 = sld [smem:[#allocation0]]
  $region61: #{cnn_text_attn_forward.1} parent=0
    _
  %s10 = ssub.s32 1, %s8
  %s11 = scalar_select 0, %s10, %s8
  %12 = sst [smem:[#allocation2]] %s6
  loop: start=0, step=1, limit=4
  $region2: #{cnn_text_attn_forward.1} parent=0 // loop_pre_header
    _
  $region3: #{cnn_text_attn_forward.1} parent=0 // loop_header
    %s14 = sphi 0, %s18
    %p15 = scmp.ge.s32.totalorder %s14, 4
    %s24 = sphi 0, %s26
    %s27 = sphi 0, %s24
    %s28 = sphi 0, %s27
    %s44 = sphi 0, %s28
    %s50 = sphi 0, %s52
    %s53 = sphi 0, %s50
    %s54 = sphi 0, %s53
    %s70 = sphi 0, %s54
    %s74 = sphi 0, %s74
    %s76 = sphi 0, %s74
    %s77 = sphi 0, %s76
    %s91 = sphi 0, %s77
    %s95 = sphi 0, %s95
    %s97 = sphi 0, %s95
    %s98 = sphi 0, %s97
    %s112 = sphi 0, %s98
    %s116 = sphi 0, %s116
    %s118 = sphi 0, %s116
    %s119 = sphi 0, %s118
    %s133 = sphi 0, %s119
    %s137 = sphi 0, %s137
    %s139 = sphi 0, %s137
    %s140 = sphi 0, %s139
    %s154 = sphi 0, %s140
    %s158 = sphi 0, %s158
    %s160 = sphi 0, %s158
    %s161 = sphi 0, %s160
    %s175 = sphi 0, %s161
    %s181 = sphi 0, %s183
    %s184 = sphi 0, %s181
    %s185 = sphi 0, %s184
    %s201 = sphi 0, %s185
  $region4: #{cnn_text_attn_forward.1} parent=0 // loop_header_branch
    %17 = sbr.rel (%p15) target = $region8
  $region5: #{cnn_text_attn_forward.1} parent=0 // loop_body
    %s19 = ssub.s32 %s14, 1
    %s20 = ssub.s32 %s14, 2
    %s21 = sadd.s32 %s14, 1
    %s22 = ssub.s32 %s14, %s21
    %p23 = scmp.eq.s32.totalorder %s22, 0
    %s25 = sadd.s32 %s24, 1
    %s26 = scalar_select %p23, %s24, %s25
    %p29 = pneg %p23
    %p30 = scmp.eq.s32.totalorder %s14, 1
    %p31 = por %p29, %p30
    %p32 = scmp.ne.s32.totalorder %s24, %s27
    %p33 = scmp.eq.s32.totalorder %s14, 0
    %p34 = por %p32, %p33
    %p35 = scmp.ne.s32.totalorder %s24, %s27
    %p36 = scmp.eq.s32.totalorder %s19, 1
    %p37 = por %p35, %p36
    %p38 = scmp.ne.s32.totalorder %s27, %s28
    %p39 = scmp.eq.s32.totalorder %s19, 0
    %p40 = por %p38, %p39
    %p41 = scmp.ne.s32.totalorder %s27, %s28
    %p42 = scmp.eq.s32.totalorder %s20, 1
    %p43 = por %p41, %p42
    %p45 = scmp.ne.s32.totalorder %s28, %s44
    %p46 = scmp.eq.s32.totalorder %s20, 0
    %p47 = por %p45, %p46
    %s48 = ssub.s32 %s14, %s21
    %p49 = scmp.eq.s32.totalorder %s48, 0
    %s51 = sadd.s32 %s50, 1
    %s52 = scalar_select %p49, %s50, %s51
    %p55 = pneg %p49
    %p56 = scmp.eq.s32.totalorder %s14, 1
    %p57 = por %p55, %p56
    %p58 = scmp.ne.s32.totalorder %s50, %s53
    %p59 = scmp.eq.s32.totalorder %s14, 0
    %p60 = por %p58, %p59
    %p61 = scmp.ne.s32.totalorder %s50, %s53
    %p62 = scmp.eq.s32.totalorder %s19, 1
    %p63 = por %p61, %p62
    %p64 = scmp.ne.s32.totalorder %s53, %s54
    %p65 = scmp.eq.s32.totalorder %s19, 0
    %p66 = por %p64, %p65
    %p67 = scmp.ne.s32.totalorder %s53, %s54
    %p68 = scmp.eq.s32.totalorder %s20, 1
    %p69 = por %p67, %p68
    %p71 = scmp.ne.s32.totalorder %s54, %s70
    %p72 = scmp.eq.s32.totalorder %s20, 0
    %p73 = por %p71, %p72
    %s75 = sadd.s32 %s74, 1
    %p78 = scmp.eq.s32.totalorder %s14, 1
    %p79 = scmp.ne.s32.totalorder %s74, %s76
    %p80 = scmp.eq.s32.totalorder %s14, 0
    %p81 = por %p79, %p80
    %p82 = scmp.ne.s32.totalorder %s74, %s76
    %p83 = scmp.eq.s32.totalorder %s19, 1
    %p84 = por %p82, %p83
    %p85 = scmp.ne.s32.totalorder %s76, %s77
    %p86 = scmp.eq.s32.totalorder %s19, 0
    %p87 = por %p85, %p86
    %p88 = scmp.ne.s32.totalorder %s76, %s77
    %p89 = scmp.eq.s32.totalorder %s20, 1
    %p90 = por %p88, %p89
    %p92 = scmp.ne.s32.totalorder %s77, %s91
    %p93 = scmp.eq.s32.totalorder %s20, 0
    %p94 = por %p92, %p93
    %s96 = sadd.s32 %s95, 1
    %p99 = scmp.eq.s32.totalorder %s14, 1
    %p100 = scmp.ne.s32.totalorder %s95, %s97
    %p101 = scmp.eq.s32.totalorder %s14, 0
    %p102 = por %p100, %p101
    %p103 = scmp.ne.s32.totalorder %s95, %s97
    %p104 = scmp.eq.s32.totalorder %s19, 1
    %p105 = por %p103, %p104
    %p106 = scmp.ne.s32.totalorder %s97, %s98
    %p107 = scmp.eq.s32.totalorder %s19, 0
    %p108 = por %p106, %p107
    %p109 = scmp.ne.s32.totalorder %s97, %s98
    %p110 = scmp.eq.s32.totalorder %s20, 1
    %p111 = por %p109, %p110
    %p113 = scmp.ne.s32.totalorder %s98, %s112
    %p114 = scmp.eq.s32.totalorder %s20, 0
    %p115 = por %p113, %p114
    %s117 = sadd.s32 %s116, 1
    %p120 = scmp.eq.s32.totalorder %s14, 1
    %p121 = scmp.ne.s32.totalorder %s116, %s118
    %p122 = scmp.eq.s32.totalorder %s14, 0
    %p123 = por %p121, %p122
    %p124 = scmp.ne.s32.totalorder %s116, %s118
    %p125 = scmp.eq.s32.totalorder %s19, 1
    %p126 = por %p124, %p125
    %p127 = scmp.ne.s32.totalorder %s118, %s119
    %p128 = scmp.eq.s32.totalorder %s19, 0
    %p129 = por %p127, %p128
    %p130 = scmp.ne.s32.totalorder %s118, %s119
    %p131 = scmp.eq.s32.totalorder %s20, 1
    %p132 = por %p130, %p131
    %p134 = scmp.ne.s32.totalorder %s119, %s133
    %p135 = scmp.eq.s32.totalorder %s20, 0
    %p136 = por %p134, %p135
    %s138 = sadd.s32 %s137, 1
    %p141 = scmp.eq.s32.totalorder %s14, 1
    %p142 = scmp.ne.s32.totalorder %s137, %s139
    %p143 = scmp.eq.s32.totalorder %s14, 0
    %p144 = por %p142, %p143
    %p145 = scmp.ne.s32.totalorder %s137, %s139
    %p146 = scmp.eq.s32.totalorder %s19, 1
    %p147 = por %p145, %p146
    %p148 = scmp.ne.s32.totalorder %s139, %s140
    %p149 = scmp.eq.s32.totalorder %s19, 0
    %p150 = por %p148, %p149
    %p151 = scmp.ne.s32.totalorder %s139, %s140
    %p152 = scmp.eq.s32.totalorder %s20, 1
    %p153 = por %p151, %p152
    %p155 = scmp.ne.s32.totalorder %s140, %s154
    %p156 = scmp.eq.s32.totalorder %s20, 0
    %p157 = por %p155, %p156
    %s159 = sadd.s32 %s158, 1
    %p162 = scmp.eq.s32.totalorder %s14, 1
    %p163 = scmp.ne.s32.totalorder %s158, %s160
    %p164 = scmp.eq.s32.totalorder %s14, 0
    %p165 = por %p163, %p164
    %p166 = scmp.ne.s32.totalorder %s158, %s160
    %p167 = scmp.eq.s32.totalorder %s19, 1
    %p168 = por %p166, %p167
    %p169 = scmp.ne.s32.totalorder %s160, %s161
    %p170 = scmp.eq.s32.totalorder %s19, 0
    %p171 = por %p169, %p170
    %p172 = scmp.ne.s32.totalorder %s160, %s161
    %p173 = scmp.eq.s32.totalorder %s20, 1
    %p174 = por %p172, %p173
    %p176 = scmp.ne.s32.totalorder %s161, %s175
    %p177 = scmp.eq.s32.totalorder %s20, 0
    %p178 = por %p176, %p177
    %s179 = ssub.s32 %s14, %s21
    %p180 = scmp.eq.s32.totalorder %s179, 0
    %s182 = sadd.s32 %s181, 1
    %s183 = scalar_select %p180, %s181, %s182
    %p186 = pneg %p180
    %p187 = scmp.eq.s32.totalorder %s14, 1
    %p188 = por %p186, %p187
    %p189 = scmp.ne.s32.totalorder %s181, %s184
    %p190 = scmp.eq.s32.totalorder %s14, 0
    %p191 = por %p189, %p190
    %p192 = scmp.ne.s32.totalorder %s181, %s184
    %p193 = scmp.eq.s32.totalorder %s19, 1
    %p194 = por %p192, %p193
    %p195 = scmp.ne.s32.totalorder %s184, %s185
    %p196 = scmp.eq.s32.totalorder %s19, 0
    %p197 = por %p195, %p196
    %p198 = scmp.ne.s32.totalorder %s184, %s185
    %p199 = scmp.eq.s32.totalorder %s20, 1
    %p200 = por %p198, %p199
    %p202 = scmp.ne.s32.totalorder %s185, %s201
    %p203 = scmp.eq.s32.totalorder %s20, 0
    %p204 = por %p202, %p203
    %p205 = scmp.le.s32.totalorder 1, %s14
    %p206 = scmp.lt.s32.totalorder %s14, 3
    %p207 = pnand %p205, %p206
    %p208 = pneg %p207
    // Predicated region
    $region9: #{cnn_text_attn_forward.1} parent=5 // pred_check
      _
    $region10: #{cnn_text_attn_forward.1} parent=5 // pred_check_branch
      %210 = sbr.rel (%p207) target = $region12
    $region11: #{cnn_text_attn_forward.1} parent=5 // pred_region
      %s211 = ssub.s32 %s14, 1
      // Predicated region
      $region13: #{cnn_text_attn_forward.1} parent=11 // pred_check
        %p212 = pneg %p87
      $region14: #{cnn_text_attn_forward.1} parent=11 // pred_check_branch
        %214 = sbr.rel (%p212) target = $region16
      $region15: #{cnn_text_attn_forward.1} parent=11 // pred_region
        _
      $region16: #{cnn_text_attn_forward.1} parent=11 // pred_fallthru
        _
      // Predicated region
      $region17: #{cnn_text_attn_forward.1} parent=11 // pred_check
        %p215 = pneg %p108
      $region18: #{cnn_text_attn_forward.1} parent=11 // pred_check_branch
        %217 = sbr.rel (%p215) target = $region20
      $region19: #{cnn_text_attn_forward.1} parent=11 // pred_region
        _
      $region20: #{cnn_text_attn_forward.1} parent=11 // pred_fallthru
        _
      // Predicated region
      $region21: #{cnn_text_attn_forward.1} parent=11 // pred_check
        %p218 = pneg %p129
      $region22: #{cnn_text_attn_forward.1} parent=11 // pred_check_branch
        %220 = sbr.rel (%p218) target = $region24
      $region23: #{cnn_text_attn_forward.1} parent=11 // pred_region
        _
      $region24: #{cnn_text_attn_forward.1} parent=11 // pred_fallthru
        _
      // Predicated region
      $region25: #{cnn_text_attn_forward.1} parent=11 // pred_check
        %p221 = pneg %p150
      $region26: #{cnn_text_attn_forward.1} parent=11 // pred_check_branch
        %223 = sbr.rel (%p221) target = $region28
      $region27: #{cnn_text_attn_forward.1} parent=11 // pred_region
        _
      $region28: #{cnn_text_attn_forward.1} parent=11 // pred_fallthru
        _
      // Predicated region
      $region29: #{cnn_text_attn_forward.1} parent=11 // pred_check
        %p224 = pneg %p171
      $region30: #{cnn_text_attn_forward.1} parent=11 // pred_check_branch
        %226 = sbr.rel (%p224) target = $region32
      $region31: #{cnn_text_attn_forward.1} parent=11 // pred_region
        _
      $region32: #{cnn_text_attn_forward.1} parent=11 // pred_fallthru
        _
    $region12: #{cnn_text_attn_forward.1} parent=5 // pred_fallthru
      _
    %p227 = scmp.lt.s32.totalorder %s14, 2
    // Predicated region
    $region33: #{cnn_text_attn_forward.1} parent=5 // pred_check
      %p228 = pneg %p227
    $region34: #{cnn_text_attn_forward.1} parent=5 // pred_check_branch
      %230 = sbr.rel (%p228) target = $region36
    $region35: #{cnn_text_attn_forward.1} parent=5 // pred_region
      // Predicated region
      $region37: #{cnn_text_attn_forward.1} parent=35 // pred_check
        %p231 = pneg %p34
      $region38: #{cnn_text_attn_forward.1} parent=35 // pred_check_branch
        %233 = sbr.rel (%p231) target = $region40
      $region39: #{cnn_text_attn_forward.1} parent=35 // pred_region
        %s234 = smul.u32 16, %s14
        %p235 = scmp.lt.s32.totalorder %s234, 31
        %s236 = scalar_select %p235, %s234, 31
        %s237 = smul.addr %s236, 3
        %s238 = smul.addr %s237, 4
        %s239 = scalar_lea.vmem %s0, %s238
        %s240 = smul.u32 16, %s14
      $region40: #{cnn_text_attn_forward.1} parent=35 // pred_fallthru
        _
      // Predicated region
      $region41: #{cnn_text_attn_forward.1} parent=35 // pred_check
        %p241 = pneg %p60
      $region42: #{cnn_text_attn_forward.1} parent=35 // pred_check_branch
        %243 = sbr.rel (%p241) target = $region44
      $region43: #{cnn_text_attn_forward.1} parent=35 // pred_region
        %s244 = smul.u32 16, %s14
        %p245 = scmp.lt.s32.totalorder %s244, 31
        %s246 = scalar_select %p245, %s244, 31
        %s247 = smul.addr %s246, 2
        %s248 = smul.addr %s247, 8
        %s249 = scalar_lea.vmem %s1, %s248
        %s250 = smul.u32 16, %s14
      $region44: #{cnn_text_attn_forward.1} parent=35 // pred_fallthru
        _
    $region36: #{cnn_text_attn_forward.1} parent=5 // pred_fallthru
      _
    %p251 = scmp.le.s32.totalorder 1, %s14
    %p252 = scmp.lt.s32.totalorder %s14, 3
    %p253 = pnand %p251, %p252
    %p254 = pneg %p253
    // Predicated region
    $region45: #{cnn_text_attn_forward.1} parent=5 // pred_check
      _
    $region46: #{cnn_text_attn_forward.1} parent=5 // pred_check_branch
      %256 = sbr.rel (%p253) target = $region48
    $region47: #{cnn_text_attn_forward.1} parent=5 // pred_region
      %s257 = ssub.s32 %s14, 1
      %s258 = smul.u32 16, %s19
      %p259 = scmp.lt.s32.totalorder %s258, 31
      %s260 = scalar_select %p259, %s258, 31
      %s261 = smul.addr %s260, 3
      %s262 = smul.addr %s261, 4
      %s263 = scalar_lea.vmem %s0, %s262
      %p264 = pneg %p40
      %p265 = pneg %p37
      %s266 = smul.u32 16, %s19
      %p267 = scmp.lt.s32.totalorder %s266, 31
      %s268 = scalar_select %p267, %s266, 31
      %s269 = smul.addr %s268, 2
      %s270 = smul.addr %s269, 8
      %s271 = scalar_lea.vmem %s1, %s270
      %p272 = pneg %p66
      %p273 = pneg %p63
      %p274 = pneg %p87
      %p275 = pneg %p84
      %p276 = pneg %p108
      %p277 = pneg %p105
      %p278 = pneg %p129
      %p279 = pneg %p126
      %p280 = pneg %p150
      %p281 = pneg %p147
      %p282 = pneg %p171
      %p283 = pneg %p168
      %p284 = pneg %p197
      %p285 = pneg %p194
      %p286 = scmp.lt.s32.totalorder %s19, 1
      %s287 = scalar_select %p286, %s19, 1
      %s288 = scalar_lea.vmem %s7, %s287
      %s289 = smul.u32 16, %s19
      %p290 = scmp.lt.s32.totalorder %s289, 31
      %s291 = scalar_select %p290, %s289, 31
      %s292 = smul.addr %s291, 3
      %s293 = smul.addr %s292, 4
      %s294 = scalar_lea.vmem %s0, %s293
      %s295 = smul.u32 16, %s19
      %s296 = smul.u32 16, %s19
      %p297 = scmp.lt.s32.totalorder %s296, 31
      %s298 = scalar_select %p297, %s296, 31
      %s299 = smul.addr %s298, 2
      %s300 = smul.addr %s299, 8
      %s301 = scalar_lea.vmem %s1, %s300
      %s302 = smul.u32 16, %s19
      %p303 = scmp.lt.s32.totalorder %s19, 1
      %s304 = scalar_select %p303, %s19, 1
      %s305 = scalar_lea.vmem %s7, %s304
      %v307 = vld [vmem:[%s294] sm:$0xf]
      %v308 = vld [vmem:[%s294 + $0x4] sm:$0xf]
      %v309 = vld [vmem:[%s294 + $0xc] sm:$0xf]
      %v310 = vld [vmem:[%s294 + $0x10] sm:$0xf]
      %v311 = vld [vmem:[%s294 + $0x18] sm:$0xf]
      %v312 = vld [vmem:[%s294 + $0x1c] sm:$0xf]
      %v313 = vld [vmem:[%s294 + $0x24] sm:$0xf]
      %v314 = vld [vmem:[%s294 + $0x28] sm:$0xf]
      %v315 = vld [vmem:[%s294 + $0x30] sm:$0xf]
      %v316 = vld [vmem:[%s294 + $0x34] sm:$0xf]
      %v317 = vld [vmem:[%s294 + $0x3c] sm:$0xf]
      %v318 = vld [vmem:[%s294 + $0x40] sm:$0xf]
      %v319 = vld [vmem:[%s294 + $0x48] sm:$0xf]
      %v320 = vld [vmem:[%s294 + $0x4c] sm:$0xf]
      %v321 = vld [vmem:[%s294 + $0x54] sm:$0xf]
      %v322 = vld [vmem:[%s294 + $0x58] sm:$0xf]
      %v323 = vld [vmem:[%s294 + $0x60] sm:$0xf]
      %v324 = vld [vmem:[%s294 + $0x64] sm:$0xf]
      %v325 = vld [vmem:[%s294 + $0x6c] sm:$0xf]
      %v326 = vld [vmem:[%s294 + $0x70] sm:$0xf]
      %v327 = vld [vmem:[%s294 + $0x78] sm:$0xf]
      %v328 = vld [vmem:[%s294 + $0x7c] sm:$0xf]
      %v329 = vld [vmem:[%s294 + $0x84] sm:$0xf]
      %v330 = vld [vmem:[%s294 + $0x88] sm:$0xf]
      %v331 = vld [vmem:[%s294 + $0x90] sm:$0xf]
      %v332 = vld [vmem:[%s294 + $0x94] sm:$0xf]
      %v333 = vld [vmem:[%s294 + $0x9c] sm:$0xf]
      %v334 = vld [vmem:[%s294 + $0xa0] sm:$0xf]
      %v335 = vld [vmem:[%s294 + $0xa8] sm:$0xf]
      %v336 = vld [vmem:[%s294 + $0xac] sm:$0xf]
      %v337 = vld [vmem:[%s294 + $0xb4] sm:$0xf]
      %v338 = vld [vmem:[%s294 + $0xb8] sm:$0xf]
      %v339 = vld [vmem:[%s2] sm:$0xf]
      %v340 = vld [vmem:[%s2 + $0x4] sm:$0xf]
      %v341 = vld [vmem:[%s2 + $0x8] sm:$0xf]
      %v342 = vld [vmem:[%s2 + $0xc] sm:$0xf]
      %v343 = vld [vmem:[%s294 + $0x8] sm:$0x1]
      %v344 = vld [vmem:[%s294 + $0x14] sm:$0x1]
      %v345 = vld [vmem:[%s294 + $0x20] sm:$0x1]
      %v346 = vld [vmem:[%s294 + $0x2c] sm:$0x1]
      %v347 = vld [vmem:[%s294 + $0x38] sm:$0x1]
      %v348 = vld [vmem:[%s294 + $0x44] sm:$0x1]
      %v349 = vld [vmem:[%s294 + $0x50] sm:$0x1]
      %v350 = vld [vmem:[%s294 + $0x5c] sm:$0x1]
      %v351 = vld [vmem:[%s294 + $0x68] sm:$0x1]
      %v352 = vld [vmem:[%s294 + $0x74] sm:$0x1]
      %v353 = vld [vmem:[%s294 + $0x80] sm:$0x1]
      %v354 = vld [vmem:[%s294 + $0x8c] sm:$0x1]
      %v355 = vld [vmem:[%s294 + $0x98] sm:$0x1]
      %v356 = vld [vmem:[%s294 + $0xa4] sm:$0x1]
      %v357 = vld [vmem:[%s294 + $0xb0] sm:$0x1]
      %v358 = vld [vmem:[%s294 + $0xbc] sm:$0x1]
      %vm359 = vsmask.f32 3328
      %vm360 = vsmask.f32 7440
      %vm361 = vmor %vm359, %vm360
      %v363 = vshrl.u32 %v307, 16
      %v365 = vrot.slane %v363, 4
      %v366 = vshll.u32 %v307, 16
      %v368 = vrot.slane %v366, 5
      %v369 = vor.u32 %v365, %v368
      %v370 = vrot.slane %v369, 4
      %v372 = vshll.u32 %v308, 16
      %v374 = vrot.slane %v372, 5
      %v375 = vsel %vm361, %v370, %v374
      %v376 = vshrl.u32 %v308, 16
      %v378 = vrot.slane %v376, 4
      %v379 = vor.u32 %v378, %v374
      %v380 = vrot.slane %v379, 4
      %v382 = vshll.u32 %v343, 16
      %v384 = vrot.slane %v382, 5
      %v385 = vsel %vm361, %v380, %v384
      %v387 = vshrl.u32 %v309, 16
      %v389 = vrot.slane %v387, 4
      %v390 = vshll.u32 %v309, 16
      %v392 = vrot.slane %v390, 5
      %v393 = vor.u32 %v389, %v392
      %v394 = vrot.slane %v393, 4
      %v396 = vshll.u32 %v310, 16
      %v398 = vrot.slane %v396, 5
      %v399 = vsel %vm361, %v394, %v398
      %v400 = vshrl.u32 %v310, 16
      %v402 = vrot.slane %v400, 4
      %v403 = vor.u32 %v402, %v398
      %v404 = vrot.slane %v403, 4
      %v406 = vshll.u32 %v344, 16
      %v408 = vrot.slane %v406, 5
      %v409 = vsel %vm361, %v404, %v408
      %v411 = vshrl.u32 %v311, 16
      %v413 = vrot.slane %v411, 4
      %v414 = vshll.u32 %v311, 16
      %v416 = vrot.slane %v414, 5
      %v417 = vor.u32 %v413, %v416
      %v418 = vrot.slane %v417, 4
      %v420 = vshll.u32 %v312, 16
      %v422 = vrot.slane %v420, 5
      %v423 = vsel %vm361, %v418, %v422
      %v424 = vshrl.u32 %v312, 16
      %v426 = vrot.slane %v424, 4
      %v427 = vor.u32 %v426, %v422
      %v428 = vrot.slane %v427, 4
      %v430 = vshll.u32 %v345, 16
      %v432 = vrot.slane %v430, 5
      %v433 = vsel %vm361, %v428, %v432
      %v435 = vshrl.u32 %v313, 16
      %v437 = vrot.slane %v435, 4
      %v438 = vshll.u32 %v313, 16
      %v440 = vrot.slane %v438, 5
      %v441 = vor.u32 %v437, %v440
      %v442 = vrot.slane %v441, 4
      %v444 = vshll.u32 %v314, 16
      %v446 = vrot.slane %v444, 5
      %v447 = vsel %vm361, %v442, %v446
      %v448 = vshrl.u32 %v314, 16
      %v450 = vrot.slane %v448, 4
      %v451 = vor.u32 %v450, %v446
      %v452 = vrot.slane %v451, 4
      %v454 = vshll.u32 %v346, 16
      %v456 = vrot.slane %v454, 5
      %v457 = vsel %vm361, %v452, %v456
      %v459 = vshrl.u32 %v315, 16
      %v461 = vrot.slane %v459, 4
      %v462 = vshll.u32 %v315, 16
      %v464 = vrot.slane %v462, 5
      %v465 = vor.u32 %v461, %v464
      %v466 = vrot.slane %v465, 4
      %v468 = vshll.u32 %v316, 16
      %v470 = vrot.slane %v468, 5
      %v471 = vsel %vm361, %v466, %v470
      %v472 = vshrl.u32 %v316, 16
      %v474 = vrot.slane %v472, 4
      %v475 = vor.u32 %v474, %v470
      %v476 = vrot.slane %v475, 4
      %v478 = vshll.u32 %v347, 16
      %v480 = vrot.slane %v478, 5
      %v481 = vsel %vm361, %v476, %v480
      %v483 = vshrl.u32 %v317, 16
      %v485 = vrot.slane %v483, 4
      %v486 = vshll.u32 %v317, 16
      %v488 = vrot.slane %v486, 5
      %v489 = vor.u32 %v485, %v488
      %v490 = vrot.slane %v489, 4
      %v492 = vshll.u32 %v318, 16
      %v494 = vrot.slane %v492, 5
      %v495 = vsel %vm361, %v490, %v494
      %v496 = vshrl.u32 %v318, 16
      %v498 = vrot.slane %v496, 4
      %v499 = vor.u32 %v498, %v494
      %v500 = vrot.slane %v499, 4
      %v502 = vshll.u32 %v348, 16
      %v504 = vrot.slane %v502, 5
      %v505 = vsel %vm361, %v500, %v504
      %v507 = vshrl.u32 %v319, 16
      %v509 = vrot.slane %v507, 4
      %v510 = vshll.u32 %v319, 16
      %v512 = vrot.slane %v510, 5
      %v513 = vor.u32 %v509, %v512
      %v514 = vrot.slane %v513, 4
      %v516 = vshll.u32 %v320, 16
      %v518 = vrot.slane %v516, 5
      %v519 = vsel %vm361, %v514, %v518
      %v520 = vshrl.u32 %v320, 16
      %v522 = vrot.slane %v520, 4
      %v523 = vor.u32 %v522, %v518
      %v524 = vrot.slane %v523, 4
      %v526 = vshll.u32 %v349, 16
      %v528 = vrot.slane %v526, 5
      %v529 = vsel %vm361, %v524, %v528
      %v531 = vshrl.u32 %v321, 16
      %v533 = vrot.slane %v531, 4
      %v534 = vshll.u32 %v321, 16
      %v536 = vrot.slane %v534, 5
      %v537 = vor.u32 %v533, %v536
      %v538 = vrot.slane %v537, 4
      %v540 = vshll.u32 %v322, 16
      %v542 = vrot.slane %v540, 5
      %v543 = vsel %vm361, %v538, %v542
      %v544 = vshrl.u32 %v322, 16
      %v546 = vrot.slane %v544, 4
      %v547 = vor.u32 %v546, %v542
      %v548 = vrot.slane %v547, 4
      %v550 = vshll.u32 %v350, 16
      %v552 = vrot.slane %v550, 5
      %v553 = vsel %vm361, %v548, %v552
      %v555 = vshrl.u32 %v323, 16
      %v557 = vrot.slane %v555, 4
      %v558 = vshll.u32 %v323, 16
      %v560 = vrot.slane %v558, 5
      %v561 = vor.u32 %v557, %v560
      %v562 = vrot.slane %v561, 4
      %v564 = vshll.u32 %v324, 16
      %v566 = vrot.slane %v564, 5
      %v567 = vsel %vm361, %v562, %v566
      %v568 = vshrl.u32 %v324, 16
      %v570 = vrot.slane %v568, 4
      %v571 = vor.u32 %v570, %v566
      %v572 = vrot.slane %v571, 4
      %v574 = vshll.u32 %v351, 16
      %v576 = vrot.slane %v574, 5
      %v577 = vsel %vm361, %v572, %v576
      %v579 = vshrl.u32 %v325, 16
      %v581 = vrot.slane %v579, 4
      %v582 = vshll.u32 %v325, 16
      %v584 = vrot.slane %v582, 5
      %v585 = vor.u32 %v581, %v584
      %v586 = vrot.slane %v585, 4
      %v588 = vshll.u32 %v326, 16
      %v590 = vrot.slane %v588, 5
      %v591 = vsel %vm361, %v586, %v590
      %v592 = vshrl.u32 %v326, 16
      %v594 = vrot.slane %v592, 4
      %v595 = vor.u32 %v594, %v590
      %v596 = vrot.slane %v595, 4
      %v598 = vshll.u32 %v352, 16
      %v600 = vrot.slane %v598, 5
      %v601 = vsel %vm361, %v596, %v600
      %v603 = vshrl.u32 %v327, 16
      %v605 = vrot.slane %v603, 4
      %v606 = vshll.u32 %v327, 16
      %v608 = vrot.slane %v606, 5
      %v609 = vor.u32 %v605, %v608
      %v610 = vrot.slane %v609, 4
      %v612 = vshll.u32 %v328, 16
      %v614 = vrot.slane %v612, 5
      %v615 = vsel %vm361, %v610, %v614
      %v616 = vshrl.u32 %v328, 16
      %v618 = vrot.slane %v616, 4
      %v619 = vor.u32 %v618, %v614
      %v620 = vrot.slane %v619, 4
      %v622 = vshll.u32 %v353, 16
      %v624 = vrot.slane %v622, 5
      %v625 = vsel %vm361, %v620, %v624
      %v627 = vshrl.u32 %v329, 16
      %v629 = vrot.slane %v627, 4
      %v630 = vshll.u32 %v329, 16
      %v632 = vrot.slane %v630, 5
      %v633 = vor.u32 %v629, %v632
      %v634 = vrot.slane %v633, 4
      %v636 = vshll.u32 %v330, 16
      %v638 = vrot.slane %v636, 5
      %v639 = vsel %vm361, %v634, %v638
      %v640 = vshrl.u32 %v330, 16
      %v642 = vrot.slane %v640, 4
      %v643 = vor.u32 %v642, %v638
      %v644 = vrot.slane %v643, 4
      %v646 = vshll.u32 %v354, 16
      %v648 = vrot.slane %v646, 5
      %v649 = vsel %vm361, %v644, %v648
      %v651 = vshrl.u32 %v331, 16
      %v653 = vrot.slane %v651, 4
      %v654 = vshll.u32 %v331, 16
      %v656 = vrot.slane %v654, 5
      %v657 = vor.u32 %v653, %v656
      %v658 = vrot.slane %v657, 4
      %v660 = vshll.u32 %v332, 16
      %v662 = vrot.slane %v660, 5
      %v663 = vsel %vm361, %v658, %v662
      %v664 = vshrl.u32 %v332, 16
      %v666 = vrot.slane %v664, 4
      %v667 = vor.u32 %v666, %v662
      %v668 = vrot.slane %v667, 4
      %v670 = vshll.u32 %v355, 16
      %v672 = vrot.slane %v670, 5
      %v673 = vsel %vm361, %v668, %v672
      %v675 = vshrl.u32 %v333, 16
      %v677 = vrot.slane %v675, 4
      %v678 = vshll.u32 %v333, 16
      %v680 = vrot.slane %v678, 5
      %v681 = vor.u32 %v677, %v680
      %v682 = vrot.slane %v681, 4
      %v684 = vshll.u32 %v334, 16
      %v686 = vrot.slane %v684, 5
      %v687 = vsel %vm361, %v682, %v686
      %v688 = vshrl.u32 %v334, 16
      %v690 = vrot.slane %v688, 4
      %v691 = vor.u32 %v690, %v686
      %v692 = vrot.slane %v691, 4
      %v694 = vshll.u32 %v356, 16
      %v696 = vrot.slane %v694, 5
      %v697 = vsel %vm361, %v692, %v696
      %v699 = vshrl.u32 %v335, 16
      %v701 = vrot.slane %v699, 4
      %v702 = vshll.u32 %v335, 16
      %v704 = vrot.slane %v702, 5
      %v705 = vor.u32 %v701, %v704
      %v706 = vrot.slane %v705, 4
      %v708 = vshll.u32 %v336, 16
      %v710 = vrot.slane %v708, 5
      %v711 = vsel %vm361, %v706, %v710
      %v712 = vshrl.u32 %v336, 16
      %v714 = vrot.slane %v712, 4
      %v715 = vor.u32 %v714, %v710
      %v716 = vrot.slane %v715, 4
      %v718 = vshll.u32 %v357, 16
      %v720 = vrot.slane %v718, 5
      %v721 = vsel %vm361, %v716, %v720
      %v723 = vshrl.u32 %v337, 16
      %v725 = vrot.slane %v723, 4
      %v726 = vshll.u32 %v337, 16
      %v728 = vrot.slane %v726, 5
      %v729 = vor.u32 %v725, %v728
      %v730 = vrot.slane %v729, 4
      %v732 = vshll.u32 %v338, 16
      %v734 = vrot.slane %v732, 5
      %v735 = vsel %vm361, %v730, %v734
      %v736 = vshrl.u32 %v338, 16
      %v738 = vrot.slane %v736, 4
      %v739 = vor.u32 %v738, %v734
      %v740 = vrot.slane %v739, 4
      %v742 = vshll.u32 %v358, 16
      %v744 = vrot.slane %v742, 5
      %v745 = vsel %vm361, %v740, %v744
      %s746 = scalar_lea.vmem %s2, 16
      %v747 = vld [vmem:[%s746] sm:$0xf]
      %v748 = vld [vmem:[%s746 + $0x4] sm:$0xf]
      %v749 = vld [vmem:[%s746 + $0x8] sm:$0xf]
      %v750 = vld [vmem:[%s746 + $0xc] sm:$0xf]
      %v751 = vunpack.c.l.b16 %v375
      %v752 = vunpack.c.l.b16 %v385
      %v753 = vunpack.c.l.b16 %v399
      %v754 = vunpack.c.l.b16 %v409
      %v755 = vunpack.c.l.b16 %v423
      %v756 = vunpack.c.l.b16 %v433
      %v757 = vunpack.c.l.b16 %v447
      %v758 = vunpack.c.l.b16 %v457
      %v759 = vunpack.c.l.b16 %v471
      %v760 = vunpack.c.l.b16 %v481
      %v761 = vunpack.c.l.b16 %v495
      %v762 = vunpack.c.l.b16 %v505
      %v763 = vunpack.c.l.b16 %v519
      %v764 = vunpack.c.l.b16 %v529
      %v765 = vunpack.c.l.b16 %v543
      %v766 = vunpack.c.l.b16 %v553
      %v767 = vunpack.c.l.b16 %v567
      %v768 = vunpack.c.l.b16 %v577
      %v769 = vunpack.c.l.b16 %v591
      %v770 = vunpack.c.l.b16 %v601
      %v771 = vunpack.c.l.b16 %v615
      %v772 = vunpack.c.l.b16 %v625
      %v773 = vunpack.c.l.b16 %v639
      %v774 = vunpack.c.l.b16 %v649
      %v775 = vunpack.c.l.b16 %v663
      %v776 = vunpack.c.l.b16 %v673
      %v777 = vunpack.c.l.b16 %v687
      %v778 = vunpack.c.l.b16 %v697
      %v779 = vunpack.c.l.b16 %v711
      %v780 = vunpack.c.l.b16 %v721
      %v781 = vunpack.c.l.b16 %v735
      %v782 = vunpack.c.l.b16 %v745
      %v783 = vpack.c.b16 %v752, %v751
      %v784 = vpack.c.b16 %v754, %v753
      %v785 = vpack.c.b16 %v756, %v755
      %v786 = vpack.c.b16 %v758, %v757
      %v787 = vpack.c.b16 %v760, %v759
      %v788 = vpack.c.b16 %v762, %v761
      %v789 = vpack.c.b16 %v764, %v763
      %v790 = vpack.c.b16 %v766, %v765
      %v791 = vpack.c.b16 %v768, %v767
      %v792 = vpack.c.b16 %v770, %v769
      %v793 = vpack.c.b16 %v772, %v771
      %v794 = vpack.c.b16 %v774, %v773
      %v795 = vpack.c.b16 %v776, %v775
      %v796 = vpack.c.b16 %v778, %v777
      %v797 = vpack.c.b16 %v780, %v779
      %v798 = vpack.c.b16 %v782, %v781
      %v803 = vunpack.c.l.b16 %v747
      %v804 = vunpack.c.l.b16 %v748
      %v805 = vunpack.c.l.b16 %v749
      %v806 = vunpack.c.l.b16 %v750
      %v807 = vpack.c.b16 %v804, %v803
      %v808 = vpack.c.b16 %v806, %v805
      %vm811 = vcmask 261120
      %v813 = vsel %vm811, %v783, 0
      %v816 = vsel %vm811, %v784, 0
      %v819 = vsel %vm811, %v785, 0
      %v822 = vsel %vm811, %v786, 0
      %v825 = vsel %vm811, %v787, 0
      %v828 = vsel %vm811, %v788, 0
      %v831 = vsel %vm811, %v789, 0
      %v834 = vsel %vm811, %v790, 0
      %v837 = vsel %vm811, %v791, 0
      %v840 = vsel %vm811, %v792, 0
      %v843 = vsel %vm811, %v793, 0
      %v846 = vsel %vm811, %v794, 0
      %v849 = vsel %vm811, %v795, 0
      %v852 = vsel %vm811, %v796, 0
      %v855 = vsel %vm811, %v797, 0
      %v858 = vsel %vm811, %v798, 0
      %860 = vmatprep.subr.bf16.mxu0 0
      %861 = vmatpush1.bf16.msra.mxu0 0
      %862 = vmatprep.subr.bf16.mxu0 0
      %863 = vmatpush1.bf16.msra.mxu0 0
      %864 = vmatprep.subr.bf16.mxu0 0
      %865 = vmatpush1.bf16.msra.mxu0 0
      %866 = vmatprep.subr.bf16.mxu0 0
      %867 = vmatpush1.bf16.msra.mxu0 0
      %868 = vmatprep.subr.bf16.mxu0 0
      %869 = vmatpush1.bf16.msra.mxu0 0
      %870 = vmatprep.subr.bf16.mxu0 0
      %871 = vmatpush1.bf16.msra.mxu0 0
      %872 = vmatprep.subr.bf16.mxu0 0
      %873 = vmatpush1.bf16.msra.mxu0 %v808
      %874 = vmatprep.subr.bf16.mxu0 0
      %875 = vmatpush1.bf16.msra.mxu0 %v807
      %876 = vmatprep.subr.bf16.mxu0 0
      %877 = vmatpush2.bf16.msra.mxu0 0
      %878 = vmatprep.subr.bf16.mxu0 0
      %879 = vmatpush2.bf16.msra.mxu0 0
      %880 = vmatprep.subr.bf16.mxu0 0
      %881 = vmatpush2.bf16.msra.mxu0 0
      %882 = vmatprep.subr.bf16.mxu0 0
      %883 = vmatpush2.bf16.msra.mxu0 0
      %884 = vmatprep.subr.bf16.mxu0 0
      %885 = vmatpush2.bf16.msra.mxu0 0
      %886 = vmatprep.subr.bf16.mxu0 0
      %887 = vmatpush2.bf16.msra.mxu0 0
      %888 = vmatprep.subr.bf16.mxu0 0
      %889 = vmatpush2.bf16.msra.mxu0 0
      %890 = vmatprep.subr.bf16.mxu0 0
      %891 = vmatpush2.bf16.msra.mxu0 0
      %892 = vmatprep.mubr.bf16.mxu0 0
      %893 = vmatmul.mubr.bf16.gmra.mxu0 %v813
      %v894 = vpop.f32.mrf.mxu0
      %v895 = vadd.f32 0.0, %v894
      %v896 = vpop.f32.mrf.mxu0
      %v897 = vpop.f32.mrf.mxu0
      %v898 = vadd.f32 0.0, %v897
      %v899 = vpop.f32.mrf.mxu0
      %900 = vmatprep.mubr.bf16.mxu0 0
      %901 = vmatmul.mubr.bf16.gmra.mxu0 %v816
      %v902 = vpop.f32.mrf.mxu0
      %v903 = vadd.f32 0.0, %v902
      %v904 = vpop.f32.mrf.mxu0
      %v905 = vpop.f32.mrf.mxu0
      %v906 = vadd.f32 0.0, %v905
      %v907 = vpop.f32.mrf.mxu0
      %908 = vmatprep.mubr.bf16.mxu0 0
      %909 = vmatmul.mubr.bf16.gmra.mxu0 %v819
      %v910 = vpop.f32.mrf.mxu0
      %v911 = vadd.f32 0.0, %v910
      %v912 = vpop.f32.mrf.mxu0
      %v913 = vpop.f32.mrf.mxu0
      %v914 = vadd.f32 0.0, %v913
      %v915 = vpop.f32.mrf.mxu0
      %916 = vmatprep.mubr.bf16.mxu0 0
      %917 = vmatmul.mubr.bf16.gmra.mxu0 %v822
      %v918 = vpop.f32.mrf.mxu0
      %v919 = vadd.f32 0.0, %v918
      %v920 = vpop.f32.mrf.mxu0
      %v921 = vpop.f32.mrf.mxu0
      %v922 = vadd.f32 0.0, %v921
      %v923 = vpop.f32.mrf.mxu0
      %924 = vmatprep.mubr.bf16.mxu0 0
      %925 = vmatmul.mubr.bf16.gmra.mxu0 %v825
      %v926 = vpop.f32.mrf.mxu0
      %v927 = vadd.f32 0.0, %v926
      %v928 = vpop.f32.mrf.mxu0
      %v929 = vpop.f32.mrf.mxu0
      %v930 = vadd.f32 0.0, %v929
      %v931 = vpop.f32.mrf.mxu0
      %932 = vmatprep.mubr.bf16.mxu0 0
      %933 = vmatmul.mubr.bf16.gmra.mxu0 %v828
      %v934 = vpop.f32.mrf.mxu0
      %v935 = vadd.f32 0.0, %v934
      %v936 = vpop.f32.mrf.mxu0
      %v937 = vpop.f32.mrf.mxu0
      %v938 = vadd.f32 0.0, %v937
      %v939 = vpop.f32.mrf.mxu0
      %940 = vmatprep.mubr.bf16.mxu0 0
      %941 = vmatmul.mubr.bf16.gmra.mxu0 %v831
      %v942 = vpop.f32.mrf.mxu0
      %v943 = vadd.f32 0.0, %v942
      %v944 = vpop.f32.mrf.mxu0
      %v945 = vpop.f32.mrf.mxu0
      %v946 = vadd.f32 0.0, %v945
      %v947 = vpop.f32.mrf.mxu0
      %948 = vmatprep.mubr.bf16.mxu0 0
      %949 = vmatmul.mubr.bf16.gmra.mxu0 %v834
      %v950 = vpop.f32.mrf.mxu0
      %v951 = vadd.f32 0.0, %v950
      %v952 = vpop.f32.mrf.mxu0
      %v953 = vpop.f32.mrf.mxu0
      %v954 = vadd.f32 0.0, %v953
      %v955 = vpop.f32.mrf.mxu0
      %956 = vmatprep.mubr.bf16.mxu0 0
      %957 = vmatmul.mubr.bf16.gmra.mxu0 %v837
      %v958 = vpop.f32.mrf.mxu0
      %v959 = vadd.f32 0.0, %v958
      %v960 = vpop.f32.mrf.mxu0
      %v961 = vpop.f32.mrf.mxu0
      %v962 = vadd.f32 0.0, %v961
      %v963 = vpop.f32.mrf.mxu0
      %964 = vmatprep.mubr.bf16.mxu0 0
      %965 = vmatmul.mubr.bf16.gmra.mxu0 %v840
      %v966 = vpop.f32.mrf.mxu0
      %v967 = vadd.f32 0.0, %v966
      %v968 = vpop.f32.mrf.mxu0
      %v969 = vpop.f32.mrf.mxu0
      %v970 = vadd.f32 0.0, %v969
      %v971 = vpop.f32.mrf.mxu0
      %972 = vmatprep.mubr.bf16.mxu0 0
      %973 = vmatmul.mubr.bf16.gmra.mxu0 %v843
      %v974 = vpop.f32.mrf.mxu0
      %v975 = vadd.f32 0.0, %v974
      %v976 = vpop.f32.mrf.mxu0
      %v977 = vpop.f32.mrf.mxu0
      %v978 = vadd.f32 0.0, %v977
      %v979 = vpop.f32.mrf.mxu0
      %980 = vmatprep.mubr.bf16.mxu0 0
      %981 = vmatmul.mubr.bf16.gmra.mxu0 %v846
      %v982 = vpop.f32.mrf.mxu0
      %v983 = vadd.f32 0.0, %v982
      %v984 = vpop.f32.mrf.mxu0
      %v985 = vpop.f32.mrf.mxu0
      %v986 = vadd.f32 0.0, %v985
      %v987 = vpop.f32.mrf.mxu0
      %988 = vmatprep.mubr.bf16.mxu0 0
      %989 = vmatmul.mubr.bf16.gmra.mxu0 %v849
      %v990 = vpop.f32.mrf.mxu0
      %v991 = vadd.f32 0.0, %v990
      %v992 = vpop.f32.mrf.mxu0
      %v993 = vpop.f32.mrf.mxu0
      %v994 = vadd.f32 0.0, %v993
      %v995 = vpop.f32.mrf.mxu0
      %996 = vmatprep.mubr.bf16.mxu0 0
      %997 = vmatmul.mubr.bf16.gmra.mxu0 %v852
      %v998 = vpop.f32.mrf.mxu0
      %v999 = vadd.f32 0.0, %v998
      %v1000 = vpop.f32.mrf.mxu0
      %v1001 = vpop.f32.mrf.mxu0
      %v1002 = vadd.f32 0.0, %v1001
      %v1003 = vpop.f32.mrf.mxu0
      %1004 = vmatprep.mubr.bf16.mxu0 0
      %1005 = vmatmul.mubr.bf16.gmra.mxu0 %v855
      %v1006 = vpop.f32.mrf.mxu0
      %v1007 = vadd.f32 0.0, %v1006
      %v1008 = vpop.f32.mrf.mxu0
      %v1009 = vpop.f32.mrf.mxu0
      %v1010 = vadd.f32 0.0, %v1009
      %v1011 = vpop.f32.mrf.mxu0
      %1012 = vmatprep.mubr.bf16.mxu0 0
      %1013 = vmatmul.mubr.bf16.gmra.mxu0 %v858
      %v1014 = vpop.f32.mrf.mxu0
      %v1015 = vadd.f32 0.0, %v1014
      %v1016 = vpop.f32.mrf.mxu0
      %v1017 = vpop.f32.mrf.mxu0
      %v1018 = vadd.f32 0.0, %v1017
      %v1019 = vpop.f32.mrf.mxu0
      %1020 = vdwg.mxu0
      %v1053 = vunpack.c.l.b16 %v307
      %v1054 = vunpack.c.l.b16 %v308
      %v1055 = vunpack.c.l.b16 %v309
      %v1056 = vunpack.c.l.b16 %v310
      %v1057 = vunpack.c.l.b16 %v311
      %v1058 = vunpack.c.l.b16 %v312
      %v1059 = vunpack.c.l.b16 %v313
      %v1060 = vunpack.c.l.b16 %v314
      %v1061 = vunpack.c.l.b16 %v315
      %v1062 = vunpack.c.l.b16 %v316
      %v1063 = vunpack.c.l.b16 %v317
      %v1064 = vunpack.c.l.b16 %v318
      %v1065 = vunpack.c.l.b16 %v319
      %v1066 = vunpack.c.l.b16 %v320
      %v1067 = vunpack.c.l.b16 %v321
      %v1068 = vunpack.c.l.b16 %v322
      %v1069 = vunpack.c.l.b16 %v323
      %v1070 = vunpack.c.l.b16 %v324
      %v1071 = vunpack.c.l.b16 %v325
      %v1072 = vunpack.c.l.b16 %v326
      %v1073 = vunpack.c.l.b16 %v327
      %v1074 = vunpack.c.l.b16 %v328
      %v1075 = vunpack.c.l.b16 %v329
      %v1076 = vunpack.c.l.b16 %v330
      %v1077 = vunpack.c.l.b16 %v331
      %v1078 = vunpack.c.l.b16 %v332
      %v1079 = vunpack.c.l.b16 %v333
      %v1080 = vunpack.c.l.b16 %v334
      %v1081 = vunpack.c.l.b16 %v335
      %v1082 = vunpack.c.l.b16 %v336
      %v1083 = vunpack.c.l.b16 %v337
      %v1084 = vunpack.c.l.b16 %v338
      %v1085 = vpack.c.b16 %v1054, %v1053
      %v1086 = vpack.c.b16 %v1056, %v1055
      %v1087 = vpack.c.b16 %v1058, %v1057
      %v1088 = vpack.c.b16 %v1060, %v1059
      %v1089 = vpack.c.b16 %v1062, %v1061
      %v1090 = vpack.c.b16 %v1064, %v1063
      %v1091 = vpack.c.b16 %v1066, %v1065
      %v1092 = vpack.c.b16 %v1068, %v1067
      %v1093 = vpack.c.b16 %v1070, %v1069
      %v1094 = vpack.c.b16 %v1072, %v1071
      %v1095 = vpack.c.b16 %v1074, %v1073
      %v1096 = vpack.c.b16 %v1076, %v1075
      %v1097 = vpack.c.b16 %v1078, %v1077
      %v1098 = vpack.c.b16 %v1080, %v1079
      %v1099 = vpack.c.b16 %v1082, %v1081
      %v1100 = vpack.c.b16 %v1084, %v1083
      %v1105 = vunpack.c.l.b16 %v339
      %v1106 = vunpack.c.l.b16 %v340
      %v1107 = vunpack.c.l.b16 %v341
      %v1108 = vunpack.c.l.b16 %v342
      %v1109 = vpack.c.b16 %v1106, %v1105
      %v1110 = vpack.c.b16 %v1108, %v1107
      %v1114 = vsel %vm811, %v1085, 0
      %v1117 = vsel %vm811, %v1086, 0
      %v1120 = vsel %vm811, %v1087, 0
      %v1123 = vsel %vm811, %v1088, 0
      %v1126 = vsel %vm811, %v1089, 0
      %v1129 = vsel %vm811, %v1090, 0
      %v1132 = vsel %vm811, %v1091, 0
      %v1135 = vsel %vm811, %v1092, 0
      %v1138 = vsel %vm811, %v1093, 0
      %v1141 = vsel %vm811, %v1094, 0
      %v1144 = vsel %vm811, %v1095, 0
      %v1147 = vsel %vm811, %v1096, 0
      %v1150 = vsel %vm811, %v1097, 0
      %v1153 = vsel %vm811, %v1098, 0
      %v1156 = vsel %vm811, %v1099, 0
      %v1159 = vsel %vm811, %v1100, 0
      %1161 = vmatprep.subr.bf16.mxu0 0
      %1162 = vmatpush1.bf16.msra.mxu0 0
      %1163 = vmatprep.subr.bf16.mxu0 0
      %1164 = vmatpush1.bf16.msra.mxu0 0
      %1165 = vmatprep.subr.bf16.mxu0 0
      %1166 = vmatpush1.bf16.msra.mxu0 0
      %1167 = vmatprep.subr.bf16.mxu0 0
      %1168 = vmatpush1.bf16.msra.mxu0 0
      %1169 = vmatprep.subr.bf16.mxu0 0
      %1170 = vmatpush1.bf16.msra.mxu0 0
      %1171 = vmatprep.subr.bf16.mxu0 0
      %1172 = vmatpush1.bf16.msra.mxu0 0
      %1173 = vmatprep.subr.bf16.mxu0 0
      %1174 = vmatpush1.bf16.msra.mxu0 %v1110
      %1175 = vmatprep.subr.bf16.mxu0 0
      %1176 = vmatpush1.bf16.msra.mxu0 %v1109
      %1177 = vmatprep.subr.bf16.mxu0 0
      %1178 = vmatpush2.bf16.msra.mxu0 0
      %1179 = vmatprep.subr.bf16.mxu0 0
      %1180 = vmatpush2.bf16.msra.mxu0 0
      %1181 = vmatprep.subr.bf16.mxu0 0
      %1182 = vmatpush2.bf16.msra.mxu0 0
      %1183 = vmatprep.subr.bf16.mxu0 0
      %1184 = vmatpush2.bf16.msra.mxu0 0
      %1185 = vmatprep.subr.bf16.mxu0 0
      %1186 = vmatpush2.bf16.msra.mxu0 0
      %1187 = vmatprep.subr.bf16.mxu0 0
      %1188 = vmatpush2.bf16.msra.mxu0 0
      %1189 = vmatprep.subr.bf16.mxu0 0
      %1190 = vmatpush2.bf16.msra.mxu0 0
      %1191 = vmatprep.subr.bf16.mxu0 0
      %1192 = vmatpush2.bf16.msra.mxu0 0
      %1193 = vmatprep.mubr.bf16.mxu0 0
      %1194 = vmatmul.mubr.bf16.gmra.mxu0 %v1114
      %v1195 = vpop.f32.mrf.mxu0
      %v1196 = vadd.f32 %v895, %v1195
      %v1197 = vpop.f32.mrf.mxu0
      %v1198 = vpop.f32.mrf.mxu0
      %v1199 = vadd.f32 %v898, %v1198
      %v1200 = vpop.f32.mrf.mxu0
      %1201 = vmatprep.mubr.bf16.mxu0 0
      %1202 = vmatmul.mubr.bf16.gmra.mxu0 %v1117
      %v1203 = vpop.f32.mrf.mxu0
      %v1204 = vadd.f32 %v903, %v1203
      %v1205 = vpop.f32.mrf.mxu0
      %v1206 = vpop.f32.mrf.mxu0
      %v1207 = vadd.f32 %v906, %v1206
      %v1208 = vpop.f32.mrf.mxu0
      %1209 = vmatprep.mubr.bf16.mxu0 0
      %1210 = vmatmul.mubr.bf16.gmra.mxu0 %v1120
      %v1211 = vpop.f32.mrf.mxu0
      %v1212 = vadd.f32 %v911, %v1211
      %v1213 = vpop.f32.mrf.mxu0
      %v1214 = vpop.f32.mrf.mxu0
      %v1215 = vadd.f32 %v914, %v1214
      %v1216 = vpop.f32.mrf.mxu0
      %1217 = vmatprep.mubr.bf16.mxu0 0
      %1218 = vmatmul.mubr.bf16.gmra.mxu0 %v1123
      %v1219 = vpop.f32.mrf.mxu0
      %v1220 = vadd.f32 %v919, %v1219
      %v1221 = vpop.f32.mrf.mxu0
      %v1222 = vpop.f32.mrf.mxu0
      %v1223 = vadd.f32 %v922, %v1222
      %v1224 = vpop.f32.mrf.mxu0
      %1225 = vmatprep.mubr.bf16.mxu0 0
      %1226 = vmatmul.mubr.bf16.gmra.mxu0 %v1126
      %v1227 = vpop.f32.mrf.mxu0
      %v1228 = vadd.f32 %v927, %v1227
      %v1229 = vpop.f32.mrf.mxu0
      %v1230 = vpop.f32.mrf.mxu0
      %v1231 = vadd.f32 %v930, %v1230
      %v1232 = vpop.f32.mrf.mxu0
      %1233 = vmatprep.mubr.bf16.mxu0 0
      %1234 = vmatmul.mubr.bf16.gmra.mxu0 %v1129
      %v1235 = vpop.f32.mrf.mxu0
      %v1236 = vadd.f32 %v935, %v1235
      %v1237 = vpop.f32.mrf.mxu0
      %v1238 = vpop.f32.mrf.mxu0
      %v1239 = vadd.f32 %v938, %v1238
      %v1240 = vpop.f32.mrf.mxu0
      %1241 = vmatprep.mubr.bf16.mxu0 0
      %1242 = vmatmul.mubr.bf16.gmra.mxu0 %v1132
      %v1243 = vpop.f32.mrf.mxu0
      %v1244 = vadd.f32 %v943, %v1243
      %v1245 = vpop.f32.mrf.mxu0
      %v1246 = vpop.f32.mrf.mxu0
      %v1247 = vadd.f32 %v946, %v1246
      %v1248 = vpop.f32.mrf.mxu0
      %1249 = vmatprep.mubr.bf16.mxu0 0
      %1250 = vmatmul.mubr.bf16.gmra.mxu0 %v1135
      %v1251 = vpop.f32.mrf.mxu0
      %v1252 = vadd.f32 %v951, %v1251
      %v1253 = vpop.f32.mrf.mxu0
      %v1254 = vpop.f32.mrf.mxu0
      %v1255 = vadd.f32 %v954, %v1254
      %v1256 = vpop.f32.mrf.mxu0
      %1257 = vmatprep.mubr.bf16.mxu0 0
      %1258 = vmatmul.mubr.bf16.gmra.mxu0 %v1138
      %v1259 = vpop.f32.mrf.mxu0
      %v1260 = vadd.f32 %v959, %v1259
      %v1261 = vpop.f32.mrf.mxu0
      %v1262 = vpop.f32.mrf.mxu0
      %v1263 = vadd.f32 %v962, %v1262
      %v1264 = vpop.f32.mrf.mxu0
      %1265 = vmatprep.mubr.bf16.mxu0 0
      %1266 = vmatmul.mubr.bf16.gmra.mxu0 %v1141
      %v1267 = vpop.f32.mrf.mxu0
      %v1268 = vadd.f32 %v967, %v1267
      %v1269 = vpop.f32.mrf.mxu0
      %v1270 = vpop.f32.mrf.mxu0
      %v1271 = vadd.f32 %v970, %v1270
      %v1272 = vpop.f32.mrf.mxu0
      %1273 = vmatprep.mubr.bf16.mxu0 0
      %1274 = vmatmul.mubr.bf16.gmra.mxu0 %v1144
      %v1275 = vpop.f32.mrf.mxu0
      %v1276 = vadd.f32 %v975, %v1275
      %v1277 = vpop.f32.mrf.mxu0
      %v1278 = vpop.f32.mrf.mxu0
      %v1279 = vadd.f32 %v978, %v1278
      %v1280 = vpop.f32.mrf.mxu0
      %1281 = vmatprep.mubr.bf16.mxu0 0
      %1282 = vmatmul.mubr.bf16.gmra.mxu0 %v1147
      %v1283 = vpop.f32.mrf.mxu0
      %v1284 = vadd.f32 %v983, %v1283
      %v1285 = vpop.f32.mrf.mxu0
      %v1286 = vpop.f32.mrf.mxu0
      %v1287 = vadd.f32 %v986, %v1286
      %v1288 = vpop.f32.mrf.mxu0
      %1289 = vmatprep.mubr.bf16.mxu0 0
      %1290 = vmatmul.mubr.bf16.gmra.mxu0 %v1150
      %v1291 = vpop.f32.mrf.mxu0
      %v1292 = vadd.f32 %v991, %v1291
      %v1293 = vpop.f32.mrf.mxu0
      %v1294 = vpop.f32.mrf.mxu0
      %v1295 = vadd.f32 %v994, %v1294
      %v1296 = vpop.f32.mrf.mxu0
      %1297 = vmatprep.mubr.bf16.mxu0 0
      %1298 = vmatmul.mubr.bf16.gmra.mxu0 %v1153
      %v1299 = vpop.f32.mrf.mxu0
      %v1300 = vadd.f32 %v999, %v1299
      %v1301 = vpop.f32.mrf.mxu0
      %v1302 = vpop.f32.mrf.mxu0
      %v1303 = vadd.f32 %v1002, %v1302
      %v1304 = vpop.f32.mrf.mxu0
      %1305 = vmatprep.mubr.bf16.mxu0 0
      %1306 = vmatmul.mubr.bf16.gmra.mxu0 %v1156
      %v1307 = vpop.f32.mrf.mxu0
      %v1308 = vadd.f32 %v1007, %v1307
      %v1309 = vpop.f32.mrf.mxu0
      %v1310 = vpop.f32.mrf.mxu0
      %v1311 = vadd.f32 %v1010, %v1310
      %v1312 = vpop.f32.mrf.mxu0
      %1313 = vmatprep.mubr.bf16.mxu0 0
      %1314 = vmatmul.mubr.bf16.gmra.mxu0 %v1159
      %v1315 = vpop.f32.mrf.mxu0
      %v1316 = vadd.f32 %v1015, %v1315
      %v1317 = vpop.f32.mrf.mxu0
      %v1318 = vpop.f32.mrf.mxu0
      %v1319 = vadd.f32 %v1018, %v1318
      %v1320 = vpop.f32.mrf.mxu0
      %1321 = vdwg.mxu0
      %v1322 = vld [vmem:[%s294] sm:$0xe]
      %v1323 = vld [vmem:[%s294 + $0xc] sm:$0xe]
      %v1324 = vld [vmem:[%s294 + $0x18] sm:$0xe]
      %v1325 = vld [vmem:[%s294 + $0x24] sm:$0xe]
      %v1326 = vld [vmem:[%s294 + $0x30] sm:$0xe]
      %v1327 = vld [vmem:[%s294 + $0x3c] sm:$0xe]
      %v1328 = vld [vmem:[%s294 + $0x48] sm:$0xe]
      %v1329 = vld [vmem:[%s294 + $0x54] sm:$0xe]
      %v1330 = vld [vmem:[%s294 + $0x60] sm:$0xe]
      %v1331 = vld [vmem:[%s294 + $0x6c] sm:$0xe]
      %v1332 = vld [vmem:[%s294 + $0x78] sm:$0xe]
      %v1333 = vld [vmem:[%s294 + $0x84] sm:$0xe]
      %v1334 = vld [vmem:[%s294 + $0x90] sm:$0xe]
      %v1335 = vld [vmem:[%s294 + $0x9c] sm:$0xe]
      %v1336 = vld [vmem:[%s294 + $0xa8] sm:$0xe]
      %v1337 = vld [vmem:[%s294 + $0xb4] sm:$0xe]
      %vm1370 = vcmask 1042432
      %vm1371 = vcmask 1046532
      %vm1372 = vmor %vm1370, %vm1371
      %v1373 = vrot.slane %v1322, 5
      %v1374 = vrot.slane %v1373, 4
      %v1375 = vrot.slane %v308, 5
      %v1376 = vsel %vm1372, %v1374, %v1375
      %v1377 = vrot.slane %v1375, 4
      %v1378 = vrot.slane %v343, 5
      %v1379 = vsel %vm1372, %v1377, %v1378
      %v1380 = vrot.slane %v1323, 5
      %v1381 = vrot.slane %v1380, 4
      %v1382 = vrot.slane %v310, 5
      %v1383 = vsel %vm1372, %v1381, %v1382
      %v1384 = vrot.slane %v1382, 4
      %v1385 = vrot.slane %v344, 5
      %v1386 = vsel %vm1372, %v1384, %v1385
      %v1387 = vrot.slane %v1324, 5
      %v1388 = vrot.slane %v1387, 4
      %v1389 = vrot.slane %v312, 5
      %v1390 = vsel %vm1372, %v1388, %v1389
      %v1391 = vrot.slane %v1389, 4
      %v1392 = vrot.slane %v345, 5
      %v1393 = vsel %vm1372, %v1391, %v1392
      %v1394 = vrot.slane %v1325, 5
      %v1395 = vrot.slane %v1394, 4
      %v1396 = vrot.slane %v314, 5
      %v1397 = vsel %vm1372, %v1395, %v1396
      %v1398 = vrot.slane %v1396, 4
      %v1399 = vrot.slane %v346, 5
      %v1400 = vsel %vm1372, %v1398, %v1399
      %v1401 = vrot.slane %v1326, 5
      %v1402 = vrot.slane %v1401, 4
      %v1403 = vrot.slane %v316, 5
      %v1404 = vsel %vm1372, %v1402, %v1403
      %v1405 = vrot.slane %v1403, 4
      %v1406 = vrot.slane %v347, 5
      %v1407 = vsel %vm1372, %v1405, %v1406
      %v1408 = vrot.slane %v1327, 5
      %v1409 = vrot.slane %v1408, 4
      %v1410 = vrot.slane %v318, 5
      %v1411 = vsel %vm1372, %v1409, %v1410
      %v1412 = vrot.slane %v1410, 4
      %v1413 = vrot.slane %v348, 5
      %v1414 = vsel %vm1372, %v1412, %v1413
      %v1415 = vrot.slane %v1328, 5
      %v1416 = vrot.slane %v1415, 4
      %v1417 = vrot.slane %v320, 5
      %v1418 = vsel %vm1372, %v1416, %v1417
      %v1419 = vrot.slane %v1417, 4
      %v1420 = vrot.slane %v349, 5
      %v1421 = vsel %vm1372, %v1419, %v1420
      %v1422 = vrot.slane %v1329, 5
      %v1423 = vrot.slane %v1422, 4
      %v1424 = vrot.slane %v322, 5
      %v1425 = vsel %vm1372, %v1423, %v1424
      %v1426 = vrot.slane %v1424, 4
      %v1427 = vrot.slane %v350, 5
      %v1428 = vsel %vm1372, %v1426, %v1427
      %v1429 = vrot.slane %v1330, 5
      %v1430 = vrot.slane %v1429, 4
      %v1431 = vrot.slane %v324, 5
      %v1432 = vsel %vm1372, %v1430, %v1431
      %v1433 = vrot.slane %v1431, 4
      %v1434 = vrot.slane %v351, 5
      %v1435 = vsel %vm1372, %v1433, %v1434
      %v1436 = vrot.slane %v1331, 5
      %v1437 = vrot.slane %v1436, 4
      %v1438 = vrot.slane %v326, 5
      %v1439 = vsel %vm1372, %v1437, %v1438
      %v1440 = vrot.slane %v1438, 4
      %v1441 = vrot.slane %v352, 5
      %v1442 = vsel %vm1372, %v1440, %v1441
      %v1443 = vrot.slane %v1332, 5
      %v1444 = vrot.slane %v1443, 4
      %v1445 = vrot.slane %v328, 5
      %v1446 = vsel %vm1372, %v1444, %v1445
      %v1447 = vrot.slane %v1445, 4
      %v1448 = vrot.slane %v353, 5
      %v1449 = vsel %vm1372, %v1447, %v1448
      %v1450 = vrot.slane %v1333, 5
      %v1451 = vrot.slane %v1450, 4
      %v1452 = vrot.slane %v330, 5
      %v1453 = vsel %vm1372, %v1451, %v1452
      %v1454 = vrot.slane %v1452, 4
      %v1455 = vrot.slane %v354, 5
      %v1456 = vsel %vm1372, %v1454, %v1455
      %v1457 = vrot.slane %v1334, 5
      %v1458 = vrot.slane %v1457, 4
      %v1459 = vrot.slane %v332, 5
      %v1460 = vsel %vm1372, %v1458, %v1459
      %v1461 = vrot.slane %v1459, 4
      %v1462 = vrot.slane %v355, 5
      %v1463 = vsel %vm1372, %v1461, %v1462
      %v1464 = vrot.slane %v1335, 5
      %v1465 = vrot.slane %v1464, 4
      %v1466 = vrot.slane %v334, 5
      %v1467 = vsel %vm1372, %v1465, %v1466
      %v1468 = vrot.slane %v1466, 4
      %v1469 = vrot.slane %v356, 5
      %v1470 = vsel %vm1372, %v1468, %v1469
      %v1471 = vrot.slane %v1336, 5
      %v1472 = vrot.slane %v1471, 4
      %v1473 = vrot.slane %v336, 5
      %v1474 = vsel %vm1372, %v1472, %v1473
      %v1475 = vrot.slane %v1473, 4
      %v1476 = vrot.slane %v357, 5
      %v1477 = vsel %vm1372, %v1475, %v1476
      %v1478 = vrot.slane %v1337, 5
      %v1479 = vrot.slane %v1478, 4
      %v1480 = vrot.slane %v338, 5
      %v1481 = vsel %vm1372, %v1479, %v1480
      %v1482 = vrot.slane %v1480, 4
      %v1483 = vrot.slane %v358, 5
      %v1484 = vsel %vm1372, %v1482, %v1483
      %s1485 = scalar_lea.vmem %s2, 32
      %v1486 = vld [vmem:[%s1485] sm:$0xf]
      %v1487 = vld [vmem:[%s1485 + $0x4] sm:$0xf]
      %v1488 = vld [vmem:[%s1485 + $0x8] sm:$0xf]
      %v1489 = vld [vmem:[%s1485 + $0xc] sm:$0xf]
      %v1490 = vunpack.c.l.b16 %v1376
      %v1491 = vunpack.c.l.b16 %v1379
      %v1492 = vunpack.c.l.b16 %v1383
      %v1493 = vunpack.c.l.b16 %v1386
      %v1494 = vunpack.c.l.b16 %v1390
      %v1495 = vunpack.c.l.b16 %v1393
      %v1496 = vunpack.c.l.b16 %v1397
      %v1497 = vunpack.c.l.b16 %v1400
      %v1498 = vunpack.c.l.b16 %v1404
      %v1499 = vunpack.c.l.b16 %v1407
      %v1500 = vunpack.c.l.b16 %v1411
      %v1501 = vunpack.c.l.b16 %v1414
      %v1502 = vunpack.c.l.b16 %v1418
      %v1503 = vunpack.c.l.b16 %v1421
      %v1504 = vunpack.c.l.b16 %v1425
      %v1505 = vunpack.c.l.b16 %v1428
      %v1506 = vunpack.c.l.b16 %v1432
      %v1507 = vunpack.c.l.b16 %v1435
      %v1508 = vunpack.c.l.b16 %v1439
      %v1509 = vunpack.c.l.b16 %v1442
      %v1510 = vunpack.c.l.b16 %v1446
      %v1511 = vunpack.c.l.b16 %v1449
      %v1512 = vunpack.c.l.b16 %v1453
      %v1513 = vunpack.c.l.b16 %v1456
      %v1514 = vunpack.c.l.b16 %v1460
      %v1515 = vunpack.c.l.b16 %v1463
      %v1516 = vunpack.c.l.b16 %v1467
      %v1517 = vunpack.c.l.b16 %v1470
      %v1518 = vunpack.c.l.b16 %v1474
      %v1519 = vunpack.c.l.b16 %v1477
      %v1520 = vunpack.c.l.b16 %v1481
      %v1521 = vunpack.c.l.b16 %v1484
      %v1522 = vpack.c.b16 %v1491, %v1490
      %v1523 = vpack.c.b16 %v1493, %v1492
      %v1524 = vpack.c.b16 %v1495, %v1494
      %v1525 = vpack.c.b16 %v1497, %v1496
      %v1526 = vpack.c.b16 %v1499, %v1498
      %v1527 = vpack.c.b16 %v1501, %v1500
      %v1528 = vpack.c.b16 %v1503, %v1502
      %v1529 = vpack.c.b16 %v1505, %v1504
      %v1530 = vpack.c.b16 %v1507, %v1506
      %v1531 = vpack.c.b16 %v1509, %v1508
      %v1532 = vpack.c.b16 %v1511, %v1510
      %v1533 = vpack.c.b16 %v1513, %v1512
      %v1534 = vpack.c.b16 %v1515, %v1514
      %v1535 = vpack.c.b16 %v1517, %v1516
      %v1536 = vpack.c.b16 %v1519, %v1518
      %v1537 = vpack.c.b16 %v1521, %v1520
      %v1542 = vunpack.c.l.b16 %v1486
      %v1543 = vunpack.c.l.b16 %v1487
      %v1544 = vunpack.c.l.b16 %v1488
      %v1545 = vunpack.c.l.b16 %v1489
      %v1546 = vpack.c.b16 %v1543, %v1542
      %v1547 = vpack.c.b16 %v1545, %v1544
      %v1551 = vsel %vm811, %v1522, 0
      %v1554 = vsel %vm811, %v1523, 0
      %v1557 = vsel %vm811, %v1524, 0
      %v1560 = vsel %vm811, %v1525, 0
      %v1563 = vsel %vm811, %v1526, 0
      %v1566 = vsel %vm811, %v1527, 0
      %v1569 = vsel %vm811, %v1528, 0
      %v1572 = vsel %vm811, %v1529, 0
      %v1575 = vsel %vm811, %v1530, 0
      %v1578 = vsel %vm811, %v1531, 0
      %v1581 = vsel %vm811, %v1532, 0
      %v1584 = vsel %vm811, %v1533, 0
      %v1587 = vsel %vm811, %v1534, 0
      %v1590 = vsel %vm811, %v1535, 0
      %v1593 = vsel %vm811, %v1536, 0
      %v1596 = vsel %vm811, %v1537, 0
      %1598 = vmatprep.subr.bf16.mxu0 0
      %1599 = vmatpush1.bf16.msra.mxu0 0
      %1600 = vmatprep.subr.bf16.mxu0 0
      %1601 = vmatpush1.bf16.msra.mxu0 0
      %1602 = vmatprep.subr.bf16.mxu0 0
      %1603 = vmatpush1.bf16.msra.mxu0 0
      %1604 = vmatprep.subr.bf16.mxu0 0
      %1605 = vmatpush1.bf16.msra.mxu0 0
      %1606 = vmatprep.subr.bf16.mxu0 0
      %1607 = vmatpush1.bf16.msra.mxu0 0
      %1608 = vmatprep.subr.bf16.mxu0 0
      %1609 = vmatpush1.bf16.msra.mxu0 0
      %1610 = vmatprep.subr.bf16.mxu0 0
      %1611 = vmatpush1.bf16.msra.mxu0 %v1547
      %1612 = vmatprep.subr.bf16.mxu0 0
      %1613 = vmatpush1.bf16.msra.mxu0 %v1546
      %1614 = vmatprep.subr.bf16.mxu0 0
      %1615 = vmatpush2.bf16.msra.mxu0 0
      %1616 = vmatprep.subr.bf16.mxu0 0
      %1617 = vmatpush2.bf16.msra.mxu0 0
      %1618 = vmatprep.subr.bf16.mxu0 0
      %1619 = vmatpush2.bf16.msra.mxu0 0
      %1620 = vmatprep.subr.bf16.mxu0 0
      %1621 = vmatpush2.bf16.msra.mxu0 0
      %1622 = vmatprep.subr.bf16.mxu0 0
      %1623 = vmatpush2.bf16.msra.mxu0 0
      %1624 = vmatprep.subr.bf16.mxu0 0
      %1625 = vmatpush2.bf16.msra.mxu0 0
      %1626 = vmatprep.subr.bf16.mxu0 0
      %1627 = vmatpush2.bf16.msra.mxu0 0
      %1628 = vmatprep.subr.bf16.mxu0 0
      %1629 = vmatpush2.bf16.msra.mxu0 0
      %1630 = vmatprep.mubr.bf16.mxu0 0
      %1631 = vmatmul.mubr.bf16.gmra.mxu0 %v1551
      %v1632 = vpop.f32.mrf.mxu0
      %v1633 = vadd.f32 0.0, %v1632
      %v1634 = vpop.f32.mrf.mxu0
      %v1635 = vpop.f32.mrf.mxu0
      %v1636 = vadd.f32 0.0, %v1635
      %v1637 = vpop.f32.mrf.mxu0
      %1638 = vmatprep.mubr.bf16.mxu0 0
      %1639 = vmatmul.mubr.bf16.gmra.mxu0 %v1554
      %v1640 = vpop.f32.mrf.mxu0
      %v1641 = vadd.f32 0.0, %v1640
      %v1642 = vpop.f32.mrf.mxu0
      %v1643 = vpop.f32.mrf.mxu0
      %v1644 = vadd.f32 0.0, %v1643
      %v1645 = vpop.f32.mrf.mxu0
      %1646 = vmatprep.mubr.bf16.mxu0 0
      %1647 = vmatmul.mubr.bf16.gmra.mxu0 %v1557
      %v1648 = vpop.f32.mrf.mxu0
      %v1649 = vadd.f32 0.0, %v1648
      %v1650 = vpop.f32.mrf.mxu0
      %v1651 = vpop.f32.mrf.mxu0
      %v1652 = vadd.f32 0.0, %v1651
      %v1653 = vpop.f32.mrf.mxu0
      %1654 = vmatprep.mubr.bf16.mxu0 0
      %1655 = vmatmul.mubr.bf16.gmra.mxu0 %v1560
      %v1656 = vpop.f32.mrf.mxu0
      %v1657 = vadd.f32 0.0, %v1656
      %v1658 = vpop.f32.mrf.mxu0
      %v1659 = vpop.f32.mrf.mxu0
      %v1660 = vadd.f32 0.0, %v1659
      %v1661 = vpop.f32.mrf.mxu0
      %1662 = vmatprep.mubr.bf16.mxu0 0
      %1663 = vmatmul.mubr.bf16.gmra.mxu0 %v1563
      %v1664 = vpop.f32.mrf.mxu0
      %v1665 = vadd.f32 0.0, %v1664
      %v1666 = vpop.f32.mrf.mxu0
      %v1667 = vpop.f32.mrf.mxu0
      %v1668 = vadd.f32 0.0, %v1667
      %v1669 = vpop.f32.mrf.mxu0
      %1670 = vmatprep.mubr.bf16.mxu0 0
      %1671 = vmatmul.mubr.bf16.gmra.mxu0 %v1566
      %v1672 = vpop.f32.mrf.mxu0
      %v1673 = vadd.f32 0.0, %v1672
      %v1674 = vpop.f32.mrf.mxu0
      %v1675 = vpop.f32.mrf.mxu0
      %v1676 = vadd.f32 0.0, %v1675
      %v1677 = vpop.f32.mrf.mxu0
      %1678 = vmatprep.mubr.bf16.mxu0 0
      %1679 = vmatmul.mubr.bf16.gmra.mxu0 %v1569
      %v1680 = vpop.f32.mrf.mxu0
      %v1681 = vadd.f32 0.0, %v1680
      %v1682 = vpop.f32.mrf.mxu0
      %v1683 = vpop.f32.mrf.mxu0
      %v1684 = vadd.f32 0.0, %v1683
      %v1685 = vpop.f32.mrf.mxu0
      %1686 = vmatprep.mubr.bf16.mxu0 0
      %1687 = vmatmul.mubr.bf16.gmra.mxu0 %v1572
      %v1688 = vpop.f32.mrf.mxu0
      %v1689 = vadd.f32 0.0, %v1688
      %v1690 = vpop.f32.mrf.mxu0
      %v1691 = vpop.f32.mrf.mxu0
      %v1692 = vadd.f32 0.0, %v1691
      %v1693 = vpop.f32.mrf.mxu0
      %1694 = vmatprep.mubr.bf16.mxu0 0
      %1695 = vmatmul.mubr.bf16.gmra.mxu0 %v1575
      %v1696 = vpop.f32.mrf.mxu0
      %v1697 = vadd.f32 0.0, %v1696
      %v1698 = vpop.f32.mrf.mxu0
      %v1699 = vpop.f32.mrf.mxu0
      %v1700 = vadd.f32 0.0, %v1699
      %v1701 = vpop.f32.mrf.mxu0
      %1702 = vmatprep.mubr.bf16.mxu0 0
      %1703 = vmatmul.mubr.bf16.gmra.mxu0 %v1578
      %v1704 = vpop.f32.mrf.mxu0
      %v1705 = vadd.f32 0.0, %v1704
      %v1706 = vpop.f32.mrf.mxu0
      %v1707 = vpop.f32.mrf.mxu0
      %v1708 = vadd.f32 0.0, %v1707
      %v1709 = vpop.f32.mrf.mxu0
      %1710 = vmatprep.mubr.bf16.mxu0 0
      %1711 = vmatmul.mubr.bf16.gmra.mxu0 %v1581
      %v1712 = vpop.f32.mrf.mxu0
      %v1713 = vadd.f32 0.0, %v1712
      %v1714 = vpop.f32.mrf.mxu0
      %v1715 = vpop.f32.mrf.mxu0
      %v1716 = vadd.f32 0.0, %v1715
      %v1717 = vpop.f32.mrf.mxu0
      %1718 = vmatprep.mubr.bf16.mxu0 0
      %1719 = vmatmul.mubr.bf16.gmra.mxu0 %v1584
      %v1720 = vpop.f32.mrf.mxu0
      %v1721 = vadd.f32 0.0, %v1720
      %v1722 = vpop.f32.mrf.mxu0
      %v1723 = vpop.f32.mrf.mxu0
      %v1724 = vadd.f32 0.0, %v1723
      %v1725 = vpop.f32.mrf.mxu0
      %1726 = vmatprep.mubr.bf16.mxu0 0
      %1727 = vmatmul.mubr.bf16.gmra.mxu0 %v1587
      %v1728 = vpop.f32.mrf.mxu0
      %v1729 = vadd.f32 0.0, %v1728
      %v1730 = vpop.f32.mrf.mxu0
      %v1731 = vpop.f32.mrf.mxu0
      %v1732 = vadd.f32 0.0, %v1731
      %v1733 = vpop.f32.mrf.mxu0
      %1734 = vmatprep.mubr.bf16.mxu0 0
      %1735 = vmatmul.mubr.bf16.gmra.mxu0 %v1590
      %v1736 = vpop.f32.mrf.mxu0
      %v1737 = vadd.f32 0.0, %v1736
      %v1738 = vpop.f32.mrf.mxu0
      %v1739 = vpop.f32.mrf.mxu0
      %v1740 = vadd.f32 0.0, %v1739
      %v1741 = vpop.f32.mrf.mxu0
      %1742 = vmatprep.mubr.bf16.mxu0 0
      %1743 = vmatmul.mubr.bf16.gmra.mxu0 %v1593
      %v1744 = vpop.f32.mrf.mxu0
      %v1745 = vadd.f32 0.0, %v1744
      %v1746 = vpop.f32.mrf.mxu0
      %v1747 = vpop.f32.mrf.mxu0
      %v1748 = vadd.f32 0.0, %v1747
      %v1749 = vpop.f32.mrf.mxu0
      %1750 = vmatprep.mubr.bf16.mxu0 0
      %1751 = vmatmul.mubr.bf16.gmra.mxu0 %v1596
      %v1752 = vpop.f32.mrf.mxu0
      %v1753 = vadd.f32 0.0, %v1752
      %v1754 = vpop.f32.mrf.mxu0
      %v1755 = vpop.f32.mrf.mxu0
      %v1756 = vadd.f32 0.0, %v1755
      %v1757 = vpop.f32.mrf.mxu0
      %1758 = vdwg.mxu0
      %v1759 = vadd.f32 %v1196, %v1633
      %v1760 = vadd.f32 %v1199, %v1636
      %v1761 = vadd.f32 %v1204, %v1641
      %v1762 = vadd.f32 %v1207, %v1644
      %v1763 = vadd.f32 %v1212, %v1649
      %v1764 = vadd.f32 %v1215, %v1652
      %v1765 = vadd.f32 %v1220, %v1657
      %v1766 = vadd.f32 %v1223, %v1660
      %v1767 = vadd.f32 %v1228, %v1665
      %v1768 = vadd.f32 %v1231, %v1668
      %v1769 = vadd.f32 %v1236, %v1673
      %v1770 = vadd.f32 %v1239, %v1676
      %v1771 = vadd.f32 %v1244, %v1681
      %v1772 = vadd.f32 %v1247, %v1684
      %v1773 = vadd.f32 %v1252, %v1689
      %v1774 = vadd.f32 %v1255, %v1692
      %v1775 = vadd.f32 %v1260, %v1697
      %v1776 = vadd.f32 %v1263, %v1700
      %v1777 = vadd.f32 %v1268, %v1705
      %v1778 = vadd.f32 %v1271, %v1708
      %v1779 = vadd.f32 %v1276, %v1713
      %v1780 = vadd.f32 %v1279, %v1716
      %v1781 = vadd.f32 %v1284, %v1721
      %v1782 = vadd.f32 %v1287, %v1724
      %v1783 = vadd.f32 %v1292, %v1729
      %v1784 = vadd.f32 %v1295, %v1732
      %v1785 = vadd.f32 %v1300, %v1737
      %v1786 = vadd.f32 %v1303, %v1740
      %v1787 = vadd.f32 %v1308, %v1745
      %v1788 = vadd.f32 %v1311, %v1748
      %v1789 = vadd.f32 %v1316, %v1753
      %v1790 = vadd.f32 %v1319, %v1756
      %v1791 = vld [vmem:[%s3] sm:$0x1]
      %v1793 = vlaneseq
      %v1794 = vshrl.u32 %v1793, 7
      %v1795 = vsub.s32 0, %v1794
      %v1796 = vrot.slane %v1791, %v1795
      %v1798 = vadd.f32 %v1759, %v1796
      %v1799 = vadd.f32 %v1760, %v1796
      %v1800 = vadd.f32 %v1761, %v1796
      %v1801 = vadd.f32 %v1762, %v1796
      %v1802 = vadd.f32 %v1763, %v1796
      %v1803 = vadd.f32 %v1764, %v1796
      %v1804 = vadd.f32 %v1765, %v1796
      %v1805 = vadd.f32 %v1766, %v1796
      %v1806 = vadd.f32 %v1767, %v1796
      %v1807 = vadd.f32 %v1768, %v1796
      %v1808 = vadd.f32 %v1769, %v1796
      %v1809 = vadd.f32 %v1770, %v1796
      %v1810 = vadd.f32 %v1771, %v1796
      %v1811 = vadd.f32 %v1772, %v1796
      %v1812 = vadd.f32 %v1773, %v1796
      %v1813 = vadd.f32 %v1774, %v1796
      %v1814 = vadd.f32 %v1775, %v1796
      %v1815 = vadd.f32 %v1776, %v1796
      %v1816 = vadd.f32 %v1777, %v1796
      %v1817 = vadd.f32 %v1778, %v1796
      %v1818 = vadd.f32 %v1779, %v1796
      %v1819 = vadd.f32 %v1780, %v1796
      %v1820 = vadd.f32 %v1781, %v1796
      %v1821 = vadd.f32 %v1782, %v1796
      %v1822 = vadd.f32 %v1783, %v1796
      %v1823 = vadd.f32 %v1784, %v1796
      %v1824 = vadd.f32 %v1785, %v1796
      %v1825 = vadd.f32 %v1786, %v1796
      %v1826 = vadd.f32 %v1787, %v1796
      %v1827 = vadd.f32 %v1788, %v1796
      %v1828 = vadd.f32 %v1789, %v1796
      %v1829 = vadd.f32 %v1790, %v1796
      %vm1830 = vcmp.gt.f32.partialorder %v1798, 0.0
      %vm1831 = vcmp.gt.f32.partialorder %v1799, 0.0
      %vm1832 = vcmp.gt.f32.partialorder %v1800, 0.0
      %vm1833 = vcmp.gt.f32.partialorder %v1801, 0.0
      %vm1834 = vcmp.gt.f32.partialorder %v1802, 0.0
      %vm1835 = vcmp.gt.f32.partialorder %v1803, 0.0
      %vm1836 = vcmp.gt.f32.partialorder %v1804, 0.0
      %vm1837 = vcmp.gt.f32.partialorder %v1805, 0.0
      %vm1838 = vcmp.gt.f32.partialorder %v1806, 0.0
      %vm1839 = vcmp.gt.f32.partialorder %v1807, 0.0
      %vm1840 = vcmp.gt.f32.partialorder %v1808, 0.0
      %vm1841 = vcmp.gt.f32.partialorder %v1809, 0.0
      %vm1842 = vcmp.gt.f32.partialorder %v1810, 0.0
      %vm1843 = vcmp.gt.f32.partialorder %v1811, 0.0
      %vm1844 = vcmp.gt.f32.partialorder %v1812, 0.0
      %vm1845 = vcmp.gt.f32.partialorder %v1813, 0.0
      %vm1846 = vcmp.gt.f32.partialorder %v1814, 0.0
      %vm1847 = vcmp.gt.f32.partialorder %v1815, 0.0
      %vm1848 = vcmp.gt.f32.partialorder %v1816, 0.0
      %vm1849 = vcmp.gt.f32.partialorder %v1817, 0.0
      %vm1850 = vcmp.gt.f32.partialorder %v1818, 0.0
      %vm1851 = vcmp.gt.f32.partialorder %v1819, 0.0
      %vm1852 = vcmp.gt.f32.partialorder %v1820, 0.0
      %vm1853 = vcmp.gt.f32.partialorder %v1821, 0.0
      %vm1854 = vcmp.gt.f32.partialorder %v1822, 0.0
      %vm1855 = vcmp.gt.f32.partialorder %v1823, 0.0
      %vm1856 = vcmp.gt.f32.partialorder %v1824, 0.0
      %vm1857 = vcmp.gt.f32.partialorder %v1825, 0.0
      %vm1858 = vcmp.gt.f32.partialorder %v1826, 0.0
      %vm1859 = vcmp.gt.f32.partialorder %v1827, 0.0
      %vm1860 = vcmp.gt.f32.partialorder %v1828, 0.0
      %vm1861 = vcmp.gt.f32.partialorder %v1829, 0.0
      %v1862 = vmul.f32 %v1798, 0.01
      %v1863 = vmul.f32 %v1799, 0.01
      %v1864 = vmul.f32 %v1800, 0.01
      %v1865 = vmul.f32 %v1801, 0.01
      %v1866 = vmul.f32 %v1802, 0.01
      %v1867 = vmul.f32 %v1803, 0.01
      %v1868 = vmul.f32 %v1804, 0.01
      %v1869 = vmul.f32 %v1805, 0.01
      %v1870 = vmul.f32 %v1806, 0.01
      %v1871 = vmul.f32 %v1807, 0.01
      %v1872 = vmul.f32 %v1808, 0.01
      %v1873 = vmul.f32 %v1809, 0.01
      %v1874 = vmul.f32 %v1810, 0.01
      %v1875 = vmul.f32 %v1811, 0.01
      %v1876 = vmul.f32 %v1812, 0.01
      %v1877 = vmul.f32 %v1813, 0.01
      %v1878 = vmul.f32 %v1814, 0.01
      %v1879 = vmul.f32 %v1815, 0.01
      %v1880 = vmul.f32 %v1816, 0.01
      %v1881 = vmul.f32 %v1817, 0.01
      %v1882 = vmul.f32 %v1818, 0.01
      %v1883 = vmul.f32 %v1819, 0.01
      %v1884 = vmul.f32 %v1820, 0.01
      %v1885 = vmul.f32 %v1821, 0.01
      %v1886 = vmul.f32 %v1822, 0.01
      %v1887 = vmul.f32 %v1823, 0.01
      %v1888 = vmul.f32 %v1824, 0.01
      %v1889 = vmul.f32 %v1825, 0.01
      %v1890 = vmul.f32 %v1826, 0.01
      %v1891 = vmul.f32 %v1827, 0.01
      %v1892 = vmul.f32 %v1828, 0.01
      %v1893 = vmul.f32 %v1829, 0.01
      %v1894 = vsel %vm1830, %v1798, %v1862
      %v1895 = vsel %vm1831, %v1799, %v1863
      %v1896 = vsel %vm1832, %v1800, %v1864
      %v1897 = vsel %vm1833, %v1801, %v1865
      %v1898 = vsel %vm1834, %v1802, %v1866
      %v1899 = vsel %vm1835, %v1803, %v1867
      %v1900 = vsel %vm1836, %v1804, %v1868
      %v1901 = vsel %vm1837, %v1805, %v1869
      %v1902 = vsel %vm1838, %v1806, %v1870
      %v1903 = vsel %vm1839, %v1807, %v1871
      %v1904 = vsel %vm1840, %v1808, %v1872
      %v1905 = vsel %vm1841, %v1809, %v1873
      %v1906 = vsel %vm1842, %v1810, %v1874
      %v1907 = vsel %vm1843, %v1811, %v1875
      %v1908 = vsel %vm1844, %v1812, %v1876
      %v1909 = vsel %vm1845, %v1813, %v1877
      %v1910 = vsel %vm1846, %v1814, %v1878
      %v1911 = vsel %vm1847, %v1815, %v1879
      %v1912 = vsel %vm1848, %v1816, %v1880
      %v1913 = vsel %vm1849, %v1817, %v1881
      %v1914 = vsel %vm1850, %v1818, %v1882
      %v1915 = vsel %vm1851, %v1819, %v1883
      %v1916 = vsel %vm1852, %v1820, %v1884
      %v1917 = vsel %vm1853, %v1821, %v1885
      %v1918 = vsel %vm1854, %v1822, %v1886
      %v1919 = vsel %vm1855, %v1823, %v1887
      %v1920 = vsel %vm1856, %v1824, %v1888
      %v1921 = vsel %vm1857, %v1825, %v1889
      %v1922 = vsel %vm1858, %v1826, %v1890
      %v1923 = vsel %vm1859, %v1827, %v1891
      %v1924 = vsel %vm1860, %v1828, %v1892
      %v1925 = vsel %vm1861, %v1829, %v1893
      %v1926 = vpack.c.bf16 %v1895, %v1894
      %v1927 = vpack.c.bf16 %v1897, %v1896
      %v1928 = vpack.c.bf16 %v1899, %v1898
      %v1929 = vpack.c.bf16 %v1901, %v1900
      %v1930 = vpack.c.bf16 %v1903, %v1902
      %v1931 = vpack.c.bf16 %v1905, %v1904
      %v1932 = vpack.c.bf16 %v1907, %v1906
      %v1933 = vpack.c.bf16 %v1909, %v1908
      %v1934 = vpack.c.bf16 %v1911, %v1910
      %v1935 = vpack.c.bf16 %v1913, %v1912
      %v1936 = vpack.c.bf16 %v1915, %v1914
      %v1937 = vpack.c.bf16 %v1917, %v1916
      %v1938 = vpack.c.bf16 %v1919, %v1918
      %v1939 = vpack.c.bf16 %v1921, %v1920
      %v1940 = vpack.c.bf16 %v1923, %v1922
      %v1941 = vpack.c.bf16 %v1925, %v1924
      %v1942 = vld [vmem:[%s4] sm:$0xf]
      %v1943 = vld [vmem:[%s4 + $0x4] sm:$0xf]
      %v1944 = vld [vmem:[%s4 + $0x8] sm:$0xf]
      %v1945 = vld [vmem:[%s4 + $0xc] sm:$0xf]
      %v1946 = vld [vmem:[%s4 + $0x10] sm:$0xf]
      %v1947 = vld [vmem:[%s4 + $0x14] sm:$0xf]
      %v1948 = vld [vmem:[%s4 + $0x18] sm:$0xf]
      %v1949 = vld [vmem:[%s4 + $0x1c] sm:$0xf]
      %v1950 = vld [vmem:[%s4 + $0x20] sm:$0xf]
      %v1951 = vld [vmem:[%s4 + $0x24] sm:$0xf]
      %v1952 = vld [vmem:[%s4 + $0x28] sm:$0xf]
      %v1953 = vld [vmem:[%s4 + $0x2c] sm:$0xf]
      %v1966 = vunpack.c.l.b16 %v1942
      %v1967 = vunpack.c.l.b16 %v1943
      %v1968 = vunpack.c.l.b16 %v1944
      %v1969 = vunpack.c.l.b16 %v1945
      %v1970 = vunpack.c.l.b16 %v1946
      %v1971 = vunpack.c.l.b16 %v1947
      %v1972 = vunpack.c.l.b16 %v1948
      %v1973 = vunpack.c.l.b16 %v1949
      %v1974 = vunpack.c.l.b16 %v1950
      %v1975 = vunpack.c.l.b16 %v1951
      %v1976 = vunpack.c.l.b16 %v1952
      %v1977 = vunpack.c.l.b16 %v1953
      %v1978 = vpack.c.b16 %v1967, %v1966
      %v1979 = vpack.c.b16 %v1969, %v1968
      %v1980 = vpack.c.b16 %v1971, %v1970
      %v1981 = vpack.c.b16 %v1973, %v1972
      %v1982 = vpack.c.b16 %v1975, %v1974
      %v1983 = vpack.c.b16 %v1977, %v1976
      %vm1990 = vcmask 785408
      %v1992 = vsel %vm1990, %v1926, 0
      %v1995 = vsel %vm1990, %v1927, 0
      %v1998 = vsel %vm1990, %v1928, 0
      %v2001 = vsel %vm1990, %v1929, 0
      %v2004 = vsel %vm1990, %v1930, 0
      %v2007 = vsel %vm1990, %v1931, 0
      %v2010 = vsel %vm1990, %v1932, 0
      %v2013 = vsel %vm1990, %v1933, 0
      %v2016 = vsel %vm1990, %v1934, 0
      %v2019 = vsel %vm1990, %v1935, 0
      %v2022 = vsel %vm1990, %v1936, 0
      %v2025 = vsel %vm1990, %v1937, 0
      %v2028 = vsel %vm1990, %v1938, 0
      %v2031 = vsel %vm1990, %v1939, 0
      %v2034 = vsel %vm1990, %v1940, 0
      %v2037 = vsel %vm1990, %v1941, 0
      %2039 = vmatprep.subr.bf16.mxu0 0
      %2040 = vmatpush1.bf16.msra.mxu0 0
      %2041 = vmatprep.subr.bf16.mxu0 0
      %2042 = vmatpush1.bf16.msra.mxu0 0
      %2043 = vmatprep.subr.bf16.mxu0 0
      %2044 = vmatpush1.bf16.msra.mxu0 %v1983
      %2045 = vmatprep.subr.bf16.mxu0 0
      %2046 = vmatpush1.bf16.msra.mxu0 %v1982
      %2047 = vmatprep.subr.bf16.mxu0 0
      %2048 = vmatpush1.bf16.msra.mxu0 %v1981
      %2049 = vmatprep.subr.bf16.mxu0 0
      %2050 = vmatpush1.bf16.msra.mxu0 %v1980
      %2051 = vmatprep.subr.bf16.mxu0 0
      %2052 = vmatpush1.bf16.msra.mxu0 %v1979
      %2053 = vmatprep.subr.bf16.mxu0 0
      %2054 = vmatpush1.bf16.msra.mxu0 %v1978
      %2055 = vmatprep.subr.bf16.mxu0 0
      %2056 = vmatpush2.bf16.msra.mxu0 0
      %2057 = vmatprep.subr.bf16.mxu0 0
      %2058 = vmatpush2.bf16.msra.mxu0 0
      %2059 = vmatprep.subr.bf16.mxu0 0
      %2060 = vmatpush2.bf16.msra.mxu0 0
      %2061 = vmatprep.subr.bf16.mxu0 0
      %2062 = vmatpush2.bf16.msra.mxu0 0
      %2063 = vmatprep.subr.bf16.mxu0 0
      %2064 = vmatpush2.bf16.msra.mxu0 0
      %2065 = vmatprep.subr.bf16.mxu0 0
      %2066 = vmatpush2.bf16.msra.mxu0 0
      %2067 = vmatprep.subr.bf16.mxu0 0
      %2068 = vmatpush2.bf16.msra.mxu0 0
      %2069 = vmatprep.subr.bf16.mxu0 0
      %2070 = vmatpush2.bf16.msra.mxu0 0
      %2071 = vmatprep.mubr.bf16.mxu0 0
      %2072 = vmatmul.mubr.bf16.gmra.mxu0 %v1992
      %v2073 = vpop.f32.mrf.mxu0
      %v2074 = vadd.f32 0.0, %v2073
      %v2075 = vpop.f32.mrf.mxu0
      %v2076 = vpop.f32.mrf.mxu0
      %v2077 = vadd.f32 0.0, %v2076
      %v2078 = vpop.f32.mrf.mxu0
      %2079 = vmatprep.mubr.bf16.mxu0 0
      %2080 = vmatmul.mubr.bf16.gmra.mxu0 %v1995
      %v2081 = vpop.f32.mrf.mxu0
      %v2082 = vadd.f32 0.0, %v2081
      %v2083 = vpop.f32.mrf.mxu0
      %v2084 = vpop.f32.mrf.mxu0
      %v2085 = vadd.f32 0.0, %v2084
      %v2086 = vpop.f32.mrf.mxu0
      %2087 = vmatprep.mubr.bf16.mxu0 0
      %2088 = vmatmul.mubr.bf16.gmra.mxu0 %v1998
      %v2089 = vpop.f32.mrf.mxu0
      %v2090 = vadd.f32 0.0, %v2089
      %v2091 = vpop.f32.mrf.mxu0
      %v2092 = vpop.f32.mrf.mxu0
      %v2093 = vadd.f32 0.0, %v2092
      %v2094 = vpop.f32.mrf.mxu0
      %2095 = vmatprep.mubr.bf16.mxu0 0
      %2096 = vmatmul.mubr.bf16.gmra.mxu0 %v2001
      %v2097 = vpop.f32.mrf.mxu0
      %v2098 = vadd.f32 0.0, %v2097
      %v2099 = vpop.f32.mrf.mxu0
      %v2100 = vpop.f32.mrf.mxu0
      %v2101 = vadd.f32 0.0, %v2100
      %v2102 = vpop.f32.mrf.mxu0
      %2103 = vmatprep.mubr.bf16.mxu0 0
      %2104 = vmatmul.mubr.bf16.gmra.mxu0 %v2004
      %v2105 = vpop.f32.mrf.mxu0
      %v2106 = vadd.f32 0.0, %v2105
      %v2107 = vpop.f32.mrf.mxu0
      %v2108 = vpop.f32.mrf.mxu0
      %v2109 = vadd.f32 0.0, %v2108
      %v2110 = vpop.f32.mrf.mxu0
      %2111 = vmatprep.mubr.bf16.mxu0 0
      %2112 = vmatmul.mubr.bf16.gmra.mxu0 %v2007
      %v2113 = vpop.f32.mrf.mxu0
      %v2114 = vadd.f32 0.0, %v2113
      %v2115 = vpop.f32.mrf.mxu0
      %v2116 = vpop.f32.mrf.mxu0
      %v2117 = vadd.f32 0.0, %v2116
      %v2118 = vpop.f32.mrf.mxu0
      %2119 = vmatprep.mubr.bf16.mxu0 0
      %2120 = vmatmul.mubr.bf16.gmra.mxu0 %v2010
      %v2121 = vpop.f32.mrf.mxu0
      %v2122 = vadd.f32 0.0, %v2121
      %v2123 = vpop.f32.mrf.mxu0
      %v2124 = vpop.f32.mrf.mxu0
      %v2125 = vadd.f32 0.0, %v2124
      %v2126 = vpop.f32.mrf.mxu0
      %2127 = vmatprep.mubr.bf16.mxu0 0
      %2128 = vmatmul.mubr.bf16.gmra.mxu0 %v2013
      %v2129 = vpop.f32.mrf.mxu0
      %v2130 = vadd.f32 0.0, %v2129
      %v2131 = vpop.f32.mrf.mxu0
      %v2132 = vpop.f32.mrf.mxu0
      %v2133 = vadd.f32 0.0, %v2132
      %v2134 = vpop.f32.mrf.mxu0
      %2135 = vmatprep.mubr.bf16.mxu0 0
      %2136 = vmatmul.mubr.bf16.gmra.mxu0 %v2016
      %v2137 = vpop.f32.mrf.mxu0
      %v2138 = vadd.f32 0.0, %v2137
      %v2139 = vpop.f32.mrf.mxu0
      %v2140 = vpop.f32.mrf.mxu0
      %v2141 = vadd.f32 0.0, %v2140
      %v2142 = vpop.f32.mrf.mxu0
      %2143 = vmatprep.mubr.bf16.mxu0 0
      %2144 = vmatmul.mubr.bf16.gmra.mxu0 %v2019
      %v2145 = vpop.f32.mrf.mxu0
      %v2146 = vadd.f32 0.0, %v2145
      %v2147 = vpop.f32.mrf.mxu0
      %v2148 = vpop.f32.mrf.mxu0
      %v2149 = vadd.f32 0.0, %v2148
      %v2150 = vpop.f32.mrf.mxu0
      %2151 = vmatprep.mubr.bf16.mxu0 0
      %2152 = vmatmul.mubr.bf16.gmra.mxu0 %v2022
      %v2153 = vpop.f32.mrf.mxu0
      %v2154 = vadd.f32 0.0, %v2153
      %v2155 = vpop.f32.mrf.mxu0
      %v2156 = vpop.f32.mrf.mxu0
      %v2157 = vadd.f32 0.0, %v2156
      %v2158 = vpop.f32.mrf.mxu0
      %2159 = vmatprep.mubr.bf16.mxu0 0
      %2160 = vmatmul.mubr.bf16.gmra.mxu0 %v2025
      %v2161 = vpop.f32.mrf.mxu0
      %v2162 = vadd.f32 0.0, %v2161
      %v2163 = vpop.f32.mrf.mxu0
      %v2164 = vpop.f32.mrf.mxu0
      %v2165 = vadd.f32 0.0, %v2164
      %v2166 = vpop.f32.mrf.mxu0
      %2167 = vmatprep.mubr.bf16.mxu0 0
      %2168 = vmatmul.mubr.bf16.gmra.mxu0 %v2028
      %v2169 = vpop.f32.mrf.mxu0
      %v2170 = vadd.f32 0.0, %v2169
      %v2171 = vpop.f32.mrf.mxu0
      %v2172 = vpop.f32.mrf.mxu0
      %v2173 = vadd.f32 0.0, %v2172
      %v2174 = vpop.f32.mrf.mxu0
      %2175 = vmatprep.mubr.bf16.mxu0 0
      %2176 = vmatmul.mubr.bf16.gmra.mxu0 %v2031
      %v2177 = vpop.f32.mrf.mxu0
      %v2178 = vadd.f32 0.0, %v2177
      %v2179 = vpop.f32.mrf.mxu0
      %v2180 = vpop.f32.mrf.mxu0
      %v2181 = vadd.f32 0.0, %v2180
      %v2182 = vpop.f32.mrf.mxu0
      %2183 = vmatprep.mubr.bf16.mxu0 0
      %2184 = vmatmul.mubr.bf16.gmra.mxu0 %v2034
      %v2185 = vpop.f32.mrf.mxu0
      %v2186 = vadd.f32 0.0, %v2185
      %v2187 = vpop.f32.mrf.mxu0
      %v2188 = vpop.f32.mrf.mxu0
      %v2189 = vadd.f32 0.0, %v2188
      %v2190 = vpop.f32.mrf.mxu0
      %2191 = vmatprep.mubr.bf16.mxu0 0
      %2192 = vmatmul.mubr.bf16.gmra.mxu0 %v2037
      %v2193 = vpop.f32.mrf.mxu0
      %v2194 = vadd.f32 0.0, %v2193
      %v2195 = vpop.f32.mrf.mxu0
      %v2196 = vpop.f32.mrf.mxu0
      %v2197 = vadd.f32 0.0, %v2196
      %v2198 = vpop.f32.mrf.mxu0
      %2199 = vdwg.mxu0
      %v2200 = vld [vmem:[%s301] sm:$0xff]
      %v2201 = vld [vmem:[%s301 + $0x8] sm:$0xff]
      %v2202 = vld [vmem:[%s301 + $0x10] sm:$0xff]
      %v2203 = vld [vmem:[%s301 + $0x18] sm:$0xff]
      %v2204 = vld [vmem:[%s301 + $0x20] sm:$0xff]
      %v2205 = vld [vmem:[%s301 + $0x28] sm:$0xff]
      %v2206 = vld [vmem:[%s301 + $0x30] sm:$0xff]
      %v2207 = vld [vmem:[%s301 + $0x38] sm:$0xff]
      %v2208 = vld [vmem:[%s301 + $0x40] sm:$0xff]
      %v2209 = vld [vmem:[%s301 + $0x48] sm:$0xff]
      %v2210 = vld [vmem:[%s301 + $0x50] sm:$0xff]
      %v2211 = vld [vmem:[%s301 + $0x58] sm:$0xff]
      %v2212 = vld [vmem:[%s301 + $0x60] sm:$0xff]
      %v2213 = vld [vmem:[%s301 + $0x68] sm:$0xff]
      %v2214 = vld [vmem:[%s301 + $0x70] sm:$0xff]
      %v2215 = vld [vmem:[%s301 + $0x78] sm:$0xff]
      %v2216 = vld [vmem:[%s301 + $0x80] sm:$0xff]
      %v2217 = vld [vmem:[%s301 + $0x88] sm:$0xff]
      %v2218 = vld [vmem:[%s301 + $0x90] sm:$0xff]
      %v2219 = vld [vmem:[%s301 + $0x98] sm:$0xff]
      %v2220 = vld [vmem:[%s301 + $0xa0] sm:$0xff]
      %v2221 = vld [vmem:[%s301 + $0xa8] sm:$0xff]
      %v2222 = vld [vmem:[%s301 + $0xb0] sm:$0xff]
      %v2223 = vld [vmem:[%s301 + $0xb8] sm:$0xff]
      %v2224 = vld [vmem:[%s301 + $0xc0] sm:$0xff]
      %v2225 = vld [vmem:[%s301 + $0xc8] sm:$0xff]
      %v2226 = vld [vmem:[%s301 + $0xd0] sm:$0xff]
      %v2227 = vld [vmem:[%s301 + $0xd8] sm:$0xff]
      %v2228 = vld [vmem:[%s301 + $0xe0] sm:$0xff]
      %v2229 = vld [vmem:[%s301 + $0xe8] sm:$0xff]
      %v2230 = vld [vmem:[%s301 + $0xf0] sm:$0xff]
      %v2231 = vld [vmem:[%s301 + $0xf8] sm:$0xff]
      %v2232 = vadd.f32 %v2074, %v2200
      %v2233 = vadd.f32 %v2077, %v2201
      %v2234 = vadd.f32 %v2082, %v2202
      %v2235 = vadd.f32 %v2085, %v2203
      %v2236 = vadd.f32 %v2090, %v2204
      %v2237 = vadd.f32 %v2093, %v2205
      %v2238 = vadd.f32 %v2098, %v2206
      %v2239 = vadd.f32 %v2101, %v2207
      %v2240 = vadd.f32 %v2106, %v2208
      %v2241 = vadd.f32 %v2109, %v2209
      %v2242 = vadd.f32 %v2114, %v2210
      %v2243 = vadd.f32 %v2117, %v2211
      %v2244 = vadd.f32 %v2122, %v2212
      %v2245 = vadd.f32 %v2125, %v2213
      %v2246 = vadd.f32 %v2130, %v2214
      %v2247 = vadd.f32 %v2133, %v2215
      %v2248 = vadd.f32 %v2138, %v2216
      %v2249 = vadd.f32 %v2141, %v2217
      %v2250 = vadd.f32 %v2146, %v2218
      %v2251 = vadd.f32 %v2149, %v2219
      %v2252 = vadd.f32 %v2154, %v2220
      %v2253 = vadd.f32 %v2157, %v2221
      %v2254 = vadd.f32 %v2162, %v2222
      %v2255 = vadd.f32 %v2165, %v2223
      %v2256 = vadd.f32 %v2170, %v2224
      %v2257 = vadd.f32 %v2173, %v2225
      %v2258 = vadd.f32 %v2178, %v2226
      %v2259 = vadd.f32 %v2181, %v2227
      %v2260 = vadd.f32 %v2186, %v2228
      %v2261 = vadd.f32 %v2189, %v2229
      %v2262 = vadd.f32 %v2194, %v2230
      %v2263 = vadd.f32 %v2197, %v2231
      %v2264 = vld [vmem:[%s5] sm:$0xf]
      %v2265 = vld [vmem:[%s5 + $0x4] sm:$0xf]
      %v2266 = vld [vmem:[%s5 + $0x8] sm:$0xf]
      %v2267 = vld [vmem:[%s5 + $0xc] sm:$0xf]
      %v2268 = vld [vmem:[%s5 + $0x10] sm:$0xf]
      %v2269 = vld [vmem:[%s5 + $0x14] sm:$0xf]
      %v2270 = vld [vmem:[%s5 + $0x18] sm:$0xf]
      %v2271 = vld [vmem:[%s5 + $0x1c] sm:$0xf]
      %v2272 = vld [vmem:[%s5 + $0x20] sm:$0xf]
      %v2273 = vld [vmem:[%s5 + $0x24] sm:$0xf]
      %v2274 = vld [vmem:[%s5 + $0x28] sm:$0xf]
      %v2275 = vld [vmem:[%s5 + $0x2c] sm:$0xf]
      %v2288 = vunpack.c.l.b16 %v2264
      %v2289 = vunpack.c.l.b16 %v2265
      %v2290 = vunpack.c.l.b16 %v2266
      %v2291 = vunpack.c.l.b16 %v2267
      %v2292 = vunpack.c.l.b16 %v2268
      %v2293 = vunpack.c.l.b16 %v2269
      %v2294 = vunpack.c.l.b16 %v2270
      %v2295 = vunpack.c.l.b16 %v2271
      %v2296 = vunpack.c.l.b16 %v2272
      %v2297 = vunpack.c.l.b16 %v2273
      %v2298 = vunpack.c.l.b16 %v2274
      %v2299 = vunpack.c.l.b16 %v2275
      %v2300 = vpack.c.b16 %v2289, %v2288
      %v2301 = vpack.c.b16 %v2291, %v2290
      %v2302 = vpack.c.b16 %v2293, %v2292
      %v2303 = vpack.c.b16 %v2295, %v2294
      %v2304 = vpack.c.b16 %v2297, %v2296
      %v2305 = vpack.c.b16 %v2299, %v2298
      %2312 = vmatprep.subr.bf16.mxu0 0
      %2313 = vmatpush1.bf16.msra.mxu0 0
      %2314 = vmatprep.subr.bf16.mxu0 0
      %2315 = vmatpush1.bf16.msra.mxu0 0
      %2316 = vmatprep.subr.bf16.mxu0 0
      %2317 = vmatpush1.bf16.msra.mxu0 %v2305
      %2318 = vmatprep.subr.bf16.mxu0 0
      %2319 = vmatpush1.bf16.msra.mxu0 %v2304
      %2320 = vmatprep.subr.bf16.mxu0 0
      %2321 = vmatpush1.bf16.msra.mxu0 %v2303
      %2322 = vmatprep.subr.bf16.mxu0 0
      %2323 = vmatpush1.bf16.msra.mxu0 %v2302
      %2324 = vmatprep.subr.bf16.mxu0 0
      %2325 = vmatpush1.bf16.msra.mxu0 %v2301
      %2326 = vmatprep.subr.bf16.mxu0 0
      %2327 = vmatpush1.bf16.msra.mxu0 %v2300
      %2328 = vmatprep.subr.bf16.mxu0 0
      %2329 = vmatpush2.bf16.msra.mxu0 0
      %2330 = vmatprep.subr.bf16.mxu0 0
      %2331 = vmatpush2.bf16.msra.mxu0 0
      %2332 = vmatprep.subr.bf16.mxu0 0
      %2333 = vmatpush2.bf16.msra.mxu0 0
      %2334 = vmatprep.subr.bf16.mxu0 0
      %2335 = vmatpush2.bf16.msra.mxu0 0
      %2336 = vmatprep.subr.bf16.mxu0 0
      %2337 = vmatpush2.bf16.msra.mxu0 0
      %2338 = vmatprep.subr.bf16.mxu0 0
      %2339 = vmatpush2.bf16.msra.mxu0 0
      %2340 = vmatprep.subr.bf16.mxu0 0
      %2341 = vmatpush2.bf16.msra.mxu0 0
      %2342 = vmatprep.subr.bf16.mxu0 0
      %2343 = vmatpush2.bf16.msra.mxu0 0
      %2344 = vmatprep.mubr.bf16.mxu0 0
      %2345 = vmatmul.mubr.bf16.gmra.mxu0 %v1992
      %v2346 = vpop.f32.mrf.mxu0
      %v2347 = vadd.f32 0.0, %v2346
      %v2348 = vpop.f32.mrf.mxu0
      %v2349 = vpop.f32.mrf.mxu0
      %v2350 = vadd.f32 0.0, %v2349
      %v2351 = vpop.f32.mrf.mxu0
      %2352 = vmatprep.mubr.bf16.mxu0 0
      %2353 = vmatmul.mubr.bf16.gmra.mxu0 %v1995
      %v2354 = vpop.f32.mrf.mxu0
      %v2355 = vadd.f32 0.0, %v2354
      %v2356 = vpop.f32.mrf.mxu0
      %v2357 = vpop.f32.mrf.mxu0
      %v2358 = vadd.f32 0.0, %v2357
      %v2359 = vpop.f32.mrf.mxu0
      %2360 = vmatprep.mubr.bf16.mxu0 0
      %2361 = vmatmul.mubr.bf16.gmra.mxu0 %v1998
      %v2362 = vpop.f32.mrf.mxu0
      %v2363 = vadd.f32 0.0, %v2362
      %v2364 = vpop.f32.mrf.mxu0
      %v2365 = vpop.f32.mrf.mxu0
      %v2366 = vadd.f32 0.0, %v2365
      %v2367 = vpop.f32.mrf.mxu0
      %2368 = vmatprep.mubr.bf16.mxu0 0
      %2369 = vmatmul.mubr.bf16.gmra.mxu0 %v2001
      %v2370 = vpop.f32.mrf.mxu0
      %v2371 = vadd.f32 0.0, %v2370
      %v2372 = vpop.f32.mrf.mxu0
      %v2373 = vpop.f32.mrf.mxu0
      %v2374 = vadd.f32 0.0, %v2373
      %v2375 = vpop.f32.mrf.mxu0
      %2376 = vmatprep.mubr.bf16.mxu0 0
      %2377 = vmatmul.mubr.bf16.gmra.mxu0 %v2004
      %v2378 = vpop.f32.mrf.mxu0
      %v2379 = vadd.f32 0.0, %v2378
      %v2380 = vpop.f32.mrf.mxu0
      %v2381 = vpop.f32.mrf.mxu0
      %v2382 = vadd.f32 0.0, %v2381
      %v2383 = vpop.f32.mrf.mxu0
      %2384 = vmatprep.mubr.bf16.mxu0 0
      %2385 = vmatmul.mubr.bf16.gmra.mxu0 %v2007
      %v2386 = vpop.f32.mrf.mxu0
      %v2387 = vadd.f32 0.0, %v2386
      %v2388 = vpop.f32.mrf.mxu0
      %v2389 = vpop.f32.mrf.mxu0
      %v2390 = vadd.f32 0.0, %v2389
      %v2391 = vpop.f32.mrf.mxu0
      %2392 = vmatprep.mubr.bf16.mxu0 0
      %2393 = vmatmul.mubr.bf16.gmra.mxu0 %v2010
      %v2394 = vpop.f32.mrf.mxu0
      %v2395 = vadd.f32 0.0, %v2394
      %v2396 = vpop.f32.mrf.mxu0
      %v2397 = vpop.f32.mrf.mxu0
      %v2398 = vadd.f32 0.0, %v2397
      %v2399 = vpop.f32.mrf.mxu0
      %2400 = vmatprep.mubr.bf16.mxu0 0
      %2401 = vmatmul.mubr.bf16.gmra.mxu0 %v2013
      %v2402 = vpop.f32.mrf.mxu0
      %v2403 = vadd.f32 0.0, %v2402
      %v2404 = vpop.f32.mrf.mxu0
      %v2405 = vpop.f32.mrf.mxu0
      %v2406 = vadd.f32 0.0, %v2405
      %v2407 = vpop.f32.mrf.mxu0
      %2408 = vmatprep.mubr.bf16.mxu0 0
      %2409 = vmatmul.mubr.bf16.gmra.mxu0 %v2016
      %v2410 = vpop.f32.mrf.mxu0
      %v2411 = vadd.f32 0.0, %v2410
      %v2412 = vpop.f32.mrf.mxu0
      %v2413 = vpop.f32.mrf.mxu0
      %v2414 = vadd.f32 0.0, %v2413
      %v2415 = vpop.f32.mrf.mxu0
      %2416 = vmatprep.mubr.bf16.mxu0 0
      %2417 = vmatmul.mubr.bf16.gmra.mxu0 %v2019
      %v2418 = vpop.f32.mrf.mxu0
      %v2419 = vadd.f32 0.0, %v2418
      %v2420 = vpop.f32.mrf.mxu0
      %v2421 = vpop.f32.mrf.mxu0
      %v2422 = vadd.f32 0.0, %v2421
      %v2423 = vpop.f32.mrf.mxu0
      %2424 = vmatprep.mubr.bf16.mxu0 0
      %2425 = vmatmul.mubr.bf16.gmra.mxu0 %v2022
      %v2426 = vpop.f32.mrf.mxu0
      %v2427 = vadd.f32 0.0, %v2426
      %v2428 = vpop.f32.mrf.mxu0
      %v2429 = vpop.f32.mrf.mxu0
      %v2430 = vadd.f32 0.0, %v2429
      %v2431 = vpop.f32.mrf.mxu0
      %2432 = vmatprep.mubr.bf16.mxu0 0
      %2433 = vmatmul.mubr.bf16.gmra.mxu0 %v2025
      %v2434 = vpop.f32.mrf.mxu0
      %v2435 = vadd.f32 0.0, %v2434
      %v2436 = vpop.f32.mrf.mxu0
      %v2437 = vpop.f32.mrf.mxu0
      %v2438 = vadd.f32 0.0, %v2437
      %v2439 = vpop.f32.mrf.mxu0
      %2440 = vmatprep.mubr.bf16.mxu0 0
      %2441 = vmatmul.mubr.bf16.gmra.mxu0 %v2028
      %v2442 = vpop.f32.mrf.mxu0
      %v2443 = vadd.f32 0.0, %v2442
      %v2444 = vpop.f32.mrf.mxu0
      %v2445 = vpop.f32.mrf.mxu0
      %v2446 = vadd.f32 0.0, %v2445
      %v2447 = vpop.f32.mrf.mxu0
      %2448 = vmatprep.mubr.bf16.mxu0 0
      %2449 = vmatmul.mubr.bf16.gmra.mxu0 %v2031
      %v2450 = vpop.f32.mrf.mxu0
      %v2451 = vadd.f32 0.0, %v2450
      %v2452 = vpop.f32.mrf.mxu0
      %v2453 = vpop.f32.mrf.mxu0
      %v2454 = vadd.f32 0.0, %v2453
      %v2455 = vpop.f32.mrf.mxu0
      %2456 = vmatprep.mubr.bf16.mxu0 0
      %2457 = vmatmul.mubr.bf16.gmra.mxu0 %v2034
      %v2458 = vpop.f32.mrf.mxu0
      %v2459 = vadd.f32 0.0, %v2458
      %v2460 = vpop.f32.mrf.mxu0
      %v2461 = vpop.f32.mrf.mxu0
      %v2462 = vadd.f32 0.0, %v2461
      %v2463 = vpop.f32.mrf.mxu0
      %2464 = vmatprep.mubr.bf16.mxu0 0
      %2465 = vmatmul.mubr.bf16.gmra.mxu0 %v2037
      %v2466 = vpop.f32.mrf.mxu0
      %v2467 = vadd.f32 0.0, %v2466
      %v2468 = vpop.f32.mrf.mxu0
      %v2469 = vpop.f32.mrf.mxu0
      %v2470 = vadd.f32 0.0, %v2469
      %v2471 = vpop.f32.mrf.mxu0
      %2472 = vdwg.mxu0
      %vm2473 = vcmask 23552
      %v2474 = vsel %vm2473, %v2232, -inf
      %2475 = vmax.xlane.f32.xlu0 %v2474
      %v2476 = vpop.xlane.xlu0 %2475
      %v2477 = vsel %vm2473, %v2233, -inf
      %2478 = vmax.xlane.f32.xlu0 %v2477
      %v2479 = vpop.xlane.xlu0 %2478
      %v2480 = vsel %vm2473, %v2234, -inf
      %2481 = vmax.xlane.f32.xlu0 %v2480
      %v2482 = vpop.xlane.xlu0 %2481
      %v2483 = vsel %vm2473, %v2235, -inf
      %2484 = vmax.xlane.f32.xlu0 %v2483
      %v2485 = vpop.xlane.xlu0 %2484
      %v2486 = vsel %vm2473, %v2236, -inf
      %2487 = vmax.xlane.f32.xlu0 %v2486
      %v2488 = vpop.xlane.xlu0 %2487
      %v2489 = vsel %vm2473, %v2237, -inf
      %2490 = vmax.xlane.f32.xlu0 %v2489
      %v2491 = vpop.xlane.xlu0 %2490
      %v2492 = vsel %vm2473, %v2238, -inf
      %2493 = vmax.xlane.f32.xlu0 %v2492
      %v2494 = vpop.xlane.xlu0 %2493
      %v2495 = vsel %vm2473, %v2239, -inf
      %2496 = vmax.xlane.f32.xlu0 %v2495
      %v2497 = vpop.xlane.xlu0 %2496
      %v2498 = vsel %vm2473, %v2240, -inf
      %2499 = vmax.xlane.f32.xlu0 %v2498
      %v2500 = vpop.xlane.xlu0 %2499
      %v2501 = vsel %vm2473, %v2241, -inf
      %2502 = vmax.xlane.f32.xlu0 %v2501
      %v2503 = vpop.xlane.xlu0 %2502
      %v2504 = vsel %vm2473, %v2242, -inf
      %2505 = vmax.xlane.f32.xlu0 %v2504
      %v2506 = vpop.xlane.xlu0 %2505
      %v2507 = vsel %vm2473, %v2243, -inf
      %2508 = vmax.xlane.f32.xlu0 %v2507
      %v2509 = vpop.xlane.xlu0 %2508
      %v2510 = vsel %vm2473, %v2244, -inf
      %2511 = vmax.xlane.f32.xlu0 %v2510
      %v2512 = vpop.xlane.xlu0 %2511
      %v2513 = vsel %vm2473, %v2245, -inf
      %2514 = vmax.xlane.f32.xlu0 %v2513
      %v2515 = vpop.xlane.xlu0 %2514
      %v2516 = vsel %vm2473, %v2246, -inf
      %2517 = vmax.xlane.f32.xlu0 %v2516
      %v2518 = vpop.xlane.xlu0 %2517
      %v2519 = vsel %vm2473, %v2247, -inf
      %2520 = vmax.xlane.f32.xlu0 %v2519
      %v2521 = vpop.xlane.xlu0 %2520
      %v2522 = vsel %vm2473, %v2248, -inf
      %2523 = vmax.xlane.f32.xlu0 %v2522
      %v2524 = vpop.xlane.xlu0 %2523
      %v2525 = vsel %vm2473, %v2249, -inf
      %2526 = vmax.xlane.f32.xlu0 %v2525
      %v2527 = vpop.xlane.xlu0 %2526
      %v2528 = vsel %vm2473, %v2250, -inf
      %2529 = vmax.xlane.f32.xlu0 %v2528
      %v2530 = vpop.xlane.xlu0 %2529
      %v2531 = vsel %vm2473, %v2251, -inf
      %2532 = vmax.xlane.f32.xlu0 %v2531
      %v2533 = vpop.xlane.xlu0 %2532
      %v2534 = vsel %vm2473, %v2252, -inf
      %2535 = vmax.xlane.f32.xlu0 %v2534
      %v2536 = vpop.xlane.xlu0 %2535
      %v2537 = vsel %vm2473, %v2253, -inf
      %2538 = vmax.xlane.f32.xlu0 %v2537
      %v2539 = vpop.xlane.xlu0 %2538
      %v2540 = vsel %vm2473, %v2254, -inf
      %2541 = vmax.xlane.f32.xlu0 %v2540
      %v2542 = vpop.xlane.xlu0 %2541
      %v2543 = vsel %vm2473, %v2255, -inf
      %2544 = vmax.xlane.f32.xlu0 %v2543
      %v2545 = vpop.xlane.xlu0 %2544
      %v2546 = vsel %vm2473, %v2256, -inf
      %2547 = vmax.xlane.f32.xlu0 %v2546
      %v2548 = vpop.xlane.xlu0 %2547
      %v2549 = vsel %vm2473, %v2257, -inf
      %2550 = vmax.xlane.f32.xlu0 %v2549
      %v2551 = vpop.xlane.xlu0 %2550
      %v2552 = vsel %vm2473, %v2258, -inf
      %2553 = vmax.xlane.f32.xlu0 %v2552
      %v2554 = vpop.xlane.xlu0 %2553
      %v2555 = vsel %vm2473, %v2259, -inf
      %2556 = vmax.xlane.f32.xlu0 %v2555
      %v2557 = vpop.xlane.xlu0 %2556
      %v2558 = vsel %vm2473, %v2260, -inf
      %2559 = vmax.xlane.f32.xlu0 %v2558
      %v2560 = vpop.xlane.xlu0 %2559
      %v2561 = vsel %vm2473, %v2261, -inf
      %2562 = vmax.xlane.f32.xlu0 %v2561
      %v2563 = vpop.xlane.xlu0 %2562
      %v2564 = vsel %vm2473, %v2262, -inf
      %2565 = vmax.xlane.f32.xlu0 %v2564
      %v2566 = vpop.xlane.xlu0 %2565
      %v2567 = vsel %vm2473, %v2263, -inf
      %2568 = vmax.xlane.f32.xlu0 %v2567
      %v2569 = vpop.xlane.xlu0 %2568
      %v2570 = vmax.f32 %v2476, %v2479
      %v2571 = vrot.slane %v2570, 4
      %v2572 = vmax.f32 %v2570, %v2571
      %v2573 = vrot.slane %v2572, 2
      %v2574 = vmax.f32 %v2572, %v2573
      %v2575 = vrot.slane %v2574, 1
      %v2576 = vmax.f32 %v2574, %v2575
      %v2577 = vmax.f32 %v2482, %v2485
      %v2578 = vrot.slane %v2577, 4
      %v2579 = vmax.f32 %v2577, %v2578
      %v2580 = vrot.slane %v2579, 2
      %v2581 = vmax.f32 %v2579, %v2580
      %v2582 = vrot.slane %v2581, 1
      %v2583 = vmax.f32 %v2581, %v2582
      %v2584 = vmax.f32 %v2488, %v2491
      %v2585 = vrot.slane %v2584, 4
      %v2586 = vmax.f32 %v2584, %v2585
      %v2587 = vrot.slane %v2586, 2
      %v2588 = vmax.f32 %v2586, %v2587
      %v2589 = vrot.slane %v2588, 1
      %v2590 = vmax.f32 %v2588, %v2589
      %v2591 = vmax.f32 %v2494, %v2497
      %v2592 = vrot.slane %v2591, 4
      %v2593 = vmax.f32 %v2591, %v2592
      %v2594 = vrot.slane %v2593, 2
      %v2595 = vmax.f32 %v2593, %v2594
      %v2596 = vrot.slane %v2595, 1
      %v2597 = vmax.f32 %v2595, %v2596
      %v2598 = vmax.f32 %v2500, %v2503
      %v2599 = vrot.slane %v2598, 4
      %v2600 = vmax.f32 %v2598, %v2599
      %v2601 = vrot.slane %v2600, 2
      %v2602 = vmax.f32 %v2600, %v2601
      %v2603 = vrot.slane %v2602, 1
      %v2604 = vmax.f32 %v2602, %v2603
      %v2605 = vmax.f32 %v2506, %v2509
      %v2606 = vrot.slane %v2605, 4
      %v2607 = vmax.f32 %v2605, %v2606
      %v2608 = vrot.slane %v2607, 2
      %v2609 = vmax.f32 %v2607, %v2608
      %v2610 = vrot.slane %v2609, 1
      %v2611 = vmax.f32 %v2609, %v2610
      %v2612 = vmax.f32 %v2512, %v2515
      %v2613 = vrot.slane %v2612, 4
      %v2614 = vmax.f32 %v2612, %v2613
      %v2615 = vrot.slane %v2614, 2
      %v2616 = vmax.f32 %v2614, %v2615
      %v2617 = vrot.slane %v2616, 1
      %v2618 = vmax.f32 %v2616, %v2617
      %v2619 = vmax.f32 %v2518, %v2521
      %v2620 = vrot.slane %v2619, 4
      %v2621 = vmax.f32 %v2619, %v2620
      %v2622 = vrot.slane %v2621, 2
      %v2623 = vmax.f32 %v2621, %v2622
      %v2624 = vrot.slane %v2623, 1
      %v2625 = vmax.f32 %v2623, %v2624
      %v2626 = vmax.f32 %v2524, %v2527
      %v2627 = vrot.slane %v2626, 4
      %v2628 = vmax.f32 %v2626, %v2627
      %v2629 = vrot.slane %v2628, 2
      %v2630 = vmax.f32 %v2628, %v2629
      %v2631 = vrot.slane %v2630, 1
      %v2632 = vmax.f32 %v2630, %v2631
      %v2633 = vmax.f32 %v2530, %v2533
      %v2634 = vrot.slane %v2633, 4
      %v2635 = vmax.f32 %v2633, %v2634
      %v2636 = vrot.slane %v2635, 2
      %v2637 = vmax.f32 %v2635, %v2636
      %v2638 = vrot.slane %v2637, 1
      %v2639 = vmax.f32 %v2637, %v2638
      %v2640 = vmax.f32 %v2536, %v2539
      %v2641 = vrot.slane %v2640, 4
      %v2642 = vmax.f32 %v2640, %v2641
      %v2643 = vrot.slane %v2642, 2
      %v2644 = vmax.f32 %v2642, %v2643
      %v2645 = vrot.slane %v2644, 1
      %v2646 = vmax.f32 %v2644, %v2645
      %v2647 = vmax.f32 %v2542, %v2545
      %v2648 = vrot.slane %v2647, 4
      %v2649 = vmax.f32 %v2647, %v2648
      %v2650 = vrot.slane %v2649, 2
      %v2651 = vmax.f32 %v2649, %v2650
      %v2652 = vrot.slane %v2651, 1
      %v2653 = vmax.f32 %v2651, %v2652
      %v2654 = vmax.f32 %v2548, %v2551
      %v2655 = vrot.slane %v2654, 4
      %v2656 = vmax.f32 %v2654, %v2655
      %v2657 = vrot.slane %v2656, 2
      %v2658 = vmax.f32 %v2656, %v2657
      %v2659 = vrot.slane %v2658, 1
      %v2660 = vmax.f32 %v2658, %v2659
      %v2661 = vmax.f32 %v2554, %v2557
      %v2662 = vrot.slane %v2661, 4
      %v2663 = vmax.f32 %v2661, %v2662
      %v2664 = vrot.slane %v2663, 2
      %v2665 = vmax.f32 %v2663, %v2664
      %v2666 = vrot.slane %v2665, 1
      %v2667 = vmax.f32 %v2665, %v2666
      %v2668 = vmax.f32 %v2560, %v2563
      %v2669 = vrot.slane %v2668, 4
      %v2670 = vmax.f32 %v2668, %v2669
      %v2671 = vrot.slane %v2670, 2
      %v2672 = vmax.f32 %v2670, %v2671
      %v2673 = vrot.slane %v2672, 1
      %v2674 = vmax.f32 %v2672, %v2673
      %v2675 = vmax.f32 %v2566, %v2569
      %v2676 = vrot.slane %v2675, 4
      %v2677 = vmax.f32 %v2675, %v2676
      %v2678 = vrot.slane %v2677, 2
      %v2679 = vmax.f32 %v2677, %v2678
      %v2680 = vrot.slane %v2679, 1
      %v2681 = vmax.f32 %v2679, %v2680
      %v2682 = vsub.f32 %v2232, %v2576
      %v2683 = vsub.f32 %v2233, %v2576
      %v2684 = vsub.f32 %v2234, %v2583
      %v2685 = vsub.f32 %v2235, %v2583
      %v2686 = vsub.f32 %v2236, %v2590
      %v2687 = vsub.f32 %v2237, %v2590
      %v2688 = vsub.f32 %v2238, %v2597
      %v2689 = vsub.f32 %v2239, %v2597
      %v2690 = vsub.f32 %v2240, %v2604
      %v2691 = vsub.f32 %v2241, %v2604
      %v2692 = vsub.f32 %v2242, %v2611
      %v2693 = vsub.f32 %v2243, %v2611
      %v2694 = vsub.f32 %v2244, %v2618
      %v2695 = vsub.f32 %v2245, %v2618
      %v2696 = vsub.f32 %v2246, %v2625
      %v2697 = vsub.f32 %v2247, %v2625
      %v2698 = vsub.f32 %v2248, %v2632
      %v2699 = vsub.f32 %v2249, %v2632
      %v2700 = vsub.f32 %v2250, %v2639
      %v2701 = vsub.f32 %v2251, %v2639
      %v2702 = vsub.f32 %v2252, %v2646
      %v2703 = vsub.f32 %v2253, %v2646
      %v2704 = vsub.f32 %v2254, %v2653
      %v2705 = vsub.f32 %v2255, %v2653
      %v2706 = vsub.f32 %v2256, %v2660
      %v2707 = vsub.f32 %v2257, %v2660
      %v2708 = vsub.f32 %v2258, %v2667
      %v2709 = vsub.f32 %v2259, %v2667
      %v2710 = vsub.f32 %v2260, %v2674
      %v2711 = vsub.f32 %v2261, %v2674
      %v2712 = vsub.f32 %v2262, %v2681
      %v2713 = vsub.f32 %v2263, %v2681
      %v2714 = vmul.f32 %v2682, 1.442695
      %v2715 = vpow.pop %v2714
      %v2716 = vmul.f32 %v2683, 1.442695
      %v2717 = vpow.pop %v2716
      %v2718 = vmul.f32 %v2684, 1.442695
      %v2719 = vpow.pop %v2718
      %v2720 = vmul.f32 %v2685, 1.442695
      %v2721 = vpow.pop %v2720
      %v2722 = vmul.f32 %v2686, 1.442695
      %v2723 = vpow.pop %v2722
      %v2724 = vmul.f32 %v2687, 1.442695
      %v2725 = vpow.pop %v2724
      %v2726 = vmul.f32 %v2688, 1.442695
      %v2727 = vpow.pop %v2726
      %v2728 = vmul.f32 %v2689, 1.442695
      %v2729 = vpow.pop %v2728
      %v2730 = vmul.f32 %v2690, 1.442695
      %v2731 = vpow.pop %v2730
      %v2732 = vmul.f32 %v2691, 1.442695
      %v2733 = vpow.pop %v2732
      %v2734 = vmul.f32 %v2692, 1.442695
      %v2735 = vpow.pop %v2734
      %v2736 = vmul.f32 %v2693, 1.442695
      %v2737 = vpow.pop %v2736
      %v2738 = vmul.f32 %v2694, 1.442695
      %v2739 = vpow.pop %v2738
      %v2740 = vmul.f32 %v2695, 1.442695
      %v2741 = vpow.pop %v2740
      %v2742 = vmul.f32 %v2696, 1.442695
      %v2743 = vpow.pop %v2742
      %v2744 = vmul.f32 %v2697, 1.442695
      %v2745 = vpow.pop %v2744
      %v2746 = vmul.f32 %v2698, 1.442695
      %v2747 = vpow.pop %v2746
      %v2748 = vmul.f32 %v2699, 1.442695
      %v2749 = vpow.pop %v2748
      %v2750 = vmul.f32 %v2700, 1.442695
      %v2751 = vpow.pop %v2750
      %v2752 = vmul.f32 %v2701, 1.442695
      %v2753 = vpow.pop %v2752
      %v2754 = vmul.f32 %v2702, 1.442695
      %v2755 = vpow.pop %v2754
      %v2756 = vmul.f32 %v2703, 1.442695
      %v2757 = vpow.pop %v2756
      %v2758 = vmul.f32 %v2704, 1.442695
      %v2759 = vpow.pop %v2758
      %v2760 = vmul.f32 %v2705, 1.442695
      %v2761 = vpow.pop %v2760
      %v2762 = vmul.f32 %v2706, 1.442695
      %v2763 = vpow.pop %v2762
      %v2764 = vmul.f32 %v2707, 1.442695
      %v2765 = vpow.pop %v2764
      %v2766 = vmul.f32 %v2708, 1.442695
      %v2767 = vpow.pop %v2766
      %v2768 = vmul.f32 %v2709, 1.442695
      %v2769 = vpow.pop %v2768
      %v2770 = vmul.f32 %v2710, 1.442695
      %v2771 = vpow.pop %v2770
      %v2772 = vmul.f32 %v2711, 1.442695
      %v2773 = vpow.pop %v2772
      %v2774 = vmul.f32 %v2712, 1.442695
      %v2775 = vpow.pop %v2774
      %v2776 = vmul.f32 %v2713, 1.442695
      %v2777 = vpow.pop %v2776
      %v2778 = vsel %vm2473, %v2715, 0.0
      %2779 = vadd.xlane.f32.xlu0 %v2778
      %v2780 = vpop.xlane.xlu0 %2779
      %v2781 = vsel %vm2473, %v2717, 0.0
      %2782 = vadd.xlane.f32.xlu0 %v2781
      %v2783 = vpop.xlane.xlu0 %2782
      %v2784 = vsel %vm2473, %v2719, 0.0
      %2785 = vadd.xlane.f32.xlu0 %v2784
      %v2786 = vpop.xlane.xlu0 %2785
      %v2787 = vsel %vm2473, %v2721, 0.0
      %2788 = vadd.xlane.f32.xlu0 %v2787
      %v2789 = vpop.xlane.xlu0 %2788
      %v2790 = vsel %vm2473, %v2723, 0.0
      %2791 = vadd.xlane.f32.xlu0 %v2790
      %v2792 = vpop.xlane.xlu0 %2791
      %v2793 = vsel %vm2473, %v2725, 0.0
      %2794 = vadd.xlane.f32.xlu0 %v2793
      %v2795 = vpop.xlane.xlu0 %2794
      %v2796 = vsel %vm2473, %v2727, 0.0
      %2797 = vadd.xlane.f32.xlu0 %v2796
      %v2798 = vpop.xlane.xlu0 %2797
      %v2799 = vsel %vm2473, %v2729, 0.0
      %2800 = vadd.xlane.f32.xlu0 %v2799
      %v2801 = vpop.xlane.xlu0 %2800
      %v2802 = vsel %vm2473, %v2731, 0.0
      %2803 = vadd.xlane.f32.xlu0 %v2802
      %v2804 = vpop.xlane.xlu0 %2803
      %v2805 = vsel %vm2473, %v2733, 0.0
      %2806 = vadd.xlane.f32.xlu0 %v2805
      %v2807 = vpop.xlane.xlu0 %2806
      %v2808 = vsel %vm2473, %v2735, 0.0
      %2809 = vadd.xlane.f32.xlu0 %v2808
      %v2810 = vpop.xlane.xlu0 %2809
      %v2811 = vsel %vm2473, %v2737, 0.0
      %2812 = vadd.xlane.f32.xlu0 %v2811
      %v2813 = vpop.xlane.xlu0 %2812
      %v2814 = vsel %vm2473, %v2739, 0.0
      %2815 = vadd.xlane.f32.xlu0 %v2814
      %v2816 = vpop.xlane.xlu0 %2815
      %v2817 = vsel %vm2473, %v2741, 0.0
      %2818 = vadd.xlane.f32.xlu0 %v2817
      %v2819 = vpop.xlane.xlu0 %2818
      %v2820 = vsel %vm2473, %v2743, 0.0
      %2821 = vadd.xlane.f32.xlu0 %v2820
      %v2822 = vpop.xlane.xlu0 %2821
      %v2823 = vsel %vm2473, %v2745, 0.0
      %2824 = vadd.xlane.f32.xlu0 %v2823
      %v2825 = vpop.xlane.xlu0 %2824
      %v2826 = vsel %vm2473, %v2747, 0.0
      %2827 = vadd.xlane.f32.xlu0 %v2826
      %v2828 = vpop.xlane.xlu0 %2827
      %v2829 = vsel %vm2473, %v2749, 0.0
      %2830 = vadd.xlane.f32.xlu0 %v2829
      %v2831 = vpop.xlane.xlu0 %2830
      %v2832 = vsel %vm2473, %v2751, 0.0
      %2833 = vadd.xlane.f32.xlu0 %v2832
      %v2834 = vpop.xlane.xlu0 %2833
      %v2835 = vsel %vm2473, %v2753, 0.0
      %2836 = vadd.xlane.f32.xlu0 %v2835
      %v2837 = vpop.xlane.xlu0 %2836
      %v2838 = vsel %vm2473, %v2755, 0.0
      %2839 = vadd.xlane.f32.xlu0 %v2838
      %v2840 = vpop.xlane.xlu0 %2839
      %v2841 = vsel %vm2473, %v2757, 0.0
      %2842 = vadd.xlane.f32.xlu0 %v2841
      %v2843 = vpop.xlane.xlu0 %2842
      %v2844 = vsel %vm2473, %v2759, 0.0
      %2845 = vadd.xlane.f32.xlu0 %v2844
      %v2846 = vpop.xlane.xlu0 %2845
      %v2847 = vsel %vm2473, %v2761, 0.0
      %2848 = vadd.xlane.f32.xlu0 %v2847
      %v2849 = vpop.xlane.xlu0 %2848
      %v2850 = vsel %vm2473, %v2763, 0.0
      %2851 = vadd.xlane.f32.xlu0 %v2850
      %v2852 = vpop.xlane.xlu0 %2851
      %v2853 = vsel %vm2473, %v2765, 0.0
      %2854 = vadd.xlane.f32.xlu0 %v2853
      %v2855 = vpop.xlane.xlu0 %2854
      %v2856 = vsel %vm2473, %v2767, 0.0
      %2857 = vadd.xlane.f32.xlu0 %v2856
      %v2858 = vpop.xlane.xlu0 %2857
      %v2859 = vsel %vm2473, %v2769, 0.0
      %2860 = vadd.xlane.f32.xlu0 %v2859
      %v2861 = vpop.xlane.xlu0 %2860
      %v2862 = vsel %vm2473, %v2771, 0.0
      %2863 = vadd.xlane.f32.xlu0 %v2862
      %v2864 = vpop.xlane.xlu0 %2863
      %v2865 = vsel %vm2473, %v2773, 0.0
      %2866 = vadd.xlane.f32.xlu0 %v2865
      %v2867 = vpop.xlane.xlu0 %2866
      %v2868 = vsel %vm2473, %v2775, 0.0
      %2869 = vadd.xlane.f32.xlu0 %v2868
      %v2870 = vpop.xlane.xlu0 %2869
      %v2871 = vsel %vm2473, %v2777, 0.0
      %2872 = vadd.xlane.f32.xlu0 %v2871
      %v2873 = vpop.xlane.xlu0 %2872
      %v2874 = vadd.f32 %v2780, %v2783
      %v2875 = vrot.slane %v2874, 4
      %v2876 = vadd.f32 %v2874, %v2875
      %v2877 = vrot.slane %v2876, 2
      %v2878 = vadd.f32 %v2876, %v2877
      %v2879 = vrot.slane %v2878, 1
      %v2880 = vadd.f32 %v2878, %v2879
      %v2881 = vadd.f32 %v2786, %v2789
      %v2882 = vrot.slane %v2881, 4
      %v2883 = vadd.f32 %v2881, %v2882
      %v2884 = vrot.slane %v2883, 2
      %v2885 = vadd.f32 %v2883, %v2884
      %v2886 = vrot.slane %v2885, 1
      %v2887 = vadd.f32 %v2885, %v2886
      %v2888 = vadd.f32 %v2792, %v2795
      %v2889 = vrot.slane %v2888, 4
      %v2890 = vadd.f32 %v2888, %v2889
      %v2891 = vrot.slane %v2890, 2
      %v2892 = vadd.f32 %v2890, %v2891
      %v2893 = vrot.slane %v2892, 1
      %v2894 = vadd.f32 %v2892, %v2893
      %v2895 = vadd.f32 %v2798, %v2801
      %v2896 = vrot.slane %v2895, 4
      %v2897 = vadd.f32 %v2895, %v2896
      %v2898 = vrot.slane %v2897, 2
      %v2899 = vadd.f32 %v2897, %v2898
      %v2900 = vrot.slane %v2899, 1
      %v2901 = vadd.f32 %v2899, %v2900
      %v2902 = vadd.f32 %v2804, %v2807
      %v2903 = vrot.slane %v2902, 4
      %v2904 = vadd.f32 %v2902, %v2903
      %v2905 = vrot.slane %v2904, 2
      %v2906 = vadd.f32 %v2904, %v2905
      %v2907 = vrot.slane %v2906, 1
      %v2908 = vadd.f32 %v2906, %v2907
      %v2909 = vadd.f32 %v2810, %v2813
      %v2910 = vrot.slane %v2909, 4
      %v2911 = vadd.f32 %v2909, %v2910
      %v2912 = vrot.slane %v2911, 2
      %v2913 = vadd.f32 %v2911, %v2912
      %v2914 = vrot.slane %v2913, 1
      %v2915 = vadd.f32 %v2913, %v2914
      %v2916 = vadd.f32 %v2816, %v2819
      %v2917 = vrot.slane %v2916, 4
      %v2918 = vadd.f32 %v2916, %v2917
      %v2919 = vrot.slane %v2918, 2
      %v2920 = vadd.f32 %v2918, %v2919
      %v2921 = vrot.slane %v2920, 1
      %v2922 = vadd.f32 %v2920, %v2921
      %v2923 = vadd.f32 %v2822, %v2825
      %v2924 = vrot.slane %v2923, 4
      %v2925 = vadd.f32 %v2923, %v2924
      %v2926 = vrot.slane %v2925, 2
      %v2927 = vadd.f32 %v2925, %v2926
      %v2928 = vrot.slane %v2927, 1
      %v2929 = vadd.f32 %v2927, %v2928
      %v2930 = vadd.f32 %v2828, %v2831
      %v2931 = vrot.slane %v2930, 4
      %v2932 = vadd.f32 %v2930, %v2931
      %v2933 = vrot.slane %v2932, 2
      %v2934 = vadd.f32 %v2932, %v2933
      %v2935 = vrot.slane %v2934, 1
      %v2936 = vadd.f32 %v2934, %v2935
      %v2937 = vadd.f32 %v2834, %v2837
      %v2938 = vrot.slane %v2937, 4
      %v2939 = vadd.f32 %v2937, %v2938
      %v2940 = vrot.slane %v2939, 2
      %v2941 = vadd.f32 %v2939, %v2940
      %v2942 = vrot.slane %v2941, 1
      %v2943 = vadd.f32 %v2941, %v2942
      %v2944 = vadd.f32 %v2840, %v2843
      %v2945 = vrot.slane %v2944, 4
      %v2946 = vadd.f32 %v2944, %v2945
      %v2947 = vrot.slane %v2946, 2
      %v2948 = vadd.f32 %v2946, %v2947
      %v2949 = vrot.slane %v2948, 1
      %v2950 = vadd.f32 %v2948, %v2949
      %v2951 = vadd.f32 %v2846, %v2849
      %v2952 = vrot.slane %v2951, 4
      %v2953 = vadd.f32 %v2951, %v2952
      %v2954 = vrot.slane %v2953, 2
      %v2955 = vadd.f32 %v2953, %v2954
      %v2956 = vrot.slane %v2955, 1
      %v2957 = vadd.f32 %v2955, %v2956
      %v2958 = vadd.f32 %v2852, %v2855
      %v2959 = vrot.slane %v2958, 4
      %v2960 = vadd.f32 %v2958, %v2959
      %v2961 = vrot.slane %v2960, 2
      %v2962 = vadd.f32 %v2960, %v2961
      %v2963 = vrot.slane %v2962, 1
      %v2964 = vadd.f32 %v2962, %v2963
      %v2965 = vadd.f32 %v2858, %v2861
      %v2966 = vrot.slane %v2965, 4
      %v2967 = vadd.f32 %v2965, %v2966
      %v2968 = vrot.slane %v2967, 2
      %v2969 = vadd.f32 %v2967, %v2968
      %v2970 = vrot.slane %v2969, 1
      %v2971 = vadd.f32 %v2969, %v2970
      %v2972 = vadd.f32 %v2864, %v2867
      %v2973 = vrot.slane %v2972, 4
      %v2974 = vadd.f32 %v2972, %v2973
      %v2975 = vrot.slane %v2974, 2
      %v2976 = vadd.f32 %v2974, %v2975
      %v2977 = vrot.slane %v2976, 1
      %v2978 = vadd.f32 %v2976, %v2977
      %v2979 = vadd.f32 %v2870, %v2873
      %v2980 = vrot.slane %v2979, 4
      %v2981 = vadd.f32 %v2979, %v2980
      %v2982 = vrot.slane %v2981, 2
      %v2983 = vadd.f32 %v2981, %v2982
      %v2984 = vrot.slane %v2983, 1
      %v2985 = vadd.f32 %v2983, %v2984
      %v2986 = vmul.f32 %v2715, %v2347
      %v2987 = vmul.f32 %v2717, %v2350
      %v2988 = vmul.f32 %v2719, %v2355
      %v2989 = vmul.f32 %v2721, %v2358
      %v2990 = vmul.f32 %v2723, %v2363
      %v2991 = vmul.f32 %v2725, %v2366
      %v2992 = vmul.f32 %v2727, %v2371
      %v2993 = vmul.f32 %v2729, %v2374
      %v2994 = vmul.f32 %v2731, %v2379
      %v2995 = vmul.f32 %v2733, %v2382
      %v2996 = vmul.f32 %v2735, %v2387
      %v2997 = vmul.f32 %v2737, %v2390
      %v2998 = vmul.f32 %v2739, %v2395
      %v2999 = vmul.f32 %v2741, %v2398
      %v3000 = vmul.f32 %v2743, %v2403
      %v3001 = vmul.f32 %v2745, %v2406
      %v3002 = vmul.f32 %v2747, %v2411
      %v3003 = vmul.f32 %v2749, %v2414
      %v3004 = vmul.f32 %v2751, %v2419
      %v3005 = vmul.f32 %v2753, %v2422
      %v3006 = vmul.f32 %v2755, %v2427
      %v3007 = vmul.f32 %v2757, %v2430
      %v3008 = vmul.f32 %v2759, %v2435
      %v3009 = vmul.f32 %v2761, %v2438
      %v3010 = vmul.f32 %v2763, %v2443
      %v3011 = vmul.f32 %v2765, %v2446
      %v3012 = vmul.f32 %v2767, %v2451
      %v3013 = vmul.f32 %v2769, %v2454
      %v3014 = vmul.f32 %v2771, %v2459
      %v3015 = vmul.f32 %v2773, %v2462
      %v3016 = vmul.f32 %v2775, %v2467
      %v3017 = vmul.f32 %v2777, %v2470
      %v3018 = vsel %vm2473, %v2986, 0.0
      %3019 = vadd.xlane.f32.xlu0 %v3018
      %v3020 = vpop.xlane.xlu0 %3019
      %v3021 = vsel %vm2473, %v2987, 0.0
      %3022 = vadd.xlane.f32.xlu0 %v3021
      %v3023 = vpop.xlane.xlu0 %3022
      %v3024 = vsel %vm2473, %v2988, 0.0
      %3025 = vadd.xlane.f32.xlu0 %v3024
      %v3026 = vpop.xlane.xlu0 %3025
      %v3027 = vsel %vm2473, %v2989, 0.0
      %3028 = vadd.xlane.f32.xlu0 %v3027
      %v3029 = vpop.xlane.xlu0 %3028
      %v3030 = vsel %vm2473, %v2990, 0.0
      %3031 = vadd.xlane.f32.xlu0 %v3030
      %v3032 = vpop.xlane.xlu0 %3031
      %v3033 = vsel %vm2473, %v2991, 0.0
      %3034 = vadd.xlane.f32.xlu0 %v3033
      %v3035 = vpop.xlane.xlu0 %3034
      %v3036 = vsel %vm2473, %v2992, 0.0
      %3037 = vadd.xlane.f32.xlu0 %v3036
      %v3038 = vpop.xlane.xlu0 %3037
      %v3039 = vsel %vm2473, %v2993, 0.0
      %3040 = vadd.xlane.f32.xlu0 %v3039
      %v3041 = vpop.xlane.xlu0 %3040
      %v3042 = vsel %vm2473, %v2994, 0.0
      %3043 = vadd.xlane.f32.xlu0 %v3042
      %v3044 = vpop.xlane.xlu0 %3043
      %v3045 = vsel %vm2473, %v2995, 0.0
      %3046 = vadd.xlane.f32.xlu0 %v3045
      %v3047 = vpop.xlane.xlu0 %3046
      %v3048 = vsel %vm2473, %v2996, 0.0
      %3049 = vadd.xlane.f32.xlu0 %v3048
      %v3050 = vpop.xlane.xlu0 %3049
      %v3051 = vsel %vm2473, %v2997, 0.0
      %3052 = vadd.xlane.f32.xlu0 %v3051
      %v3053 = vpop.xlane.xlu0 %3052
      %v3054 = vsel %vm2473, %v2998, 0.0
      %3055 = vadd.xlane.f32.xlu0 %v3054
      %v3056 = vpop.xlane.xlu0 %3055
      %v3057 = vsel %vm2473, %v2999, 0.0
      %3058 = vadd.xlane.f32.xlu0 %v3057
      %v3059 = vpop.xlane.xlu0 %3058
      %v3060 = vsel %vm2473, %v3000, 0.0
      %3061 = vadd.xlane.f32.xlu0 %v3060
      %v3062 = vpop.xlane.xlu0 %3061
      %v3063 = vsel %vm2473, %v3001, 0.0
      %3064 = vadd.xlane.f32.xlu0 %v3063
      %v3065 = vpop.xlane.xlu0 %3064
      %v3066 = vsel %vm2473, %v3002, 0.0
      %3067 = vadd.xlane.f32.xlu0 %v3066
      %v3068 = vpop.xlane.xlu0 %3067
      %v3069 = vsel %vm2473, %v3003, 0.0
      %3070 = vadd.xlane.f32.xlu0 %v3069
      %v3071 = vpop.xlane.xlu0 %3070
      %v3072 = vsel %vm2473, %v3004, 0.0
      %3073 = vadd.xlane.f32.xlu0 %v3072
      %v3074 = vpop.xlane.xlu0 %3073
      %v3075 = vsel %vm2473, %v3005, 0.0
      %3076 = vadd.xlane.f32.xlu0 %v3075
      %v3077 = vpop.xlane.xlu0 %3076
      %v3078 = vsel %vm2473, %v3006, 0.0
      %3079 = vadd.xlane.f32.xlu0 %v3078
      %v3080 = vpop.xlane.xlu0 %3079
      %v3081 = vsel %vm2473, %v3007, 0.0
      %3082 = vadd.xlane.f32.xlu0 %v3081
      %v3083 = vpop.xlane.xlu0 %3082
      %v3084 = vsel %vm2473, %v3008, 0.0
      %3085 = vadd.xlane.f32.xlu0 %v3084
      %v3086 = vpop.xlane.xlu0 %3085
      %v3087 = vsel %vm2473, %v3009, 0.0
      %3088 = vadd.xlane.f32.xlu0 %v3087
      %v3089 = vpop.xlane.xlu0 %3088
      %v3090 = vsel %vm2473, %v3010, 0.0
      %3091 = vadd.xlane.f32.xlu0 %v3090
      %v3092 = vpop.xlane.xlu0 %3091
      %v3093 = vsel %vm2473, %v3011, 0.0
      %3094 = vadd.xlane.f32.xlu0 %v3093
      %v3095 = vpop.xlane.xlu0 %3094
      %v3096 = vsel %vm2473, %v3012, 0.0
      %3097 = vadd.xlane.f32.xlu0 %v3096
      %v3098 = vpop.xlane.xlu0 %3097
      %v3099 = vsel %vm2473, %v3013, 0.0
      %3100 = vadd.xlane.f32.xlu0 %v3099
      %v3101 = vpop.xlane.xlu0 %3100
      %v3102 = vsel %vm2473, %v3014, 0.0
      %3103 = vadd.xlane.f32.xlu0 %v3102
      %v3104 = vpop.xlane.xlu0 %3103
      %v3105 = vsel %vm2473, %v3015, 0.0
      %3106 = vadd.xlane.f32.xlu0 %v3105
      %v3107 = vpop.xlane.xlu0 %3106
      %v3108 = vsel %vm2473, %v3016, 0.0
      %3109 = vadd.xlane.f32.xlu0 %v3108
      %v3110 = vpop.xlane.xlu0 %3109
      %v3111 = vsel %vm2473, %v3017, 0.0
      %3112 = vadd.xlane.f32.xlu0 %v3111
      %v3113 = vpop.xlane.xlu0 %3112
      %v3114 = vadd.f32 %v3020, %v3023
      %v3115 = vrot.slane %v3114, 4
      %v3116 = vadd.f32 %v3114, %v3115
      %v3117 = vrot.slane %v3116, 2
      %v3118 = vadd.f32 %v3116, %v3117
      %v3119 = vrot.slane %v3118, 1
      %v3120 = vadd.f32 %v3118, %v3119
      %v3121 = vadd.f32 %v3026, %v3029
      %v3122 = vrot.slane %v3121, 4
      %v3123 = vadd.f32 %v3121, %v3122
      %v3124 = vrot.slane %v3123, 2
      %v3125 = vadd.f32 %v3123, %v3124
      %v3126 = vrot.slane %v3125, 1
      %v3127 = vadd.f32 %v3125, %v3126
      %v3128 = vadd.f32 %v3032, %v3035
      %v3129 = vrot.slane %v3128, 4
      %v3130 = vadd.f32 %v3128, %v3129
      %v3131 = vrot.slane %v3130, 2
      %v3132 = vadd.f32 %v3130, %v3131
      %v3133 = vrot.slane %v3132, 1
      %v3134 = vadd.f32 %v3132, %v3133
      %v3135 = vadd.f32 %v3038, %v3041
      %v3136 = vrot.slane %v3135, 4
      %v3137 = vadd.f32 %v3135, %v3136
      %v3138 = vrot.slane %v3137, 2
      %v3139 = vadd.f32 %v3137, %v3138
      %v3140 = vrot.slane %v3139, 1
      %v3141 = vadd.f32 %v3139, %v3140
      %v3142 = vadd.f32 %v3044, %v3047
      %v3143 = vrot.slane %v3142, 4
      %v3144 = vadd.f32 %v3142, %v3143
      %v3145 = vrot.slane %v3144, 2
      %v3146 = vadd.f32 %v3144, %v3145
      %v3147 = vrot.slane %v3146, 1
      %v3148 = vadd.f32 %v3146, %v3147
      %v3149 = vadd.f32 %v3050, %v3053
      %v3150 = vrot.slane %v3149, 4
      %v3151 = vadd.f32 %v3149, %v3150
      %v3152 = vrot.slane %v3151, 2
      %v3153 = vadd.f32 %v3151, %v3152
      %v3154 = vrot.slane %v3153, 1
      %v3155 = vadd.f32 %v3153, %v3154
      %v3156 = vadd.f32 %v3056, %v3059
      %v3157 = vrot.slane %v3156, 4
      %v3158 = vadd.f32 %v3156, %v3157
      %v3159 = vrot.slane %v3158, 2
      %v3160 = vadd.f32 %v3158, %v3159
      %v3161 = vrot.slane %v3160, 1
      %v3162 = vadd.f32 %v3160, %v3161
      %v3163 = vadd.f32 %v3062, %v3065
      %v3164 = vrot.slane %v3163, 4
      %v3165 = vadd.f32 %v3163, %v3164
      %v3166 = vrot.slane %v3165, 2
      %v3167 = vadd.f32 %v3165, %v3166
      %v3168 = vrot.slane %v3167, 1
      %v3169 = vadd.f32 %v3167, %v3168
      %v3170 = vadd.f32 %v3068, %v3071
      %v3171 = vrot.slane %v3170, 4
      %v3172 = vadd.f32 %v3170, %v3171
      %v3173 = vrot.slane %v3172, 2
      %v3174 = vadd.f32 %v3172, %v3173
      %v3175 = vrot.slane %v3174, 1
      %v3176 = vadd.f32 %v3174, %v3175
      %v3177 = vadd.f32 %v3074, %v3077
      %v3178 = vrot.slane %v3177, 4
      %v3179 = vadd.f32 %v3177, %v3178
      %v3180 = vrot.slane %v3179, 2
      %v3181 = vadd.f32 %v3179, %v3180
      %v3182 = vrot.slane %v3181, 1
      %v3183 = vadd.f32 %v3181, %v3182
      %v3184 = vadd.f32 %v3080, %v3083
      %v3185 = vrot.slane %v3184, 4
      %v3186 = vadd.f32 %v3184, %v3185
      %v3187 = vrot.slane %v3186, 2
      %v3188 = vadd.f32 %v3186, %v3187
      %v3189 = vrot.slane %v3188, 1
      %v3190 = vadd.f32 %v3188, %v3189
      %v3191 = vadd.f32 %v3086, %v3089
      %v3192 = vrot.slane %v3191, 4
      %v3193 = vadd.f32 %v3191, %v3192
      %v3194 = vrot.slane %v3193, 2
      %v3195 = vadd.f32 %v3193, %v3194
      %v3196 = vrot.slane %v3195, 1
      %v3197 = vadd.f32 %v3195, %v3196
      %v3198 = vadd.f32 %v3092, %v3095
      %v3199 = vrot.slane %v3198, 4
      %v3200 = vadd.f32 %v3198, %v3199
      %v3201 = vrot.slane %v3200, 2
      %v3202 = vadd.f32 %v3200, %v3201
      %v3203 = vrot.slane %v3202, 1
      %v3204 = vadd.f32 %v3202, %v3203
      %v3205 = vadd.f32 %v3098, %v3101
      %v3206 = vrot.slane %v3205, 4
      %v3207 = vadd.f32 %v3205, %v3206
      %v3208 = vrot.slane %v3207, 2
      %v3209 = vadd.f32 %v3207, %v3208
      %v3210 = vrot.slane %v3209, 1
      %v3211 = vadd.f32 %v3209, %v3210
      %v3212 = vadd.f32 %v3104, %v3107
      %v3213 = vrot.slane %v3212, 4
      %v3214 = vadd.f32 %v3212, %v3213
      %v3215 = vrot.slane %v3214, 2
      %v3216 = vadd.f32 %v3214, %v3215
      %v3217 = vrot.slane %v3216, 1
      %v3218 = vadd.f32 %v3216, %v3217
      %v3219 = vadd.f32 %v3110, %v3113
      %v3220 = vrot.slane %v3219, 4
      %v3221 = vadd.f32 %v3219, %v3220
      %v3222 = vrot.slane %v3221, 2
      %v3223 = vadd.f32 %v3221, %v3222
      %v3224 = vrot.slane %v3223, 1
      %v3225 = vadd.f32 %v3223, %v3224
      %v3226 = vrcp.pop %v2880
      %v3227 = vrcp.pop %v2887
      %v3228 = vrcp.pop %v2894
      %v3229 = vrcp.pop %v2901
      %v3230 = vrcp.pop %v2908
      %v3231 = vrcp.pop %v2915
      %v3232 = vrcp.pop %v2922
      %v3233 = vrcp.pop %v2929
      %v3234 = vrcp.pop %v2936
      %v3235 = vrcp.pop %v2943
      %v3236 = vrcp.pop %v2950
      %v3237 = vrcp.pop %v2957
      %v3238 = vrcp.pop %v2964
      %v3239 = vrcp.pop %v2971
      %v3240 = vrcp.pop %v2978
      %v3241 = vrcp.pop %v2985
      %v3242 = vmul.f32 %v3120, %v3226
      %v3243 = vmul.f32 %v3127, %v3227
      %v3244 = vmul.f32 %v3134, %v3228
      %v3245 = vmul.f32 %v3141, %v3229
      %v3246 = vmul.f32 %v3148, %v3230
      %v3247 = vmul.f32 %v3155, %v3231
      %v3248 = vmul.f32 %v3162, %v3232
      %v3249 = vmul.f32 %v3169, %v3233
      %v3250 = vmul.f32 %v3176, %v3234
      %v3251 = vmul.f32 %v3183, %v3235
      %v3252 = vmul.f32 %v3190, %v3236
      %v3253 = vmul.f32 %v3197, %v3237
      %v3254 = vmul.f32 %v3204, %v3238
      %v3255 = vmul.f32 %v3211, %v3239
      %v3256 = vmul.f32 %v3218, %v3240
      %v3257 = vmul.f32 %v3225, %v3241
      %v3258 = vlaneseq
      %v3259 = vshrl.u32 %v3258, 7
      %v3260 = vadd.s32 %v3259, 8
      %v3261 = vlaneseq
      %v3262 = vand.u32 %v3261, 127
      %vm3263 = vcmp.eq.s32.totalorder %v3259, %v3262
      %vm3264 = vcmp.eq.s32.totalorder %v3260, %v3262
      %v3265 = vsel %vm3263, 1, 0
      %v3266 = vsel %vm3264, 1, 0
      %v3267 = vcvt.s32.f32 %v3265
      %v3268 = vcvt.s32.f32 %v3266
      %v3271 = vrot.slane %v3267, 1
      %v3272 = vrot.slane %v3267, 2
      %v3273 = vrot.slane %v3267, 3
      %v3274 = vrot.slane %v3267, 4
      %v3275 = vrot.slane %v3267, 5
      %v3276 = vrot.slane %v3267, 6
      %v3277 = vrot.slane %v3267, 7
      %v3278 = vrot.slane %v3268, 1
      %v3279 = vrot.slane %v3268, 2
      %v3280 = vrot.slane %v3268, 3
      %v3281 = vrot.slane %v3268, 4
      %v3282 = vrot.slane %v3268, 5
      %v3283 = vrot.slane %v3268, 6
      %v3284 = vrot.slane %v3268, 7
      %v3301 = vmul.f32 %v3242, %v3267
      %v3302 = vmul.f32 %v3243, %v3271
      %v3303 = vmul.f32 %v3244, %v3272
      %v3304 = vmul.f32 %v3245, %v3273
      %v3305 = vmul.f32 %v3246, %v3274
      %v3306 = vmul.f32 %v3247, %v3275
      %v3307 = vmul.f32 %v3248, %v3276
      %v3308 = vmul.f32 %v3249, %v3277
      %v3309 = vmul.f32 %v3250, %v3268
      %v3310 = vmul.f32 %v3251, %v3278
      %v3311 = vmul.f32 %v3252, %v3279
      %v3312 = vmul.f32 %v3253, %v3280
      %v3313 = vmul.f32 %v3254, %v3281
      %v3314 = vmul.f32 %v3255, %v3282
      %v3315 = vmul.f32 %v3256, %v3283
      %v3316 = vmul.f32 %v3257, %v3284
      %v3333 = vrot.slane %v3302, 7
      %vm3334 = vcmask 1041409
      %v3335 = vsel %vm3334, %v3333, %v3301
      %v3336 = vrot.slane %v3303, 6
      %vm3337 = vcmask 1042434
      %v3338 = vsel %vm3337, %v3336, %v3335
      %v3339 = vrot.slane %v3304, 5
      %vm3340 = vcmask 1043459
      %v3341 = vsel %vm3340, %v3339, %v3338
      %v3342 = vrot.slane %v3305, 4
      %vm3343 = vcmask 1044484
      %v3344 = vsel %vm3343, %v3342, %v3341
      %v3345 = vrot.slane %v3306, 3
      %vm3346 = vcmask 1045509
      %v3347 = vsel %vm3346, %v3345, %v3344
      %v3348 = vrot.slane %v3307, 2
      %vm3349 = vcmask 1046534
      %v3350 = vsel %vm3349, %v3348, %v3347
      %v3351 = vrot.slane %v3308, 1
      %vm3352 = vcmask 1047559
      %v3353 = vsel %vm3352, %v3351, %v3350
      %v3354 = vrot.slane %v3310, 7
      %v3355 = vsel %vm3334, %v3354, %v3309
      %v3356 = vrot.slane %v3311, 6
      %v3357 = vsel %vm3337, %v3356, %v3355
      %v3358 = vrot.slane %v3312, 5
      %v3359 = vsel %vm3340, %v3358, %v3357
      %v3360 = vrot.slane %v3313, 4
      %v3361 = vsel %vm3343, %v3360, %v3359
      %v3362 = vrot.slane %v3314, 3
      %v3363 = vsel %vm3346, %v3362, %v3361
      %v3364 = vrot.slane %v3315, 2
      %v3365 = vsel %vm3349, %v3364, %v3363
      %v3366 = vrot.slane %v3316, 1
      %v3367 = vsel %vm3352, %v3366, %v3365
      %vm3370 = vcmask 130048
      %v3371 = vsel %vm3370, %v3353, 0.0
      %v3372 = vsel %vm3370, %v3367, 0.0
      %v3373 = vadd.f32 %v3371, %v3372
      %v3374 = vrot.slane %v3373, 4
      %v3375 = vadd.f32 %v3373, %v3374
      %v3376 = vrot.slane %v3375, 2
      %v3377 = vadd.f32 %v3375, %v3376
      %v3378 = vrot.slane %v3377, 1
      %v3379 = vadd.f32 %v3377, %v3378
      %s3380 = sld [smem:[#allocation2]]
      %v3381 = vstv %s3380
      %v3382 = vadd.f32 %v3379, %v3381
      %v3383 = vxor.u32 %v3382, 2147483648
      %v3384 = vmul.f32 %v3383, 1.442695
      %v3385 = vpow.pop %v3384
      %v3386 = vadd.f32 %v3385, 1.0
      %v3387 = vrcp.pop %v3386
      %v3388 = vmul.f32 1.0, %v3387
      %vm3389 = vcmask 122880
      %3390 = vst.msk [vmem:[%s305] sm:$0x1] %vm3389, %v3388
      %p3391 = scmp.lt.s32.totalorder %s19, 1
      %s3392 = scalar_select %p3391, %s19, 1
      %s3393 = scalar_lea.vmem %s7, %s3392
      // Predicated region
      $region49: #{cnn_text_attn_forward.1} parent=47 // pred_check
        %p3394 = pneg %p194
      $region50: #{cnn_text_attn_forward.1} parent=47 // pred_check_branch
        %3396 = sbr.rel (%p3394) target = $region52
      $region51: #{cnn_text_attn_forward.1} parent=47 // pred_region
        _
      $region52: #{cnn_text_attn_forward.1} parent=47 // pred_fallthru
        _
    $region48: #{cnn_text_attn_forward.1} parent=5 // pred_fallthru
      _
    %p3397 = scmp.le.s32.totalorder 2, %s14
    // Predicated region
    $region53: #{cnn_text_attn_forward.1} parent=5 // pred_check
      %p3398 = pneg %p3397
    $region54: #{cnn_text_attn_forward.1} parent=5 // pred_check_branch
      %3400 = sbr.rel (%p3398) target = $region56
    $region55: #{cnn_text_attn_forward.1} parent=5 // pred_region
      %s3401 = ssub.s32 %s14, 2
      // Predicated region
      $region57: #{cnn_text_attn_forward.1} parent=55 // pred_check
        %p3402 = pneg %p200
      $region58: #{cnn_text_attn_forward.1} parent=55 // pred_check_branch
        %3404 = sbr.rel (%p3402) target = $region60
      $region59: #{cnn_text_attn_forward.1} parent=55 // pred_region
        %p3405 = scmp.lt.s32.totalorder %s20, 1
        %s3406 = scalar_select %p3405, %s20, 1
        %s3407 = scalar_lea.vmem %s7, %s3406
      $region60: #{cnn_text_attn_forward.1} parent=55 // pred_fallthru
        _
    $region56: #{cnn_text_attn_forward.1} parent=5 // pred_fallthru
      _
  $region6: #{cnn_text_attn_forward.1} parent=0 // loop_footer
    %s18 = sadd.s32 1, %s14
  $region7: #{cnn_text_attn_forward.1} parent=0 // loop_footer_branch
    %13 = sbr.rel target = $region3
  $region8: #{cnn_text_attn_forward.1} parent=0 // loop_exit
    _

</llo_original>
